<compile_context>
chip_gen: v6e
topology: v6e:2x2x1
jax: 0.10.0
libtpu: 0.0.40
codegen_flags: <defaults>
</compile_context>

<pallas_src>
import jax
import jax.numpy as jnp
from jax import lax
from jax.experimental import pallas as pl
from jax.experimental.pallas import tpu as pltpu

# ----------------------------- config (small) -------------------------------
BATCH = 2
VOCAB = 50
EMBED = 16
HIDDEN = 16
BIDIR = True
LAYER_SIZE = 2 if BIDIR else 1          # == num_layers AND num_directions in the ref
INTER = 32                              # intermediate_size
OUTPUT = 4                              # output_size
SEQ = 8                                 # maxlen
NODE_DIM = 16                           # 2*NODE_DIM must equal LAYER_SIZE*HIDDEN
NNODES = 30
NODE_SEQ = 5
H2 = LAYER_SIZE * HIDDEN                # encoder output feature dim (= 32)
NSTREAMS = 4                            # ncf, lc, ncl, rc
BT = NSTREAMS * BATCH                   # folded batch for the LSTM (= 8)
assert 2 * NODE_DIM == H2
# TODO(synk): reference sets self._d = 3 but assigns interactive[:, 0..5, :]
# (would raise IndexError in PyTorch); the clear intent is 6 slots, used here.
D_INTER = 6
# TODO(synk): inter-layer LSTM dropout is a training-mode RNG op; dropout=0.0 here.

# ---- packed-parameter row layouts (all packs are 128-lane-wide f32) ----
# lstm_pack (128, 128):
LP_WIH0 = 0                   # rows  0:16   layer0 W_ih  (E,   8H) gate-major/dir-minor
LP_WIH1 = LP_WIH0 + EMBED     # rows 16:48   layer1 W_ih  (2H,  8H)
LP_WHH0 = LP_WIH1 + H2        # rows 48:80   layer0 W_hh  block-diag (2H, 8H)
LP_WHH1 = LP_WHH0 + H2        # rows 80:112  layer1 W_hh  block-diag
LP_B0 = LP_WHH1 + H2          # row 112      layer0 packed bias (b_ih + b_hh)
LP_B1 = 120                   # row 120      layer1 packed bias
LP_ROWS = 128
# tail_pack (152, 128):
TP_ATTN_W1 = 0                # rows  0:32   attn first linears, lanes [gc|rc|global]
TP_GATE_W1 = TP_ATTN_W1 + H2  # rows 32:96   gate ("weight") MLP first linear (2F, I)
TP_HEAD_W1 = TP_GATE_W1 + 2 * H2   # rows 96:128  head first linear (F, HIDDEN)
TP_HEAD_W2 = TP_HEAD_W1 + H2       # rows 128:144 head second linear (HIDDEN, OUTPUT)
TP_VECS = TP_HEAD_W2 + HIDDEN      # rows 144:152 packed bias / row vectors
TP_ROWS = TP_VECS + 8
# emb_pack (88, 16):
EP_WORD = 0                   # rows  0:50   word embedding table
EP_NODE = 56                  # rows 56:86   node embedding table
EP_ROWS = 88


def _vmem_spec():
    return pl.BlockSpec(memory_space=pltpu.MemorySpace.VMEM)


# ------------------------------ fused kernel --------------------------------

def _fused_kernel(tok_ref, nod_ref, emb_ref, lstm_ref, tail_ref, out_ref):
    """Whole forward pass, VMEM resident.

    tok_ref : (S*Bt, 1) int32  token ids, time-major rows (t*Bt + j),
              streams stacked along the batch as [ncf | lc | ncl | rc].
    nod_ref : (2*B*NODE_SEQ, 1) int32 node ids, [citing rows | cited rows].
    emb_ref : (88, 16)  packed word + node embedding tables.
    lstm_ref: (128, 128) packed LSTM weights (see LP_* layout).
    tail_ref: (152, 128) packed attention / gate / head params (see TP_*).
    out_ref : (B, OUTPUT) logits.
    """
    S, B, Bt = SEQ, BATCH, BT
    H, F, E, V = HIDDEN, H2, EMBED, VOCAB

    # ---------------- embeddings via one-hot MXU gathers ----------------
    word_emb = emb_ref[EP_WORD:EP_WORD + V, :]            # (V, E)
    node_emb = emb_ref[EP_NODE:EP_NODE + NNODES, :]       # (NNODES, NODE_DIM)

    tok = tok_ref[...]                                    # (S*Bt, 1)
    tok_oh = jnp.where(
        lax.broadcasted_iota(jnp.int32, (S * Bt, V), 1) == tok, 1.0, 0.0)
    x0 = jnp.dot(tok_oh, word_emb, preferred_element_type=jnp.float32)  # (S*Bt, E)

    nod = nod_ref[...]                                    # (2B*NS, 1)
    nod_oh = jnp.where(
        lax.broadcasted_iota(jnp.int32, (2 * B * NODE_SEQ, NNODES), 1) == nod,
        1.0, 0.0)
    nemb = jnp.dot(nod_oh, node_emb, preferred_element_type=jnp.float32)
    # sum over the node sequence with a 0/1 pooling matmul (no integer divide)
    r_idx = lax.broadcasted_iota(jnp.int32, (2 * B, 2 * B * NODE_SEQ), 1)
    p_idx = lax.broadcasted_iota(jnp.int32, (2 * B, 2 * B * NODE_SEQ), 0)
    pool = jnp.where((r_idx >= p_idx * NODE_SEQ) &
                     (r_idx < (p_idx + 1) * NODE_SEQ), 1.0, 0.0)
    nsum = jnp.dot(pool, nemb, preferred_element_type=jnp.float32)      # (2B, ND)
    nrm = jnp.sqrt(jnp.sum(nsum * nsum, axis=1, keepdims=True))
    nnorm = nsum / jnp.maximum(nrm, 1e-12)                # F.normalize(p=2, eps=1e-12)
    netc = jnp.concatenate([nnorm[0:B], nnorm[B:2 * B]], axis=1)        # (B, F)

    # ---------------- 2-layer bidirectional LSTM ----------------
    # Packed lane order (8 blocks of H): [i_f,i_b, f_f,f_b, g_f,g_b, o_f,o_b]
    wih0 = lstm_ref[LP_WIH0:LP_WIH0 + E, :]               # (E, 8H)
    wih1 = lstm_ref[LP_WIH1:LP_WIH1 + F, :]               # (F, 8H)
    whh0 = lstm_ref[LP_WHH0:LP_WHH0 + F, :]               # (F, 8H) block-diag
    whh1 = lstm_ref[LP_WHH1:LP_WHH1 + F, :]
    b0 = lstm_ref[LP_B0:LP_B0 + 1, :]                     # (1, 8H)
    b1 = lstm_ref[LP_B1:LP_B1 + 1, :]

    lane8 = lax.broadcasted_iota(jnp.int32, (Bt, 8 * H), 1)
    fwd_gate = jnp.bitwise_and(lane8, 2 * H - 1) < H      # fwd sub-cols per gate block
    lane2 = lax.broadcasted_iota(jnp.int32, (Bt, 2 * H), 1)
    fwd_half = lane2 < H

    def run_layer(x_flat, wih, bias, whh):
        # x_flat: (S*Bt, in_dim), time-major rows (t*Bt + j).
        # Hoisted, fused input projection: one matmul for both dirs x 4 gates.
        gx = (jnp.dot(x_flat, wih, preferred_element_type=jnp.float32) + bias
              ).reshape(S, Bt, 8 * H)
        # step s: fwd lanes consume time s, bwd lanes consume time S-1-s
        gsel = [jnp.where(fwd_gate, gx[s], gx[S - 1 - s]) for s in range(S)]
        h = jnp.zeros((Bt, 2 * H), jnp.float32)           # [h_fwd | h_bwd]
        c = jnp.zeros((Bt, 2 * H), jnp.float32)
        hs = []
        for s in range(S):                                # fully unrolled (S static)
            pre = jnp.dot(h, whh, preferred_element_type=jnp.float32) + gsel[s]
            sig = jax.nn.sigmoid(pre)                     # i | f | . | o lanes
            tnh = jnp.tanh(pre)                           # g lanes
            c = sig[:, 2 * H:4 * H] * c + sig[:, 0:2 * H] * tnh[:, 4 * H:6 * H]
            h = sig[:, 6 * H:8 * H] * jnp.tanh(c)
            hs.append(h)                                  # lanes: fwd@t=s | bwd@t=S-1-s
        # per-time output: fwd half from step t, bwd half from step S-1-t
        return jnp.concatenate(
            [jnp.where(fwd_half, hs[t], hs[S - 1 - t]) for t in range(S)], axis=0)

    x1 = run_layer(x0, wih0, b0, whh0)                    # (S*Bt, F) time-major
    enc_flat = run_layer(x1, wih1, b1, whh1)              # (S*Bt, F) time-major

    # ---------------- tail (all VMEM-resident values) ----------------
    aw1 = tail_ref[TP_ATTN_W1:TP_ATTN_W1 + F, :]          # (F, 128) [gc|rc|glob|0]
    gw1 = tail_ref[TP_GATE_W1:TP_GATE_W1 + 2 * F, 0:INTER]
    hw1 = tail_ref[TP_HEAD_W1:TP_HEAD_W1 + F, 0:HIDDEN]
    hw2 = tail_ref[TP_HEAD_W2:TP_HEAD_W2 + HIDDEN, 0:OUTPUT]
    vec = tail_ref[TP_VECS:TP_VECS + 8, :]                # (8, 128) packed vectors
    ab1, aw2, ab2 = vec[0:1, :], vec[1:2, :], vec[2:3, :]
    gb1, gw2, gb2 = vec[3:4, 0:INTER], vec[4:5, 0:INTER], vec[5:6, 0:1]
    hb1, hb2 = vec[6:7, 0:HIDDEN], vec[7:8, 0:OUTPUT]

    # local attention: gc + rc heads fused into ONE (S*Bt, F)@(F, 2I) matmul
    h_loc = jnp.maximum(
        jnp.dot(enc_flat, aw1[:, 0:2 * INTER],
                preferred_element_type=jnp.float32) + ab1[:, 0:2 * INTER], 0.0)
    e_gc = jnp.sum(h_loc[:, 0:INTER] * aw2[:, 0:INTER],
                   axis=-1, keepdims=True) + ab2[:, 0:1]
    e_rc = jnp.sum(h_loc[:, INTER:2 * INTER] * aw2[:, INTER:2 * INTER],
                   axis=-1, keepdims=True) + ab2[:, 1:2]
    e_gc3 = e_gc.reshape(S, Bt, 1)
    e_rc3 = e_rc.reshape(S, Bt, 1)
    col = lax.broadcasted_iota(jnp.int32, (S, Bt, 1), 1)
    e = jnp.where(col >= 3 * B, e_rc3, e_gc3)             # rc stream uses lcoalAttnRC
    m = jnp.max(e, axis=0, keepdims=True)
    p = jnp.exp(e - m)
    w = p / jnp.sum(p, axis=0, keepdims=True)             # softmax over S
    pooled = jnp.sum(w * enc_flat.reshape(S, Bt, F), axis=0)     # (Bt, F)

    ncf_a = pooled[0:B]
    lc_a = pooled[B:2 * B]
    ncl_a = pooled[2 * B:3 * B]
    rc_a = pooled[3 * B:4 * B]

    # gated interactive tensor: 6 gate evaluations batched into ONE matmul
    gate_a = jnp.stack([ncf_a, ncl_a, ncf_a, netc, rc_a, rc_a], axis=0)   # (6,B,F)
    base = jnp.stack([lc_a, lc_a, ncl_a, lc_a, lc_a, netc], axis=0)
    addend = jnp.stack([ncf_a, ncl_a, ncl_a, netc, rc_a, rc_a], axis=0)
    gate_in = jnp.concatenate([gate_a, base], axis=-1).reshape(D_INTER * B, 2 * F)
    gh = jnp.maximum(
        jnp.dot(gate_in, gw1, preferred_element_type=jnp.float32) + gb1, 0.0)
    ge = jnp.sum(gh * gw2, axis=-1, keepdims=True) + gb2
    gval = jax.nn.sigmoid(ge).reshape(D_INTER, B, 1)
    inter = base + gval * addend                                          # (6,B,F)

    # global attention over the 6 interactive slots
    h_gl = jnp.maximum(
        jnp.dot(inter.reshape(D_INTER * B, F), aw1[:, 2 * INTER:3 * INTER],
                preferred_element_type=jnp.float32)
        + ab1[:, 2 * INTER:3 * INTER], 0.0)
    e_gl = (jnp.sum(h_gl * aw2[:, 2 * INTER:3 * INTER], axis=-1, keepdims=True)
            + ab2[:, 2:3]).reshape(D_INTER, B, 1)
    mg = jnp.max(e_gl, axis=0, keepdims=True)
    pg = jnp.exp(e_gl - mg)
    wg = pg / jnp.sum(pg, axis=0, keepdims=True)
    gvec = jnp.sum(wg * inter, axis=0)                                    # (B, F)

    # output head MLP
    hh = jnp.maximum(
        jnp.dot(gvec, hw1, preferred_element_type=jnp.float32) + hb1, 0.0)
    out_ref[...] = jnp.dot(hh, hw2, preferred_element_type=jnp.float32) + hb2


# -------------------------------- JAX glue -----------------------------------

def interactive_attn_forward(params, ncf, lc, ncl, rc, netcing, netced):
    # Only glue: tiny int32 concat/transpose so the kernel sees time-major ids.
    tok = jnp.concatenate([ncf, lc, ncl, rc], axis=0).T.reshape(SEQ * BT, 1)
    nod = jnp.concatenate([netcing, netced], axis=0).reshape(2 * BATCH * NODE_SEQ, 1)
    return pl.pallas_call(
        _fused_kernel,
        out_shape=jax.ShapeDtypeStruct((BATCH, OUTPUT), jnp.float32),
        in_specs=[_vmem_spec()] * 5,
        out_specs=_vmem_spec(),
    )(tok, nod, params['emb_pack'], params['lstm_pack'], params['tail_pack'])


# ---------------------------- deterministic init -----------------------------

def _uniform(key, shape, scale=0.1):
    return jax.random.uniform(key, shape, jnp.float32, -scale, scale)


def _pack_lstm_layer(wih, whh, b):
    """(dir, gate, in, H) synthetic LSTM weights -> MXU-friendly packed forms.

    Packed lane order = 8 blocks of H lanes: [i_f,i_b, f_f,f_b, g_f,g_b, o_f,o_b]
    (gate-major, direction-minor) so gate slices are contiguous 2H-lane ranges
    and line up with h_cat = [h_fwd | h_bwd].  W_hh becomes a (2H, 8H)
    block-diagonal so both directions share one recurrent matmul per step.
    """
    H = HIDDEN
    wih_p = jnp.concatenate([wih[d, g] for g in range(4) for d in range(2)], axis=1)
    b_p = jnp.concatenate([b[d, g] for g in range(4) for d in range(2)], axis=1)
    blk = jnp.zeros((2 * H, 8 * H), jnp.float32)
    for g in range(4):
        for d in range(2):
            blk = blk.at[d * H:(d + 1) * H,
                         (2 * g + d) * H:(2 * g + d + 1) * H].set(whh[d, g])
    return wih_p, b_p, blk


def init_params(key):
    keys = jax.random.split(key, 8)
    it = iter(keys)

    # WordEmbedding.weight.uniform_(-1, 1); NodeEmbedding from synthetic nodeWeight
    word_emb = jax.random.uniform(next(it), (VOCAB, EMBED), jnp.float32, -1.0, 1.0)
    node_emb = _uniform(next(it), (NNODES, NODE_DIM), 0.5)
    emb_pack = jnp.zeros((EP_ROWS, EMBED), jnp.float32)
    emb_pack = emb_pack.at[EP_WORD:EP_WORD + VOCAB].set(word_emb)
    emb_pack = emb_pack.at[EP_NODE:EP_NODE + NNODES].set(node_emb)

    def lstm_layer(k, in_dim):
        k1, k2, k3, k4 = jax.random.split(k, 4)
        wih = _uniform(k1, (2, 4, in_dim, HIDDEN))      # (dir, gate, in, H)
        whh = _uniform(k2, (2, 4, HIDDEN, HIDDEN))
        b = (_uniform(k3, (2, 4, 1, HIDDEN))
             + _uniform(k4, (2, 4, 1, HIDDEN)))         # b_ih + b_hh
        return wih, whh, b

    wih0_p, b0_p, whh0_blk = _pack_lstm_layer(*lstm_layer(next(it), EMBED))
    wih1_p, b1_p, whh1_blk = _pack_lstm_layer(*lstm_layer(next(it), H2))
    lstm_pack = jnp.zeros((LP_ROWS, 8 * HIDDEN), jnp.float32)
    lstm_pack = lstm_pack.at[LP_WIH0:LP_WIH0 + EMBED].set(wih0_p)
    lstm_pack = lstm_pack.at[LP_WIH1:LP_WIH1 + H2].set(wih1_p)
    lstm_pack = lstm_pack.at[LP_WHH0:LP_WHH0 + H2].set(whh0_blk)
    lstm_pack = lstm_pack.at[LP_WHH1:LP_WHH1 + H2].set(whh1_blk)
    lstm_pack = lstm_pack.at[LP_B0:LP_B0 + 1].set(b0_p)
    lstm_pack = lstm_pack.at[LP_B1:LP_B1 + 1].set(b1_p)

    # Attention heads ordered [local_gc, local_rc, global]; gate MLP; head MLP.
    k1, k2, k3, k4 = jax.random.split(next(it), 4)
    aw1 = _uniform(k1, (3, H2, INTER))
    ab1 = _uniform(k2, (3, INTER))
    aw2 = _uniform(k3, (3, INTER))                      # Linear(I,1) weight as a row
    ab2 = _uniform(k4, (3,))
    k1, k2, k3, k4 = jax.random.split(next(it), 4)
    gw1 = _uniform(k1, (2 * H2, INTER))
    gb1 = _uniform(k2, (INTER,))
    gw2 = _uniform(k3, (INTER,))
    gb2 = _uniform(k4, (1,))
    k1, k2, k3, k4 = jax.random.split(next(it), 4)
    hw1 = _uniform(k1, (H2, HIDDEN))
    hb1 = _uniform(k2, (HIDDEN,))
    hw2 = _uniform(k3, (HIDDEN, OUTPUT))
    hb2 = _uniform(k4, (OUTPUT,))

    tp = jnp.zeros((TP_ROWS, 128), jnp.float32)
    tp = tp.at[TP_ATTN_W1:TP_ATTN_W1 + H2, 0:3 * INTER].set(
        jnp.concatenate([aw1[0], aw1[1], aw1[2]], axis=1))
    tp = tp.at[TP_GATE_W1:TP_GATE_W1 + 2 * H2, 0:INTER].set(gw1)
    tp = tp.at[TP_HEAD_W1:TP_HEAD_W1 + H2, 0:HIDDEN].set(hw1)
    tp = tp.at[TP_HEAD_W2:TP_HEAD_W2 + HIDDEN, 0:OUTPUT].set(hw2)
    tp = tp.at[TP_VECS + 0, 0:3 * INTER].set(ab1.reshape(-1))
    tp = tp.at[TP_VECS + 1, 0:3 * INTER].set(aw2.reshape(-1))
    tp = tp.at[TP_VECS + 2, 0:3].set(ab2)
    tp = tp.at[TP_VECS + 3, 0:INTER].set(gb1)
    tp = tp.at[TP_VECS + 4, 0:INTER].set(gw2)
    tp = tp.at[TP_VECS + 5, 0:1].set(gb2)
    tp = tp.at[TP_VECS + 6, 0:HIDDEN].set(hb1)
    tp = tp.at[TP_VECS + 7, 0:OUTPUT].set(hb2)

    return {'emb_pack': emb_pack, 'lstm_pack': lstm_pack, 'tail_pack': tp}


# ----------------------------------- main ------------------------------------

if __name__ == "__main__":
    key = jax.random.PRNGKey(0)
    kp, k1, k2, k3, k4, k5, k6 = jax.random.split(key, 7)
    params = init_params(kp)

    ncf = jax.random.randint(k1, (BATCH, SEQ), 0, VOCAB, jnp.int32)
    lc = jax.random.randint(k2, (BATCH, SEQ), 0, VOCAB, jnp.int32)
    ncl = jax.random.randint(k3, (BATCH, SEQ), 0, VOCAB, jnp.int32)
    rc = jax.random.randint(k4, (BATCH, SEQ), 0, VOCAB, jnp.int32)
    netcing = jax.random.randint(k5, (BATCH, NODE_SEQ), 0, NNODES, jnp.int32)
    netced = jax.random.randint(k6, (BATCH, NODE_SEQ), 0, NNODES, jnp.int32)

    fwd = jax.jit(interactive_attn_forward)
    logits = fwd(params, ncf, lc, ncl, rc, netcing, netced)
    jax.block_until_ready(logits)
    assert logits.shape == (BATCH, OUTPUT), logits.shape
    assert logits.dtype == jnp.float32
    print("KERNEL_OK")
</pallas_src>

<mosaic_0001>
module attributes {stable_mosaic.version = 11 : i64} {
  func.func @_fused_kernel(%arg0: memref<64x1xi32, #tpu.memory_space<vmem>>, %arg1: memref<20x1xi32, #tpu.memory_space<vmem>>, %arg2: memref<88x16xf32, #tpu.memory_space<vmem>>, %arg3: memref<128x128xf32, #tpu.memory_space<vmem>>, %arg4: memref<152x128xf32, #tpu.memory_space<vmem>>, %arg5: memref<2x4xf32, #tpu.memory_space<vmem>>) attributes {dimension_semantics = [], scalar_prefetch = 0 : i64, scratch_operands = 0 : i64, tpu.core_type = #tpu.core_type<tc>} {
    %c0 = arith.constant 0 : index
    %c0_0 = arith.constant 0 : index
    %0 = vector.load %arg2[%c0, %c0_0] : memref<88x16xf32, #tpu.memory_space<vmem>>, vector<50x16xf32>
    %c56 = arith.constant 56 : index
    %c0_1 = arith.constant 0 : index
    %1 = vector.load %arg2[%c56, %c0_1] : memref<88x16xf32, #tpu.memory_space<vmem>>, vector<30x16xf32>
    %c0_2 = arith.constant 0 : index
    %c0_3 = arith.constant 0 : index
    %2 = vector.load %arg0[%c0_2, %c0_3] : memref<64x1xi32, #tpu.memory_space<vmem>>, vector<64x1xi32>
    %3 = tpu.iota {dimensions = array<i32: 1>} : vector<64x50xi32>
    %4 = vector.broadcast %2 : vector<64x1xi32> to vector<64x50xi32>
    %5 = arith.cmpi eq, %3, %4 : vector<64x50xi32>
    %cst = arith.constant 1.000000e+00 : f32
    %cst_4 = arith.constant 0.000000e+00 : f32
    %6 = vector.broadcast %cst : f32 to vector<64x50xf32>
    %7 = vector.broadcast %cst_4 : f32 to vector<64x50xf32>
    %8 = arith.select %5, %6, %7 : vector<64x50xi1>, vector<64x50xf32>
    %cst_5 = arith.constant dense<0.000000e+00> : vector<64x16xf32>
    %9 = tpu.matmul %8, %0, %cst_5 {dimension_numbers = #tpu.dot_dimension_numbers<[1], [0], [0], [1], [0, 0, 1, 1], [], []>} : vector<64x50xf32>, vector<50x16xf32>, vector<64x16xf32> -> vector<64x16xf32>
    %c0_6 = arith.constant 0 : index
    %c0_7 = arith.constant 0 : index
    %10 = vector.load %arg1[%c0_6, %c0_7] : memref<20x1xi32, #tpu.memory_space<vmem>>, vector<20x1xi32>
    %11 = tpu.iota {dimensions = array<i32: 1>} : vector<20x30xi32>
    %12 = vector.broadcast %10 : vector<20x1xi32> to vector<20x30xi32>
    %13 = arith.cmpi eq, %11, %12 : vector<20x30xi32>
    %cst_8 = arith.constant 1.000000e+00 : f32
    %cst_9 = arith.constant 0.000000e+00 : f32
    %14 = vector.broadcast %cst_8 : f32 to vector<20x30xf32>
    %15 = vector.broadcast %cst_9 : f32 to vector<20x30xf32>
    %16 = arith.select %13, %14, %15 : vector<20x30xi1>, vector<20x30xf32>
    %cst_10 = arith.constant dense<0.000000e+00> : vector<20x16xf32>
    %17 = tpu.matmul %16, %1, %cst_10 {dimension_numbers = #tpu.dot_dimension_numbers<[1], [0], [0], [1], [0, 0, 1, 1], [], []>} : vector<20x30xf32>, vector<30x16xf32>, vector<20x16xf32> -> vector<20x16xf32>
    %18 = tpu.iota {dimensions = array<i32: 1>} : vector<4x20xi32>
    %19 = tpu.iota {dimensions = array<i32: 0>} : vector<4x20xi32>
    %c5_i32 = arith.constant 5 : i32
    %20 = vector.broadcast %c5_i32 : i32 to vector<4x20xi32>
    %21 = arith.muli %19, %20 : vector<4x20xi32>
    %22 = arith.cmpi sge, %18, %21 : vector<4x20xi32>
    %c1_i32 = arith.constant 1 : i32
    %23 = vector.broadcast %c1_i32 : i32 to vector<4x20xi32>
    %24 = arith.addi %19, %23 : vector<4x20xi32>
    %c5_i32_11 = arith.constant 5 : i32
    %25 = vector.broadcast %c5_i32_11 : i32 to vector<4x20xi32>
    %26 = arith.muli %24, %25 : vector<4x20xi32>
    %27 = arith.cmpi slt, %18, %26 : vector<4x20xi32>
    %28 = arith.andi %22, %27 : vector<4x20xi1>
    %cst_12 = arith.constant 1.000000e+00 : f32
    %cst_13 = arith.constant 0.000000e+00 : f32
    %29 = vector.broadcast %cst_12 : f32 to vector<4x20xf32>
    %30 = vector.broadcast %cst_13 : f32 to vector<4x20xf32>
    %31 = arith.select %28, %29, %30 : vector<4x20xi1>, vector<4x20xf32>
    %cst_14 = arith.constant dense<0.000000e+00> : vector<4x16xf32>
    %32 = tpu.matmul %31, %17, %cst_14 {dimension_numbers = #tpu.dot_dimension_numbers<[1], [0], [0], [1], [0, 0, 1, 1], [], []>} : vector<4x20xf32>, vector<20x16xf32>, vector<4x16xf32> -> vector<4x16xf32>
    %33 = arith.mulf %32, %32 : vector<4x16xf32>
    %cst_15 = arith.constant dense<0.000000e+00> : vector<4xf32>
    %34 = vector.multi_reduction <add>, %33, %cst_15 [1] : vector<4x16xf32> to vector<4xf32>
    %35 = vector.shape_cast %34 : vector<4xf32> to vector<4x1xf32>
    %36 = math.sqrt %35 : vector<4x1xf32>
    %cst_16 = arith.constant 9.99999996E-13 : f32
    %37 = vector.broadcast %cst_16 : f32 to vector<4x1xf32>
    %38 = arith.maximumf %36, %37 : vector<4x1xf32>
    %39 = vector.broadcast %38 : vector<4x1xf32> to vector<4x16xf32>
    %40 = arith.divf %32, %39 : vector<4x16xf32>
    %41 = vector.extract_strided_slice %40 {offsets = [0, 0], sizes = [2, 16], strides = [1, 1]} : vector<4x16xf32> to vector<2x16xf32>
    %42 = vector.extract_strided_slice %40 {offsets = [2, 0], sizes = [2, 16], strides = [1, 1]} : vector<4x16xf32> to vector<2x16xf32>
    %43 = tpu.concatenate %41, %42 in 1 : vector<2x16xf32>, vector<2x16xf32> -> vector<2x32xf32>
    %c0_17 = arith.constant 0 : index
    %c0_18 = arith.constant 0 : index
    %44 = vector.load %arg3[%c0_17, %c0_18] : memref<128x128xf32, #tpu.memory_space<vmem>>, vector<16x128xf32>
    %c16 = arith.constant 16 : index
    %c0_19 = arith.constant 0 : index
    %45 = vector.load %arg3[%c16, %c0_19] : memref<128x128xf32, #tpu.memory_space<vmem>>, vector<32x128xf32>
    %c48 = arith.constant 48 : index
    %c0_20 = arith.constant 0 : index
    %46 = vector.load %arg3[%c48, %c0_20] : memref<128x128xf32, #tpu.memory_space<vmem>>, vector<32x128xf32>
    %c80 = arith.constant 80 : index
    %c0_21 = arith.constant 0 : index
    %47 = vector.load %arg3[%c80, %c0_21] : memref<128x128xf32, #tpu.memory_space<vmem>>, vector<32x128xf32>
    %c112 = arith.constant 112 : index
    %c0_22 = arith.constant 0 : index
    %48 = vector.load %arg3[%c112, %c0_22] : memref<128x128xf32, #tpu.memory_space<vmem>>, vector<1x128xf32>
    %c120 = arith.constant 120 : index
    %c0_23 = arith.constant 0 : index
    %49 = vector.load %arg3[%c120, %c0_23] : memref<128x128xf32, #tpu.memory_space<vmem>>, vector<1x128xf32>
    %50 = tpu.iota {dimensions = array<i32: 1>} : vector<8x128xi32>
    %c31_i32 = arith.constant 31 : i32
    %51 = vector.broadcast %c31_i32 : i32 to vector<8x128xi32>
    %52 = arith.andi %50, %51 : vector<8x128xi32>
    %c16_i32 = arith.constant 16 : i32
    %53 = vector.broadcast %c16_i32 : i32 to vector<8x128xi32>
    %54 = arith.cmpi slt, %52, %53 : vector<8x128xi32>
    %55 = tpu.iota {dimensions = array<i32: 1>} : vector<8x32xi32>
    %c16_i32_24 = arith.constant 16 : i32
    %56 = vector.broadcast %c16_i32_24 : i32 to vector<8x32xi32>
    %57 = arith.cmpi slt, %55, %56 : vector<8x32xi32>
    %cst_25 = arith.constant dense<0.000000e+00> : vector<64x128xf32>
    %58 = tpu.matmul %9, %44, %cst_25 {dimension_numbers = #tpu.dot_dimension_numbers<[1], [0], [0], [1], [0, 0, 1, 1], [], []>} : vector<64x16xf32>, vector<16x128xf32>, vector<64x128xf32> -> vector<64x128xf32>
    %59 = vector.broadcast %48 : vector<1x128xf32> to vector<64x128xf32>
    %60 = arith.addf %58, %59 : vector<64x128xf32>
    %61 = vector.shape_cast %60 : vector<64x128xf32> to vector<8x8x128xf32>
    %62 = vector.extract_strided_slice %61 {offsets = [0, 0, 0], sizes = [1, 8, 128], strides = [1, 1, 1]} : vector<8x8x128xf32> to vector<1x8x128xf32>
    %63 = vector.shape_cast %62 : vector<1x8x128xf32> to vector<8x128xf32>
    %64 = vector.extract_strided_slice %61 {offsets = [7, 0, 0], sizes = [1, 8, 128], strides = [1, 1, 1]} : vector<8x8x128xf32> to vector<1x8x128xf32>
    %65 = vector.shape_cast %64 : vector<1x8x128xf32> to vector<8x128xf32>
    %66 = arith.select %54, %63, %65 : vector<8x128xi1>, vector<8x128xf32>
    %67 = vector.extract_strided_slice %61 {offsets = [1, 0, 0], sizes = [1, 8, 128], strides = [1, 1, 1]} : vector<8x8x128xf32> to vector<1x8x128xf32>
    %68 = vector.shape_cast %67 : vector<1x8x128xf32> to vector<8x128xf32>
    %69 = vector.extract_strided_slice %61 {offsets = [6, 0, 0], sizes = [1, 8, 128], strides = [1, 1, 1]} : vector<8x8x128xf32> to vector<1x8x128xf32>
    %70 = vector.shape_cast %69 : vector<1x8x128xf32> to vector<8x128xf32>
    %71 = arith.select %54, %68, %70 : vector<8x128xi1>, vector<8x128xf32>
    %72 = vector.extract_strided_slice %61 {offsets = [2, 0, 0], sizes = [1, 8, 128], strides = [1, 1, 1]} : vector<8x8x128xf32> to vector<1x8x128xf32>
    %73 = vector.shape_cast %72 : vector<1x8x128xf32> to vector<8x128xf32>
    %74 = vector.extract_strided_slice %61 {offsets = [5, 0, 0], sizes = [1, 8, 128], strides = [1, 1, 1]} : vector<8x8x128xf32> to vector<1x8x128xf32>
    %75 = vector.shape_cast %74 : vector<1x8x128xf32> to vector<8x128xf32>
    %76 = arith.select %54, %73, %75 : vector<8x128xi1>, vector<8x128xf32>
    %77 = vector.extract_strided_slice %61 {offsets = [3, 0, 0], sizes = [1, 8, 128], strides = [1, 1, 1]} : vector<8x8x128xf32> to vector<1x8x128xf32>
    %78 = vector.shape_cast %77 : vector<1x8x128xf32> to vector<8x128xf32>
    %79 = vector.extract_strided_slice %61 {offsets = [4, 0, 0], sizes = [1, 8, 128], strides = [1, 1, 1]} : vector<8x8x128xf32> to vector<1x8x128xf32>
    %80 = vector.shape_cast %79 : vector<1x8x128xf32> to vector<8x128xf32>
    %81 = arith.select %54, %78, %80 : vector<8x128xi1>, vector<8x128xf32>
    %82 = vector.extract_strided_slice %61 {offsets = [4, 0, 0], sizes = [1, 8, 128], strides = [1, 1, 1]} : vector<8x8x128xf32> to vector<1x8x128xf32>
    %83 = vector.shape_cast %82 : vector<1x8x128xf32> to vector<8x128xf32>
    %84 = vector.extract_strided_slice %61 {offsets = [3, 0, 0], sizes = [1, 8, 128], strides = [1, 1, 1]} : vector<8x8x128xf32> to vector<1x8x128xf32>
    %85 = vector.shape_cast %84 : vector<1x8x128xf32> to vector<8x128xf32>
    %86 = arith.select %54, %83, %85 : vector<8x128xi1>, vector<8x128xf32>
    %87 = vector.extract_strided_slice %61 {offsets = [5, 0, 0], sizes = [1, 8, 128], strides = [1, 1, 1]} : vector<8x8x128xf32> to vector<1x8x128xf32>
    %88 = vector.shape_cast %87 : vector<1x8x128xf32> to vector<8x128xf32>
    %89 = vector.extract_strided_slice %61 {offsets = [2, 0, 0], sizes = [1, 8, 128], strides = [1, 1, 1]} : vector<8x8x128xf32> to vector<1x8x128xf32>
    %90 = vector.shape_cast %89 : vector<1x8x128xf32> to vector<8x128xf32>
    %91 = arith.select %54, %88, %90 : vector<8x128xi1>, vector<8x128xf32>
    %92 = vector.extract_strided_slice %61 {offsets = [6, 0, 0], sizes = [1, 8, 128], strides = [1, 1, 1]} : vector<8x8x128xf32> to vector<1x8x128xf32>
    %93 = vector.shape_cast %92 : vector<1x8x128xf32> to vector<8x128xf32>
    %94 = vector.extract_strided_slice %61 {offsets = [1, 0, 0], sizes = [1, 8, 128], strides = [1, 1, 1]} : vector<8x8x128xf32> to vector<1x8x128xf32>
    %95 = vector.shape_cast %94 : vector<1x8x128xf32> to vector<8x128xf32>
    %96 = arith.select %54, %93, %95 : vector<8x128xi1>, vector<8x128xf32>
    %97 = vector.extract_strided_slice %61 {offsets = [7, 0, 0], sizes = [1, 8, 128], strides = [1, 1, 1]} : vector<8x8x128xf32> to vector<1x8x128xf32>
    %98 = vector.shape_cast %97 : vector<1x8x128xf32> to vector<8x128xf32>
    %99 = vector.extract_strided_slice %61 {offsets = [0, 0, 0], sizes = [1, 8, 128], strides = [1, 1, 1]} : vector<8x8x128xf32> to vector<1x8x128xf32>
    %100 = vector.shape_cast %99 : vector<1x8x128xf32> to vector<8x128xf32>
    %101 = arith.select %54, %98, %100 : vector<8x128xi1>, vector<8x128xf32>
    %cst_26 = arith.constant 0.000000e+00 : f32
    %102 = vector.broadcast %cst_26 : f32 to vector<8x32xf32>
    %cst_27 = arith.constant 0.000000e+00 : f32
    %103 = vector.broadcast %cst_27 : f32 to vector<8x32xf32>
    %cst_28 = arith.constant dense<0.000000e+00> : vector<8x128xf32>
    %104 = tpu.matmul %102, %46, %cst_28 {dimension_numbers = #tpu.dot_dimension_numbers<[1], [0], [0], [1], [0, 0, 1, 1], [], []>} : vector<8x32xf32>, vector<32x128xf32>, vector<8x128xf32> -> vector<8x128xf32>
    %105 = arith.addf %104, %66 : vector<8x128xf32>
    %106 = arith.negf %105 : vector<8x128xf32>
    %107 = math.exp %106 : vector<8x128xf32>
    %cst_29 = arith.constant 1.000000e+00 : f32
    %108 = vector.broadcast %cst_29 : f32 to vector<8x128xf32>
    %109 = arith.addf %108, %107 : vector<8x128xf32>
    %110 = arith.divf %108, %109 : vector<8x128xf32>
    %111 = math.tanh %105 : vector<8x128xf32>
    %112 = vector.extract_strided_slice %110 {offsets = [0, 32], sizes = [8, 32], strides = [1, 1]} : vector<8x128xf32> to vector<8x32xf32>
    %113 = arith.mulf %112, %103 : vector<8x32xf32>
    %114 = vector.extract_strided_slice %110 {offsets = [0, 0], sizes = [8, 32], strides = [1, 1]} : vector<8x128xf32> to vector<8x32xf32>
    %115 = vector.extract_strided_slice %111 {offsets = [0, 64], sizes = [8, 32], strides = [1, 1]} : vector<8x128xf32> to vector<8x32xf32>
    %116 = arith.mulf %114, %115 : vector<8x32xf32>
    %117 = arith.addf %113, %116 : vector<8x32xf32>
    %118 = vector.extract_strided_slice %110 {offsets = [0, 96], sizes = [8, 32], strides = [1, 1]} : vector<8x128xf32> to vector<8x32xf32>
    %119 = math.tanh %117 : vector<8x32xf32>
    %120 = arith.mulf %118, %119 : vector<8x32xf32>
    %cst_30 = arith.constant dense<0.000000e+00> : vector<8x128xf32>
    %121 = tpu.matmul %120, %46, %cst_30 {dimension_numbers = #tpu.dot_dimension_numbers<[1], [0], [0], [1], [0, 0, 1, 1], [], []>} : vector<8x32xf32>, vector<32x128xf32>, vector<8x128xf32> -> vector<8x128xf32>
    %122 = arith.addf %121, %71 : vector<8x128xf32>
    %123 = arith.negf %122 : vector<8x128xf32>
    %124 = math.exp %123 : vector<8x128xf32>
    %cst_31 = arith.constant 1.000000e+00 : f32
    %125 = vector.broadcast %cst_31 : f32 to vector<8x128xf32>
    %126 = arith.addf %125, %124 : vector<8x128xf32>
    %127 = arith.divf %125, %126 : vector<8x128xf32>
    %128 = math.tanh %122 : vector<8x128xf32>
    %129 = vector.extract_strided_slice %127 {offsets = [0, 32], sizes = [8, 32], strides = [1, 1]} : vector<8x128xf32> to vector<8x32xf32>
    %130 = arith.mulf %129, %117 : vector<8x32xf32>
    %131 = vector.extract_strided_slice %127 {offsets = [0, 0], sizes = [8, 32], strides = [1, 1]} : vector<8x128xf32> to vector<8x32xf32>
    %132 = vector.extract_strided_slice %128 {offsets = [0, 64], sizes = [8, 32], strides = [1, 1]} : vector<8x128xf32> to vector<8x32xf32>
    %133 = arith.mulf %131, %132 : vector<8x32xf32>
    %134 = arith.addf %130, %133 : vector<8x32xf32>
    %135 = vector.extract_strided_slice %127 {offsets = [0, 96], sizes = [8, 32], strides = [1, 1]} : vector<8x128xf32> to vector<8x32xf32>
    %136 = math.tanh %134 : vector<8x32xf32>
    %137 = arith.mulf %135, %136 : vector<8x32xf32>
    %cst_32 = arith.constant dense<0.000000e+00> : vector<8x128xf32>
    %138 = tpu.matmul %137, %46, %cst_32 {dimension_numbers = #tpu.dot_dimension_numbers<[1], [0], [0], [1], [0, 0, 1, 1], [], []>} : vector<8x32xf32>, vector<32x128xf32>, vector<8x128xf32> -> vector<8x128xf32>
    %139 = arith.addf %138, %76 : vector<8x128xf32>
    %140 = arith.negf %139 : vector<8x128xf32>
    %141 = math.exp %140 : vector<8x128xf32>
    %cst_33 = arith.constant 1.000000e+00 : f32
    %142 = vector.broadcast %cst_33 : f32 to vector<8x128xf32>
    %143 = arith.addf %142, %141 : vector<8x128xf32>
    %144 = arith.divf %142, %143 : vector<8x128xf32>
    %145 = math.tanh %139 : vector<8x128xf32>
    %146 = vector.extract_strided_slice %144 {offsets = [0, 32], sizes = [8, 32], strides = [1, 1]} : vector<8x128xf32> to vector<8x32xf32>
    %147 = arith.mulf %146, %134 : vector<8x32xf32>
    %148 = vector.extract_strided_slice %144 {offsets = [0, 0], sizes = [8, 32], strides = [1, 1]} : vector<8x128xf32> to vector<8x32xf32>
    %149 = vector.extract_strided_slice %145 {offsets = [0, 64], sizes = [8, 32], strides = [1, 1]} : vector<8x128xf32> to vector<8x32xf32>
    %150 = arith.mulf %148, %149 : vector<8x32xf32>
    %151 = arith.addf %147, %150 : vector<8x32xf32>
    %152 = vector.extract_strided_slice %144 {offsets = [0, 96], sizes = [8, 32], strides = [1, 1]} : vector<8x128xf32> to vector<8x32xf32>
    %153 = math.tanh %151 : vector<8x32xf32>
    %154 = arith.mulf %152, %153 : vector<8x32xf32>
    %cst_34 = arith.constant dense<0.000000e+00> : vector<8x128xf32>
    %155 = tpu.matmul %154, %46, %cst_34 {dimension_numbers = #tpu.dot_dimension_numbers<[1], [0], [0], [1], [0, 0, 1, 1], [], []>} : vector<8x32xf32>, vector<32x128xf32>, vector<8x128xf32> -> vector<8x128xf32>
    %156 = arith.addf %155, %81 : vector<8x128xf32>
    %157 = arith.negf %156 : vector<8x128xf32>
    %158 = math.exp %157 : vector<8x128xf32>
    %cst_35 = arith.constant 1.000000e+00 : f32
    %159 = vector.broadcast %cst_35 : f32 to vector<8x128xf32>
    %160 = arith.addf %159, %158 : vector<8x128xf32>
    %161 = arith.divf %159, %160 : vector<8x128xf32>
    %162 = math.tanh %156 : vector<8x128xf32>
    %163 = vector.extract_strided_slice %161 {offsets = [0, 32], sizes = [8, 32], strides = [1, 1]} : vector<8x128xf32> to vector<8x32xf32>
    %164 = arith.mulf %163, %151 : vector<8x32xf32>
    %165 = vector.extract_strided_slice %161 {offsets = [0, 0], sizes = [8, 32], strides = [1, 1]} : vector<8x128xf32> to vector<8x32xf32>
    %166 = vector.extract_strided_slice %162 {offsets = [0, 64], sizes = [8, 32], strides = [1, 1]} : vector<8x128xf32> to vector<8x32xf32>
    %167 = arith.mulf %165, %166 : vector<8x32xf32>
    %168 = arith.addf %164, %167 : vector<8x32xf32>
    %169 = vector.extract_strided_slice %161 {offsets = [0, 96], sizes = [8, 32], strides = [1, 1]} : vector<8x128xf32> to vector<8x32xf32>
    %170 = math.tanh %168 : vector<8x32xf32>
    %171 = arith.mulf %169, %170 : vector<8x32xf32>
    %cst_36 = arith.constant dense<0.000000e+00> : vector<8x128xf32>
    %172 = tpu.matmul %171, %46, %cst_36 {dimension_numbers = #tpu.dot_dimension_numbers<[1], [0], [0], [1], [0, 0, 1, 1], [], []>} : vector<8x32xf32>, vector<32x128xf32>, vector<8x128xf32> -> vector<8x128xf32>
    %173 = arith.addf %172, %86 : vector<8x128xf32>
    %174 = arith.negf %173 : vector<8x128xf32>
    %175 = math.exp %174 : vector<8x128xf32>
    %cst_37 = arith.constant 1.000000e+00 : f32
    %176 = vector.broadcast %cst_37 : f32 to vector<8x128xf32>
    %177 = arith.addf %176, %175 : vector<8x128xf32>
    %178 = arith.divf %176, %177 : vector<8x128xf32>
    %179 = math.tanh %173 : vector<8x128xf32>
    %180 = vector.extract_strided_slice %178 {offsets = [0, 32], sizes = [8, 32], strides = [1, 1]} : vector<8x128xf32> to vector<8x32xf32>
    %181 = arith.mulf %180, %168 : vector<8x32xf32>
    %182 = vector.extract_strided_slice %178 {offsets = [0, 0], sizes = [8, 32], strides = [1, 1]} : vector<8x128xf32> to vector<8x32xf32>
    %183 = vector.extract_strided_slice %179 {offsets = [0, 64], sizes = [8, 32], strides = [1, 1]} : vector<8x128xf32> to vector<8x32xf32>
    %184 = arith.mulf %182, %183 : vector<8x32xf32>
    %185 = arith.addf %181, %184 : vector<8x32xf32>
    %186 = vector.extract_strided_slice %178 {offsets = [0, 96], sizes = [8, 32], strides = [1, 1]} : vector<8x128xf32> to vector<8x32xf32>
    %187 = math.tanh %185 : vector<8x32xf32>
    %188 = arith.mulf %186, %187 : vector<8x32xf32>
    %cst_38 = arith.constant dense<0.000000e+00> : vector<8x128xf32>
    %189 = tpu.matmul %188, %46, %cst_38 {dimension_numbers = #tpu.dot_dimension_numbers<[1], [0], [0], [1], [0, 0, 1, 1], [], []>} : vector<8x32xf32>, vector<32x128xf32>, vector<8x128xf32> -> vector<8x128xf32>
    %190 = arith.addf %189, %91 : vector<8x128xf32>
    %191 = arith.negf %190 : vector<8x128xf32>
    %192 = math.exp %191 : vector<8x128xf32>
    %cst_39 = arith.constant 1.000000e+00 : f32
    %193 = vector.broadcast %cst_39 : f32 to vector<8x128xf32>
    %194 = arith.addf %193, %192 : vector<8x128xf32>
    %195 = arith.divf %193, %194 : vector<8x128xf32>
    %196 = math.tanh %190 : vector<8x128xf32>
    %197 = vector.extract_strided_slice %195 {offsets = [0, 32], sizes = [8, 32], strides = [1, 1]} : vector<8x128xf32> to vector<8x32xf32>
    %198 = arith.mulf %197, %185 : vector<8x32xf32>
    %199 = vector.extract_strided_slice %195 {offsets = [0, 0], sizes = [8, 32], strides = [1, 1]} : vector<8x128xf32> to vector<8x32xf32>
    %200 = vector.extract_strided_slice %196 {offsets = [0, 64], sizes = [8, 32], strides = [1, 1]} : vector<8x128xf32> to vector<8x32xf32>
    %201 = arith.mulf %199, %200 : vector<8x32xf32>
    %202 = arith.addf %198, %201 : vector<8x32xf32>
    %203 = vector.extract_strided_slice %195 {offsets = [0, 96], sizes = [8, 32], strides = [1, 1]} : vector<8x128xf32> to vector<8x32xf32>
    %204 = math.tanh %202 : vector<8x32xf32>
    %205 = arith.mulf %203, %204 : vector<8x32xf32>
    %cst_40 = arith.constant dense<0.000000e+00> : vector<8x128xf32>
    %206 = tpu.matmul %205, %46, %cst_40 {dimension_numbers = #tpu.dot_dimension_numbers<[1], [0], [0], [1], [0, 0, 1, 1], [], []>} : vector<8x32xf32>, vector<32x128xf32>, vector<8x128xf32> -> vector<8x128xf32>
    %207 = arith.addf %206, %96 : vector<8x128xf32>
    %208 = arith.negf %207 : vector<8x128xf32>
    %209 = math.exp %208 : vector<8x128xf32>
    %cst_41 = arith.constant 1.000000e+00 : f32
    %210 = vector.broadcast %cst_41 : f32 to vector<8x128xf32>
    %211 = arith.addf %210, %209 : vector<8x128xf32>
    %212 = arith.divf %210, %211 : vector<8x128xf32>
    %213 = math.tanh %207 : vector<8x128xf32>
    %214 = vector.extract_strided_slice %212 {offsets = [0, 32], sizes = [8, 32], strides = [1, 1]} : vector<8x128xf32> to vector<8x32xf32>
    %215 = arith.mulf %214, %202 : vector<8x32xf32>
    %216 = vector.extract_strided_slice %212 {offsets = [0, 0], sizes = [8, 32], strides = [1, 1]} : vector<8x128xf32> to vector<8x32xf32>
    %217 = vector.extract_strided_slice %213 {offsets = [0, 64], sizes = [8, 32], strides = [1, 1]} : vector<8x128xf32> to vector<8x32xf32>
    %218 = arith.mulf %216, %217 : vector<8x32xf32>
    %219 = arith.addf %215, %218 : vector<8x32xf32>
    %220 = vector.extract_strided_slice %212 {offsets = [0, 96], sizes = [8, 32], strides = [1, 1]} : vector<8x128xf32> to vector<8x32xf32>
    %221 = math.tanh %219 : vector<8x32xf32>
    %222 = arith.mulf %220, %221 : vector<8x32xf32>
    %cst_42 = arith.constant dense<0.000000e+00> : vector<8x128xf32>
    %223 = tpu.matmul %222, %46, %cst_42 {dimension_numbers = #tpu.dot_dimension_numbers<[1], [0], [0], [1], [0, 0, 1, 1], [], []>} : vector<8x32xf32>, vector<32x128xf32>, vector<8x128xf32> -> vector<8x128xf32>
    %224 = arith.addf %223, %101 : vector<8x128xf32>
    %225 = arith.negf %224 : vector<8x128xf32>
    %226 = math.exp %225 : vector<8x128xf32>
    %cst_43 = arith.constant 1.000000e+00 : f32
    %227 = vector.broadcast %cst_43 : f32 to vector<8x128xf32>
    %228 = arith.addf %227, %226 : vector<8x128xf32>
    %229 = arith.divf %227, %228 : vector<8x128xf32>
    %230 = math.tanh %224 : vector<8x128xf32>
    %231 = vector.extract_strided_slice %229 {offsets = [0, 32], sizes = [8, 32], strides = [1, 1]} : vector<8x128xf32> to vector<8x32xf32>
    %232 = arith.mulf %231, %219 : vector<8x32xf32>
    %233 = vector.extract_strided_slice %229 {offsets = [0, 0], sizes = [8, 32], strides = [1, 1]} : vector<8x128xf32> to vector<8x32xf32>
    %234 = vector.extract_strided_slice %230 {offsets = [0, 64], sizes = [8, 32], strides = [1, 1]} : vector<8x128xf32> to vector<8x32xf32>
    %235 = arith.mulf %233, %234 : vector<8x32xf32>
    %236 = arith.addf %232, %235 : vector<8x32xf32>
    %237 = vector.extract_strided_slice %229 {offsets = [0, 96], sizes = [8, 32], strides = [1, 1]} : vector<8x128xf32> to vector<8x32xf32>
    %238 = math.tanh %236 : vector<8x32xf32>
    %239 = arith.mulf %237, %238 : vector<8x32xf32>
    %240 = arith.select %57, %120, %239 : vector<8x32xi1>, vector<8x32xf32>
    %241 = arith.select %57, %137, %222 : vector<8x32xi1>, vector<8x32xf32>
    %242 = arith.select %57, %154, %205 : vector<8x32xi1>, vector<8x32xf32>
    %243 = arith.select %57, %171, %188 : vector<8x32xi1>, vector<8x32xf32>
    %244 = arith.select %57, %188, %171 : vector<8x32xi1>, vector<8x32xf32>
    %245 = arith.select %57, %205, %154 : vector<8x32xi1>, vector<8x32xf32>
    %246 = arith.select %57, %222, %137 : vector<8x32xi1>, vector<8x32xf32>
    %247 = arith.select %57, %239, %120 : vector<8x32xi1>, vector<8x32xf32>
    %248 = tpu.concatenate %240, %241, %242, %243, %244, %245, %246, %247 in 0 : vector<8x32xf32>, vector<8x32xf32>, vector<8x32xf32>, vector<8x32xf32>, vector<8x32xf32>, vector<8x32xf32>, vector<8x32xf32>, vector<8x32xf32> -> vector<64x32xf32>
    %cst_44 = arith.constant dense<0.000000e+00> : vector<64x128xf32>
    %249 = tpu.matmul %248, %45, %cst_44 {dimension_numbers = #tpu.dot_dimension_numbers<[1], [0], [0], [1], [0, 0, 1, 1], [], []>} : vector<64x32xf32>, vector<32x128xf32>, vector<64x128xf32> -> vector<64x128xf32>
    %250 = vector.broadcast %49 : vector<1x128xf32> to vector<64x128xf32>
    %251 = arith.addf %249, %250 : vector<64x128xf32>
    %252 = vector.shape_cast %251 : vector<64x128xf32> to vector<8x8x128xf32>
    %253 = vector.extract_strided_slice %252 {offsets = [0, 0, 0], sizes = [1, 8, 128], strides = [1, 1, 1]} : vector<8x8x128xf32> to vector<1x8x128xf32>
    %254 = vector.shape_cast %253 : vector<1x8x128xf32> to vector<8x128xf32>
    %255 = vector.extract_strided_slice %252 {offsets = [7, 0, 0], sizes = [1, 8, 128], strides = [1, 1, 1]} : vector<8x8x128xf32> to vector<1x8x128xf32>
    %256 = vector.shape_cast %255 : vector<1x8x128xf32> to vector<8x128xf32>
    %257 = arith.select %54, %254, %256 : vector<8x128xi1>, vector<8x128xf32>
    %258 = vector.extract_strided_slice %252 {offsets = [1, 0, 0], sizes = [1, 8, 128], strides = [1, 1, 1]} : vector<8x8x128xf32> to vector<1x8x128xf32>
    %259 = vector.shape_cast %258 : vector<1x8x128xf32> to vector<8x128xf32>
    %260 = vector.extract_strided_slice %252 {offsets = [6, 0, 0], sizes = [1, 8, 128], strides = [1, 1, 1]} : vector<8x8x128xf32> to vector<1x8x128xf32>
    %261 = vector.shape_cast %260 : vector<1x8x128xf32> to vector<8x128xf32>
    %262 = arith.select %54, %259, %261 : vector<8x128xi1>, vector<8x128xf32>
    %263 = vector.extract_strided_slice %252 {offsets = [2, 0, 0], sizes = [1, 8, 128], strides = [1, 1, 1]} : vector<8x8x128xf32> to vector<1x8x128xf32>
    %264 = vector.shape_cast %263 : vector<1x8x128xf32> to vector<8x128xf32>
    %265 = vector.extract_strided_slice %252 {offsets = [5, 0, 0], sizes = [1, 8, 128], strides = [1, 1, 1]} : vector<8x8x128xf32> to vector<1x8x128xf32>
    %266 = vector.shape_cast %265 : vector<1x8x128xf32> to vector<8x128xf32>
    %267 = arith.select %54, %264, %266 : vector<8x128xi1>, vector<8x128xf32>
    %268 = vector.extract_strided_slice %252 {offsets = [3, 0, 0], sizes = [1, 8, 128], strides = [1, 1, 1]} : vector<8x8x128xf32> to vector<1x8x128xf32>
    %269 = vector.shape_cast %268 : vector<1x8x128xf32> to vector<8x128xf32>
    %270 = vector.extract_strided_slice %252 {offsets = [4, 0, 0], sizes = [1, 8, 128], strides = [1, 1, 1]} : vector<8x8x128xf32> to vector<1x8x128xf32>
    %271 = vector.shape_cast %270 : vector<1x8x128xf32> to vector<8x128xf32>
    %272 = arith.select %54, %269, %271 : vector<8x128xi1>, vector<8x128xf32>
    %273 = vector.extract_strided_slice %252 {offsets = [4, 0, 0], sizes = [1, 8, 128], strides = [1, 1, 1]} : vector<8x8x128xf32> to vector<1x8x128xf32>
    %274 = vector.shape_cast %273 : vector<1x8x128xf32> to vector<8x128xf32>
    %275 = vector.extract_strided_slice %252 {offsets = [3, 0, 0], sizes = [1, 8, 128], strides = [1, 1, 1]} : vector<8x8x128xf32> to vector<1x8x128xf32>
    %276 = vector.shape_cast %275 : vector<1x8x128xf32> to vector<8x128xf32>
    %277 = arith.select %54, %274, %276 : vector<8x128xi1>, vector<8x128xf32>
    %278 = vector.extract_strided_slice %252 {offsets = [5, 0, 0], sizes = [1, 8, 128], strides = [1, 1, 1]} : vector<8x8x128xf32> to vector<1x8x128xf32>
    %279 = vector.shape_cast %278 : vector<1x8x128xf32> to vector<8x128xf32>
    %280 = vector.extract_strided_slice %252 {offsets = [2, 0, 0], sizes = [1, 8, 128], strides = [1, 1, 1]} : vector<8x8x128xf32> to vector<1x8x128xf32>
    %281 = vector.shape_cast %280 : vector<1x8x128xf32> to vector<8x128xf32>
    %282 = arith.select %54, %279, %281 : vector<8x128xi1>, vector<8x128xf32>
    %283 = vector.extract_strided_slice %252 {offsets = [6, 0, 0], sizes = [1, 8, 128], strides = [1, 1, 1]} : vector<8x8x128xf32> to vector<1x8x128xf32>
    %284 = vector.shape_cast %283 : vector<1x8x128xf32> to vector<8x128xf32>
    %285 = vector.extract_strided_slice %252 {offsets = [1, 0, 0], sizes = [1, 8, 128], strides = [1, 1, 1]} : vector<8x8x128xf32> to vector<1x8x128xf32>
    %286 = vector.shape_cast %285 : vector<1x8x128xf32> to vector<8x128xf32>
    %287 = arith.select %54, %284, %286 : vector<8x128xi1>, vector<8x128xf32>
    %288 = vector.extract_strided_slice %252 {offsets = [7, 0, 0], sizes = [1, 8, 128], strides = [1, 1, 1]} : vector<8x8x128xf32> to vector<1x8x128xf32>
    %289 = vector.shape_cast %288 : vector<1x8x128xf32> to vector<8x128xf32>
    %290 = vector.extract_strided_slice %252 {offsets = [0, 0, 0], sizes = [1, 8, 128], strides = [1, 1, 1]} : vector<8x8x128xf32> to vector<1x8x128xf32>
    %291 = vector.shape_cast %290 : vector<1x8x128xf32> to vector<8x128xf32>
    %292 = arith.select %54, %289, %291 : vector<8x128xi1>, vector<8x128xf32>
    %cst_45 = arith.constant 0.000000e+00 : f32
    %293 = vector.broadcast %cst_45 : f32 to vector<8x32xf32>
    %cst_46 = arith.constant 0.000000e+00 : f32
    %294 = vector.broadcast %cst_46 : f32 to vector<8x32xf32>
    %cst_47 = arith.constant dense<0.000000e+00> : vector<8x128xf32>
    %295 = tpu.matmul %293, %47, %cst_47 {dimension_numbers = #tpu.dot_dimension_numbers<[1], [0], [0], [1], [0, 0, 1, 1], [], []>} : vector<8x32xf32>, vector<32x128xf32>, vector<8x128xf32> -> vector<8x128xf32>
    %296 = arith.addf %295, %257 : vector<8x128xf32>
    %297 = arith.negf %296 : vector<8x128xf32>
    %298 = math.exp %297 : vector<8x128xf32>
    %cst_48 = arith.constant 1.000000e+00 : f32
    %299 = vector.broadcast %cst_48 : f32 to vector<8x128xf32>
    %300 = arith.addf %299, %298 : vector<8x128xf32>
    %301 = arith.divf %299, %300 : vector<8x128xf32>
    %302 = math.tanh %296 : vector<8x128xf32>
    %303 = vector.extract_strided_slice %301 {offsets = [0, 32], sizes = [8, 32], strides = [1, 1]} : vector<8x128xf32> to vector<8x32xf32>
    %304 = arith.mulf %303, %294 : vector<8x32xf32>
    %305 = vector.extract_strided_slice %301 {offsets = [0, 0], sizes = [8, 32], strides = [1, 1]} : vector<8x128xf32> to vector<8x32xf32>
    %306 = vector.extract_strided_slice %302 {offsets = [0, 64], sizes = [8, 32], strides = [1, 1]} : vector<8x128xf32> to vector<8x32xf32>
    %307 = arith.mulf %305, %306 : vector<8x32xf32>
    %308 = arith.addf %304, %307 : vector<8x32xf32>
    %309 = vector.extract_strided_slice %301 {offsets = [0, 96], sizes = [8, 32], strides = [1, 1]} : vector<8x128xf32> to vector<8x32xf32>
    %310 = math.tanh %308 : vector<8x32xf32>
    %311 = arith.mulf %309, %310 : vector<8x32xf32>
    %cst_49 = arith.constant dense<0.000000e+00> : vector<8x128xf32>
    %312 = tpu.matmul %311, %47, %cst_49 {dimension_numbers = #tpu.dot_dimension_numbers<[1], [0], [0], [1], [0, 0, 1, 1], [], []>} : vector<8x32xf32>, vector<32x128xf32>, vector<8x128xf32> -> vector<8x128xf32>
    %313 = arith.addf %312, %262 : vector<8x128xf32>
    %314 = arith.negf %313 : vector<8x128xf32>
    %315 = math.exp %314 : vector<8x128xf32>
    %cst_50 = arith.constant 1.000000e+00 : f32
    %316 = vector.broadcast %cst_50 : f32 to vector<8x128xf32>
    %317 = arith.addf %316, %315 : vector<8x128xf32>
    %318 = arith.divf %316, %317 : vector<8x128xf32>
    %319 = math.tanh %313 : vector<8x128xf32>
    %320 = vector.extract_strided_slice %318 {offsets = [0, 32], sizes = [8, 32], strides = [1, 1]} : vector<8x128xf32> to vector<8x32xf32>
    %321 = arith.mulf %320, %308 : vector<8x32xf32>
    %322 = vector.extract_strided_slice %318 {offsets = [0, 0], sizes = [8, 32], strides = [1, 1]} : vector<8x128xf32> to vector<8x32xf32>
    %323 = vector.extract_strided_slice %319 {offsets = [0, 64], sizes = [8, 32], strides = [1, 1]} : vector<8x128xf32> to vector<8x32xf32>
    %324 = arith.mulf %322, %323 : vector<8x32xf32>
    %325 = arith.addf %321, %324 : vector<8x32xf32>
    %326 = vector.extract_strided_slice %318 {offsets = [0, 96], sizes = [8, 32], strides = [1, 1]} : vector<8x128xf32> to vector<8x32xf32>
    %327 = math.tanh %325 : vector<8x32xf32>
    %328 = arith.mulf %326, %327 : vector<8x32xf32>
    %cst_51 = arith.constant dense<0.000000e+00> : vector<8x128xf32>
    %329 = tpu.matmul %328, %47, %cst_51 {dimension_numbers = #tpu.dot_dimension_numbers<[1], [0], [0], [1], [0, 0, 1, 1], [], []>} : vector<8x32xf32>, vector<32x128xf32>, vector<8x128xf32> -> vector<8x128xf32>
    %330 = arith.addf %329, %267 : vector<8x128xf32>
    %331 = arith.negf %330 : vector<8x128xf32>
    %332 = math.exp %331 : vector<8x128xf32>
    %cst_52 = arith.constant 1.000000e+00 : f32
    %333 = vector.broadcast %cst_52 : f32 to vector<8x128xf32>
    %334 = arith.addf %333, %332 : vector<8x128xf32>
    %335 = arith.divf %333, %334 : vector<8x128xf32>
    %336 = math.tanh %330 : vector<8x128xf32>
    %337 = vector.extract_strided_slice %335 {offsets = [0, 32], sizes = [8, 32], strides = [1, 1]} : vector<8x128xf32> to vector<8x32xf32>
    %338 = arith.mulf %337, %325 : vector<8x32xf32>
    %339 = vector.extract_strided_slice %335 {offsets = [0, 0], sizes = [8, 32], strides = [1, 1]} : vector<8x128xf32> to vector<8x32xf32>
    %340 = vector.extract_strided_slice %336 {offsets = [0, 64], sizes = [8, 32], strides = [1, 1]} : vector<8x128xf32> to vector<8x32xf32>
    %341 = arith.mulf %339, %340 : vector<8x32xf32>
    %342 = arith.addf %338, %341 : vector<8x32xf32>
    %343 = vector.extract_strided_slice %335 {offsets = [0, 96], sizes = [8, 32], strides = [1, 1]} : vector<8x128xf32> to vector<8x32xf32>
    %344 = math.tanh %342 : vector<8x32xf32>
    %345 = arith.mulf %343, %344 : vector<8x32xf32>
    %cst_53 = arith.constant dense<0.000000e+00> : vector<8x128xf32>
    %346 = tpu.matmul %345, %47, %cst_53 {dimension_numbers = #tpu.dot_dimension_numbers<[1], [0], [0], [1], [0, 0, 1, 1], [], []>} : vector<8x32xf32>, vector<32x128xf32>, vector<8x128xf32> -> vector<8x128xf32>
    %347 = arith.addf %346, %272 : vector<8x128xf32>
    %348 = arith.negf %347 : vector<8x128xf32>
    %349 = math.exp %348 : vector<8x128xf32>
    %cst_54 = arith.constant 1.000000e+00 : f32
    %350 = vector.broadcast %cst_54 : f32 to vector<8x128xf32>
    %351 = arith.addf %350, %349 : vector<8x128xf32>
    %352 = arith.divf %350, %351 : vector<8x128xf32>
    %353 = math.tanh %347 : vector<8x128xf32>
    %354 = vector.extract_strided_slice %352 {offsets = [0, 32], sizes = [8, 32], strides = [1, 1]} : vector<8x128xf32> to vector<8x32xf32>
    %355 = arith.mulf %354, %342 : vector<8x32xf32>
    %356 = vector.extract_strided_slice %352 {offsets = [0, 0], sizes = [8, 32], strides = [1, 1]} : vector<8x128xf32> to vector<8x32xf32>
    %357 = vector.extract_strided_slice %353 {offsets = [0, 64], sizes = [8, 32], strides = [1, 1]} : vector<8x128xf32> to vector<8x32xf32>
    %358 = arith.mulf %356, %357 : vector<8x32xf32>
    %359 = arith.addf %355, %358 : vector<8x32xf32>
    %360 = vector.extract_strided_slice %352 {offsets = [0, 96], sizes = [8, 32], strides = [1, 1]} : vector<8x128xf32> to vector<8x32xf32>
    %361 = math.tanh %359 : vector<8x32xf32>
    %362 = arith.mulf %360, %361 : vector<8x32xf32>
    %cst_55 = arith.constant dense<0.000000e+00> : vector<8x128xf32>
    %363 = tpu.matmul %362, %47, %cst_55 {dimension_numbers = #tpu.dot_dimension_numbers<[1], [0], [0], [1], [0, 0, 1, 1], [], []>} : vector<8x32xf32>, vector<32x128xf32>, vector<8x128xf32> -> vector<8x128xf32>
    %364 = arith.addf %363, %277 : vector<8x128xf32>
    %365 = arith.negf %364 : vector<8x128xf32>
    %366 = math.exp %365 : vector<8x128xf32>
    %cst_56 = arith.constant 1.000000e+00 : f32
    %367 = vector.broadcast %cst_56 : f32 to vector<8x128xf32>
    %368 = arith.addf %367, %366 : vector<8x128xf32>
    %369 = arith.divf %367, %368 : vector<8x128xf32>
    %370 = math.tanh %364 : vector<8x128xf32>
    %371 = vector.extract_strided_slice %369 {offsets = [0, 32], sizes = [8, 32], strides = [1, 1]} : vector<8x128xf32> to vector<8x32xf32>
    %372 = arith.mulf %371, %359 : vector<8x32xf32>
    %373 = vector.extract_strided_slice %369 {offsets = [0, 0], sizes = [8, 32], strides = [1, 1]} : vector<8x128xf32> to vector<8x32xf32>
    %374 = vector.extract_strided_slice %370 {offsets = [0, 64], sizes = [8, 32], strides = [1, 1]} : vector<8x128xf32> to vector<8x32xf32>
    %375 = arith.mulf %373, %374 : vector<8x32xf32>
    %376 = arith.addf %372, %375 : vector<8x32xf32>
    %377 = vector.extract_strided_slice %369 {offsets = [0, 96], sizes = [8, 32], strides = [1, 1]} : vector<8x128xf32> to vector<8x32xf32>
    %378 = math.tanh %376 : vector<8x32xf32>
    %379 = arith.mulf %377, %378 : vector<8x32xf32>
    %cst_57 = arith.constant dense<0.000000e+00> : vector<8x128xf32>
    %380 = tpu.matmul %379, %47, %cst_57 {dimension_numbers = #tpu.dot_dimension_numbers<[1], [0], [0], [1], [0, 0, 1, 1], [], []>} : vector<8x32xf32>, vector<32x128xf32>, vector<8x128xf32> -> vector<8x128xf32>
    %381 = arith.addf %380, %282 : vector<8x128xf32>
    %382 = arith.negf %381 : vector<8x128xf32>
    %383 = math.exp %382 : vector<8x128xf32>
    %cst_58 = arith.constant 1.000000e+00 : f32
    %384 = vector.broadcast %cst_58 : f32 to vector<8x128xf32>
    %385 = arith.addf %384, %383 : vector<8x128xf32>
    %386 = arith.divf %384, %385 : vector<8x128xf32>
    %387 = math.tanh %381 : vector<8x128xf32>
    %388 = vector.extract_strided_slice %386 {offsets = [0, 32], sizes = [8, 32], strides = [1, 1]} : vector<8x128xf32> to vector<8x32xf32>
    %389 = arith.mulf %388, %376 : vector<8x32xf32>
    %390 = vector.extract_strided_slice %386 {offsets = [0, 0], sizes = [8, 32], strides = [1, 1]} : vector<8x128xf32> to vector<8x32xf32>
    %391 = vector.extract_strided_slice %387 {offsets = [0, 64], sizes = [8, 32], strides = [1, 1]} : vector<8x128xf32> to vector<8x32xf32>
    %392 = arith.mulf %390, %391 : vector<8x32xf32>
    %393 = arith.addf %389, %392 : vector<8x32xf32>
    %394 = vector.extract_strided_slice %386 {offsets = [0, 96], sizes = [8, 32], strides = [1, 1]} : vector<8x128xf32> to vector<8x32xf32>
    %395 = math.tanh %393 : vector<8x32xf32>
    %396 = arith.mulf %394, %395 : vector<8x32xf32>
    %cst_59 = arith.constant dense<0.000000e+00> : vector<8x128xf32>
    %397 = tpu.matmul %396, %47, %cst_59 {dimension_numbers = #tpu.dot_dimension_numbers<[1], [0], [0], [1], [0, 0, 1, 1], [], []>} : vector<8x32xf32>, vector<32x128xf32>, vector<8x128xf32> -> vector<8x128xf32>
    %398 = arith.addf %397, %287 : vector<8x128xf32>
    %399 = arith.negf %398 : vector<8x128xf32>
    %400 = math.exp %399 : vector<8x128xf32>
    %cst_60 = arith.constant 1.000000e+00 : f32
    %401 = vector.broadcast %cst_60 : f32 to vector<8x128xf32>
    %402 = arith.addf %401, %400 : vector<8x128xf32>
    %403 = arith.divf %401, %402 : vector<8x128xf32>
    %404 = math.tanh %398 : vector<8x128xf32>
    %405 = vector.extract_strided_slice %403 {offsets = [0, 32], sizes = [8, 32], strides = [1, 1]} : vector<8x128xf32> to vector<8x32xf32>
    %406 = arith.mulf %405, %393 : vector<8x32xf32>
    %407 = vector.extract_strided_slice %403 {offsets = [0, 0], sizes = [8, 32], strides = [1, 1]} : vector<8x128xf32> to vector<8x32xf32>
    %408 = vector.extract_strided_slice %404 {offsets = [0, 64], sizes = [8, 32], strides = [1, 1]} : vector<8x128xf32> to vector<8x32xf32>
    %409 = arith.mulf %407, %408 : vector<8x32xf32>
    %410 = arith.addf %406, %409 : vector<8x32xf32>
    %411 = vector.extract_strided_slice %403 {offsets = [0, 96], sizes = [8, 32], strides = [1, 1]} : vector<8x128xf32> to vector<8x32xf32>
    %412 = math.tanh %410 : vector<8x32xf32>
    %413 = arith.mulf %411, %412 : vector<8x32xf32>
    %cst_61 = arith.constant dense<0.000000e+00> : vector<8x128xf32>
    %414 = tpu.matmul %413, %47, %cst_61 {dimension_numbers = #tpu.dot_dimension_numbers<[1], [0], [0], [1], [0, 0, 1, 1], [], []>} : vector<8x32xf32>, vector<32x128xf32>, vector<8x128xf32> -> vector<8x128xf32>
    %415 = arith.addf %414, %292 : vector<8x128xf32>
    %416 = arith.negf %415 : vector<8x128xf32>
    %417 = math.exp %416 : vector<8x128xf32>
    %cst_62 = arith.constant 1.000000e+00 : f32
    %418 = vector.broadcast %cst_62 : f32 to vector<8x128xf32>
    %419 = arith.addf %418, %417 : vector<8x128xf32>
    %420 = arith.divf %418, %419 : vector<8x128xf32>
    %421 = math.tanh %415 : vector<8x128xf32>
    %422 = vector.extract_strided_slice %420 {offsets = [0, 32], sizes = [8, 32], strides = [1, 1]} : vector<8x128xf32> to vector<8x32xf32>
    %423 = arith.mulf %422, %410 : vector<8x32xf32>
    %424 = vector.extract_strided_slice %420 {offsets = [0, 0], sizes = [8, 32], strides = [1, 1]} : vector<8x128xf32> to vector<8x32xf32>
    %425 = vector.extract_strided_slice %421 {offsets = [0, 64], sizes = [8, 32], strides = [1, 1]} : vector<8x128xf32> to vector<8x32xf32>
    %426 = arith.mulf %424, %425 : vector<8x32xf32>
    %427 = arith.addf %423, %426 : vector<8x32xf32>
    %428 = vector.extract_strided_slice %420 {offsets = [0, 96], sizes = [8, 32], strides = [1, 1]} : vector<8x128xf32> to vector<8x32xf32>
    %429 = math.tanh %427 : vector<8x32xf32>
    %430 = arith.mulf %428, %429 : vector<8x32xf32>
    %431 = arith.select %57, %311, %430 : vector<8x32xi1>, vector<8x32xf32>
    %432 = arith.select %57, %328, %413 : vector<8x32xi1>, vector<8x32xf32>
    %433 = arith.select %57, %345, %396 : vector<8x32xi1>, vector<8x32xf32>
    %434 = arith.select %57, %362, %379 : vector<8x32xi1>, vector<8x32xf32>
    %435 = arith.select %57, %379, %362 : vector<8x32xi1>, vector<8x32xf32>
    %436 = arith.select %57, %396, %345 : vector<8x32xi1>, vector<8x32xf32>
    %437 = arith.select %57, %413, %328 : vector<8x32xi1>, vector<8x32xf32>
    %438 = arith.select %57, %430, %311 : vector<8x32xi1>, vector<8x32xf32>
    %439 = tpu.concatenate %431, %432, %433, %434, %435, %436, %437, %438 in 0 : vector<8x32xf32>, vector<8x32xf32>, vector<8x32xf32>, vector<8x32xf32>, vector<8x32xf32>, vector<8x32xf32>, vector<8x32xf32>, vector<8x32xf32> -> vector<64x32xf32>
    %c0_63 = arith.constant 0 : index
    %c0_64 = arith.constant 0 : index
    %440 = vector.load %arg4[%c0_63, %c0_64] : memref<152x128xf32, #tpu.memory_space<vmem>>, vector<32x128xf32>
    %c32 = arith.constant 32 : index
    %c0_65 = arith.constant 0 : index
    %441 = vector.load %arg4[%c32, %c0_65] : memref<152x128xf32, #tpu.memory_space<vmem>>, vector<64x32xf32>
    %c96 = arith.constant 96 : index
    %c0_66 = arith.constant 0 : index
    %442 = vector.load %arg4[%c96, %c0_66] : memref<152x128xf32, #tpu.memory_space<vmem>>, vector<32x16xf32>
    %c128 = arith.constant 128 : index
    %c0_67 = arith.constant 0 : index
    %443 = vector.load %arg4[%c128, %c0_67] : memref<152x128xf32, #tpu.memory_space<vmem>>, vector<16x4xf32>
    %c144 = arith.constant 144 : index
    %c0_68 = arith.constant 0 : index
    %444 = vector.load %arg4[%c144, %c0_68] : memref<152x128xf32, #tpu.memory_space<vmem>>, vector<8x128xf32>
    %445 = vector.extract_strided_slice %444 {offsets = [0, 0], sizes = [1, 128], strides = [1, 1]} : vector<8x128xf32> to vector<1x128xf32>
    %446 = vector.extract_strided_slice %444 {offsets = [1, 0], sizes = [1, 128], strides = [1, 1]} : vector<8x128xf32> to vector<1x128xf32>
    %447 = vector.extract_strided_slice %444 {offsets = [2, 0], sizes = [1, 128], strides = [1, 1]} : vector<8x128xf32> to vector<1x128xf32>
    %448 = vector.extract_strided_slice %444 {offsets = [3, 0], sizes = [1, 32], strides = [1, 1]} : vector<8x128xf32> to vector<1x32xf32>
    %449 = vector.extract_strided_slice %444 {offsets = [4, 0], sizes = [1, 32], strides = [1, 1]} : vector<8x128xf32> to vector<1x32xf32>
    %450 = vector.extract_strided_slice %444 {offsets = [5, 0], sizes = [1, 1], strides = [1, 1]} : vector<8x128xf32> to vector<1x1xf32>
    %451 = vector.extract_strided_slice %444 {offsets = [6, 0], sizes = [1, 16], strides = [1, 1]} : vector<8x128xf32> to vector<1x16xf32>
    %452 = vector.extract_strided_slice %444 {offsets = [7, 0], sizes = [1, 4], strides = [1, 1]} : vector<8x128xf32> to vector<1x4xf32>
    %453 = vector.extract_strided_slice %440 {offsets = [0, 0], sizes = [32, 64], strides = [1, 1]} : vector<32x128xf32> to vector<32x64xf32>
    %cst_69 = arith.constant dense<0.000000e+00> : vector<64x64xf32>
    %454 = tpu.matmul %439, %453, %cst_69 {dimension_numbers = #tpu.dot_dimension_numbers<[1], [0], [0], [1], [0, 0, 1, 1], [], []>} : vector<64x32xf32>, vector<32x64xf32>, vector<64x64xf32> -> vector<64x64xf32>
    %455 = vector.extract_strided_slice %445 {offsets = [0, 0], sizes = [1, 64], strides = [1, 1]} : vector<1x128xf32> to vector<1x64xf32>
    %456 = vector.broadcast %455 : vector<1x64xf32> to vector<64x64xf32>
    %457 = arith.addf %454, %456 : vector<64x64xf32>
    %cst_70 = arith.constant 0.000000e+00 : f32
    %458 = vector.broadcast %cst_70 : f32 to vector<64x64xf32>
    %459 = arith.maximumf %457, %458 : vector<64x64xf32>
    %460 = vector.extract_strided_slice %459 {offsets = [0, 0], sizes = [64, 32], strides = [1, 1]} : vector<64x64xf32> to vector<64x32xf32>
    %461 = vector.extract_strided_slice %446 {offsets = [0, 0], sizes = [1, 32], strides = [1, 1]} : vector<1x128xf32> to vector<1x32xf32>
    %462 = vector.broadcast %461 : vector<1x32xf32> to vector<64x32xf32>
    %463 = arith.mulf %460, %462 : vector<64x32xf32>
    %cst_71 = arith.constant dense<0.000000e+00> : vector<64xf32>
    %464 = vector.multi_reduction <add>, %463, %cst_71 [1] : vector<64x32xf32> to vector<64xf32>
    %465 = vector.shape_cast %464 : vector<64xf32> to vector<64x1xf32>
    %466 = vector.extract_strided_slice %447 {offsets = [0, 0], sizes = [1, 1], strides = [1, 1]} : vector<1x128xf32> to vector<1x1xf32>
    %467 = vector.broadcast %466 : vector<1x1xf32> to vector<64x1xf32>
    %468 = arith.addf %465, %467 : vector<64x1xf32>
    %469 = vector.extract_strided_slice %459 {offsets = [0, 32], sizes = [64, 32], strides = [1, 1]} : vector<64x64xf32> to vector<64x32xf32>
    %470 = vector.extract_strided_slice %446 {offsets = [0, 32], sizes = [1, 32], strides = [1, 1]} : vector<1x128xf32> to vector<1x32xf32>
    %471 = vector.broadcast %470 : vector<1x32xf32> to vector<64x32xf32>
    %472 = arith.mulf %469, %471 : vector<64x32xf32>
    %cst_72 = arith.constant dense<0.000000e+00> : vector<64xf32>
    %473 = vector.multi_reduction <add>, %472, %cst_72 [1] : vector<64x32xf32> to vector<64xf32>
    %474 = vector.shape_cast %473 : vector<64xf32> to vector<64x1xf32>
    %475 = vector.extract_strided_slice %447 {offsets = [0, 1], sizes = [1, 1], strides = [1, 1]} : vector<1x128xf32> to vector<1x1xf32>
    %476 = vector.broadcast %475 : vector<1x1xf32> to vector<64x1xf32>
    %477 = arith.addf %474, %476 : vector<64x1xf32>
    %478 = vector.shape_cast %468 : vector<64x1xf32> to vector<8x8x1xf32>
    %479 = vector.shape_cast %477 : vector<64x1xf32> to vector<8x8x1xf32>
    %480 = tpu.iota {dimensions = array<i32: 1>} : vector<8x8x1xi32>
    %c6_i32 = arith.constant 6 : i32
    %481 = vector.broadcast %c6_i32 : i32 to vector<8x8x1xi32>
    %482 = arith.cmpi sge, %480, %481 : vector<8x8x1xi32>
    %483 = arith.select %482, %479, %478 : vector<8x8x1xi1>, vector<8x8x1xf32>
    %cst_73 = arith.constant dense<0xFF800000> : vector<8x1xf32>
    %484 = vector.multi_reduction <maximumf>, %483, %cst_73 [0] : vector<8x8x1xf32> to vector<8x1xf32>
    %485 = vector.shape_cast %484 : vector<8x1xf32> to vector<1x8x1xf32>
    %486 = vector.broadcast %485 : vector<1x8x1xf32> to vector<8x8x1xf32>
    %487 = arith.subf %483, %486 : vector<8x8x1xf32>
    %488 = math.exp %487 : vector<8x8x1xf32>
    %cst_74 = arith.constant dense<0.000000e+00> : vector<8x1xf32>
    %489 = vector.multi_reduction <add>, %488, %cst_74 [0] : vector<8x8x1xf32> to vector<8x1xf32>
    %490 = vector.shape_cast %489 : vector<8x1xf32> to vector<1x8x1xf32>
    %491 = vector.broadcast %490 : vector<1x8x1xf32> to vector<8x8x1xf32>
    %492 = arith.divf %488, %491 : vector<8x8x1xf32>
    %493 = vector.shape_cast %439 : vector<64x32xf32> to vector<8x8x32xf32>
    %494 = vector.broadcast %492 : vector<8x8x1xf32> to vector<8x8x32xf32>
    %495 = arith.mulf %494, %493 : vector<8x8x32xf32>
    %cst_75 = arith.constant dense<0.000000e+00> : vector<8x32xf32>
    %496 = vector.multi_reduction <add>, %495, %cst_75 [0] : vector<8x8x32xf32> to vector<8x32xf32>
    %497 = vector.extract_strided_slice %496 {offsets = [0, 0], sizes = [2, 32], strides = [1, 1]} : vector<8x32xf32> to vector<2x32xf32>
    %498 = vector.extract_strided_slice %496 {offsets = [2, 0], sizes = [2, 32], strides = [1, 1]} : vector<8x32xf32> to vector<2x32xf32>
    %499 = vector.extract_strided_slice %496 {offsets = [4, 0], sizes = [2, 32], strides = [1, 1]} : vector<8x32xf32> to vector<2x32xf32>
    %500 = vector.extract_strided_slice %496 {offsets = [6, 0], sizes = [2, 32], strides = [1, 1]} : vector<8x32xf32> to vector<2x32xf32>
    %501 = vector.shape_cast %497 : vector<2x32xf32> to vector<1x2x32xf32>
    %502 = vector.shape_cast %499 : vector<2x32xf32> to vector<1x2x32xf32>
    %503 = vector.shape_cast %497 : vector<2x32xf32> to vector<1x2x32xf32>
    %504 = vector.shape_cast %43 : vector<2x32xf32> to vector<1x2x32xf32>
    %505 = vector.shape_cast %500 : vector<2x32xf32> to vector<1x2x32xf32>
    %506 = vector.shape_cast %500 : vector<2x32xf32> to vector<1x2x32xf32>
    %507 = tpu.concatenate %501, %502, %503, %504, %505, %506 in 0 : vector<1x2x32xf32>, vector<1x2x32xf32>, vector<1x2x32xf32>, vector<1x2x32xf32>, vector<1x2x32xf32>, vector<1x2x32xf32> -> vector<6x2x32xf32>
    %508 = vector.shape_cast %498 : vector<2x32xf32> to vector<1x2x32xf32>
    %509 = vector.shape_cast %498 : vector<2x32xf32> to vector<1x2x32xf32>
    %510 = vector.shape_cast %499 : vector<2x32xf32> to vector<1x2x32xf32>
    %511 = vector.shape_cast %498 : vector<2x32xf32> to vector<1x2x32xf32>
    %512 = vector.shape_cast %498 : vector<2x32xf32> to vector<1x2x32xf32>
    %513 = vector.shape_cast %43 : vector<2x32xf32> to vector<1x2x32xf32>
    %514 = tpu.concatenate %508, %509, %510, %511, %512, %513 in 0 : vector<1x2x32xf32>, vector<1x2x32xf32>, vector<1x2x32xf32>, vector<1x2x32xf32>, vector<1x2x32xf32>, vector<1x2x32xf32> -> vector<6x2x32xf32>
    %515 = vector.shape_cast %497 : vector<2x32xf32> to vector<1x2x32xf32>
    %516 = vector.shape_cast %499 : vector<2x32xf32> to vector<1x2x32xf32>
    %517 = vector.shape_cast %499 : vector<2x32xf32> to vector<1x2x32xf32>
    %518 = vector.shape_cast %43 : vector<2x32xf32> to vector<1x2x32xf32>
    %519 = vector.shape_cast %500 : vector<2x32xf32> to vector<1x2x32xf32>
    %520 = vector.shape_cast %500 : vector<2x32xf32> to vector<1x2x32xf32>
    %521 = tpu.concatenate %515, %516, %517, %518, %519, %520 in 0 : vector<1x2x32xf32>, vector<1x2x32xf32>, vector<1x2x32xf32>, vector<1x2x32xf32>, vector<1x2x32xf32>, vector<1x2x32xf32> -> vector<6x2x32xf32>
    %522 = tpu.concatenate %507, %514 in 2 : vector<6x2x32xf32>, vector<6x2x32xf32> -> vector<6x2x64xf32>
    %523 = vector.shape_cast %522 : vector<6x2x64xf32> to vector<12x64xf32>
    %cst_76 = arith.constant dense<0.000000e+00> : vector<12x32xf32>
    %524 = tpu.matmul %523, %441, %cst_76 {dimension_numbers = #tpu.dot_dimension_numbers<[1], [0], [0], [1], [0, 0, 1, 1], [], []>} : vector<12x64xf32>, vector<64x32xf32>, vector<12x32xf32> -> vector<12x32xf32>
    %525 = vector.broadcast %448 : vector<1x32xf32> to vector<12x32xf32>
    %526 = arith.addf %524, %525 : vector<12x32xf32>
    %cst_77 = arith.constant 0.000000e+00 : f32
    %527 = vector.broadcast %cst_77 : f32 to vector<12x32xf32>
    %528 = arith.maximumf %526, %527 : vector<12x32xf32>
    %529 = vector.broadcast %449 : vector<1x32xf32> to vector<12x32xf32>
    %530 = arith.mulf %528, %529 : vector<12x32xf32>
    %cst_78 = arith.constant dense<0.000000e+00> : vector<12xf32>
    %531 = vector.multi_reduction <add>, %530, %cst_78 [1] : vector<12x32xf32> to vector<12xf32>
    %532 = vector.shape_cast %531 : vector<12xf32> to vector<12x1xf32>
    %533 = vector.broadcast %450 : vector<1x1xf32> to vector<12x1xf32>
    %534 = arith.addf %532, %533 : vector<12x1xf32>
    %535 = arith.negf %534 : vector<12x1xf32>
    %536 = math.exp %535 : vector<12x1xf32>
    %cst_79 = arith.constant 1.000000e+00 : f32
    %537 = vector.broadcast %cst_79 : f32 to vector<12x1xf32>
    %538 = arith.addf %537, %536 : vector<12x1xf32>
    %539 = arith.divf %537, %538 : vector<12x1xf32>
    %540 = vector.shape_cast %539 : vector<12x1xf32> to vector<6x2x1xf32>
    %541 = vector.broadcast %540 : vector<6x2x1xf32> to vector<6x2x32xf32>
    %542 = arith.mulf %541, %521 : vector<6x2x32xf32>
    %543 = arith.addf %514, %542 : vector<6x2x32xf32>
    %544 = vector.shape_cast %543 : vector<6x2x32xf32> to vector<12x32xf32>
    %545 = vector.extract_strided_slice %440 {offsets = [0, 64], sizes = [32, 32], strides = [1, 1]} : vector<32x128xf32> to vector<32x32xf32>
    %cst_80 = arith.constant dense<0.000000e+00> : vector<12x32xf32>
    %546 = tpu.matmul %544, %545, %cst_80 {dimension_numbers = #tpu.dot_dimension_numbers<[1], [0], [0], [1], [0, 0, 1, 1], [], []>} : vector<12x32xf32>, vector<32x32xf32>, vector<12x32xf32> -> vector<12x32xf32>
    %547 = vector.extract_strided_slice %445 {offsets = [0, 64], sizes = [1, 32], strides = [1, 1]} : vector<1x128xf32> to vector<1x32xf32>
    %548 = vector.broadcast %547 : vector<1x32xf32> to vector<12x32xf32>
    %549 = arith.addf %546, %548 : vector<12x32xf32>
    %cst_81 = arith.constant 0.000000e+00 : f32
    %550 = vector.broadcast %cst_81 : f32 to vector<12x32xf32>
    %551 = arith.maximumf %549, %550 : vector<12x32xf32>
    %552 = vector.extract_strided_slice %446 {offsets = [0, 64], sizes = [1, 32], strides = [1, 1]} : vector<1x128xf32> to vector<1x32xf32>
    %553 = vector.broadcast %552 : vector<1x32xf32> to vector<12x32xf32>
    %554 = arith.mulf %551, %553 : vector<12x32xf32>
    %cst_82 = arith.constant dense<0.000000e+00> : vector<12xf32>
    %555 = vector.multi_reduction <add>, %554, %cst_82 [1] : vector<12x32xf32> to vector<12xf32>
    %556 = vector.shape_cast %555 : vector<12xf32> to vector<12x1xf32>
    %557 = vector.extract_strided_slice %447 {offsets = [0, 2], sizes = [1, 1], strides = [1, 1]} : vector<1x128xf32> to vector<1x1xf32>
    %558 = vector.broadcast %557 : vector<1x1xf32> to vector<12x1xf32>
    %559 = arith.addf %556, %558 : vector<12x1xf32>
    %560 = vector.shape_cast %559 : vector<12x1xf32> to vector<6x2x1xf32>
    %cst_83 = arith.constant dense<0xFF800000> : vector<2x1xf32>
    %561 = vector.multi_reduction <maximumf>, %560, %cst_83 [0] : vector<6x2x1xf32> to vector<2x1xf32>
    %562 = vector.shape_cast %561 : vector<2x1xf32> to vector<1x2x1xf32>
    %563 = vector.broadcast %562 : vector<1x2x1xf32> to vector<6x2x1xf32>
    %564 = arith.subf %560, %563 : vector<6x2x1xf32>
    %565 = math.exp %564 : vector<6x2x1xf32>
    %cst_84 = arith.constant dense<0.000000e+00> : vector<2x1xf32>
    %566 = vector.multi_reduction <add>, %565, %cst_84 [0] : vector<6x2x1xf32> to vector<2x1xf32>
    %567 = vector.shape_cast %566 : vector<2x1xf32> to vector<1x2x1xf32>
    %568 = vector.broadcast %567 : vector<1x2x1xf32> to vector<6x2x1xf32>
    %569 = arith.divf %565, %568 : vector<6x2x1xf32>
    %570 = vector.broadcast %569 : vector<6x2x1xf32> to vector<6x2x32xf32>
    %571 = arith.mulf %570, %543 : vector<6x2x32xf32>
    %cst_85 = arith.constant dense<0.000000e+00> : vector<2x32xf32>
    %572 = vector.multi_reduction <add>, %571, %cst_85 [0] : vector<6x2x32xf32> to vector<2x32xf32>
    %cst_86 = arith.constant dense<0.000000e+00> : vector<2x16xf32>
    %573 = tpu.matmul %572, %442, %cst_86 {dimension_numbers = #tpu.dot_dimension_numbers<[1], [0], [0], [1], [0, 0, 1, 1], [], []>} : vector<2x32xf32>, vector<32x16xf32>, vector<2x16xf32> -> vector<2x16xf32>
    %574 = vector.broadcast %451 : vector<1x16xf32> to vector<2x16xf32>
    %575 = arith.addf %573, %574 : vector<2x16xf32>
    %cst_87 = arith.constant 0.000000e+00 : f32
    %576 = vector.broadcast %cst_87 : f32 to vector<2x16xf32>
    %577 = arith.maximumf %575, %576 : vector<2x16xf32>
    %cst_88 = arith.constant dense<0.000000e+00> : vector<2x4xf32>
    %578 = tpu.matmul %577, %443, %cst_88 {dimension_numbers = #tpu.dot_dimension_numbers<[1], [0], [0], [1], [0, 0, 1, 1], [], []>} : vector<2x16xf32>, vector<16x4xf32>, vector<2x4xf32> -> vector<2x4xf32>
    %579 = vector.broadcast %452 : vector<1x4xf32> to vector<2x4xf32>
    %580 = arith.addf %578, %579 : vector<2x4xf32>
    %c0_89 = arith.constant 0 : index
    %c0_90 = arith.constant 0 : index
    %581 = vector.load %arg5[%c0_89, %c0_90] : memref<2x4xf32, #tpu.memory_space<vmem>>, vector<2x4xf32>
    tpu.vector_store %arg5[%c0_89, %c0_90], %580 {strides = array<i32>} : memref<2x4xf32, #tpu.memory_space<vmem>>, vector<2x4xf32>,
    return
  }
}

</mosaic_0001>

<llo_original>
// kernel: interactive_attn_forward.1
$region0: #{interactive_attn_forward.1}
  #allocation0 [shape = 'u32[]', space=smem, size = 0x4, offset = 0x4, fixed_abs, tag = 'smem constant byte address 0x4 - core index']
  #allocation1 [shape = 'u32[144,128]{1,0:T(1,128)}', space=vmem, size = 0x12000, scoped, tag = 'internal scratch']
  %s0 = inlined_call_operand.vmem [shape: s32[64,1], index: 0, kind: input, shape index: {}]
  %s1 = inlined_call_operand.vmem [shape: s32[20,1], index: 1, kind: input, shape index: {}]
  %s2 = inlined_call_operand.vmem [shape: f32[88,16], index: 2, kind: input, shape index: {}]
  %s3 = inlined_call_operand.hbm [shape: f32[128,128], index: 3, kind: input, shape index: {}]
  %s4 = inlined_call_operand.vmem [shape: f32[152,128], index: 4, kind: input, shape index: {}]
  %s5 = inlined_call_operand.hbm [shape: f32[2,4], index: 5, kind: output, shape index: {}]
  %s6 = sld [smem:[#allocation0]]
  $region34: #{interactive_attn_forward.1} parent=0
    _
  %s8 = ssub.s32 1, %s6
  %s9 = scalar_select 0, %s8, %s6
  $region1: #{interactive_attn_forward.1} parent=0
    #allocation2 [shape = 'u8[65536]{0}', space=vmem, size = 0x10000, scoped, tag = 'input window, operand 3, single buffered']
    #allocation3 [shape = 's32[1]{0}', space=sflag, size = 0x4, scoped, tag = 'scoped memory for interactive_attn_forward.1']
    #allocation4 [shape = 's32[1]{0}', space=sflag, size = 0x4, scoped, tag = 'scoped memory for interactive_attn_forward.1']
    #allocation5 [shape = 'u8[1024]{0}', space=vmem, size = 0x400, scoped, tag = 'output window, operand 0, single buffered']
    %10 = vsyncpa [#allocation3], 0
    %11 = vsyncpa [#allocation4], 0
    // Predicated region
    $region2: #{interactive_attn_forward.1} parent=1 // pred_check
      _
    $region3: #{interactive_attn_forward.1} parent=1 // pred_check_branch
      %13 = sbr.rel (0) target = $region5
    $region4: #{interactive_attn_forward.1} parent=1 // pred_region
      _
    $region5: #{interactive_attn_forward.1} parent=1 // pred_fallthru
      _
    // Predicated region
    $region6: #{interactive_attn_forward.1} parent=1 // pred_check
      _
    $region7: #{interactive_attn_forward.1} parent=1 // pred_check_branch
      %15 = sbr.rel (0) target = $region9
    $region8: #{interactive_attn_forward.1} parent=1 // pred_region
      _
    $region9: #{interactive_attn_forward.1} parent=1 // pred_fallthru
      _
    // Predicated region
    $region10: #{interactive_attn_forward.1} parent=1 // pred_check
      _
    $region11: #{interactive_attn_forward.1} parent=1 // pred_check_branch
      %17 = sbr.rel (0) target = $region13
    $region12: #{interactive_attn_forward.1} parent=1 // pred_region
      _
    $region13: #{interactive_attn_forward.1} parent=1 // pred_fallthru
      _
    // Predicated region
    $region14: #{interactive_attn_forward.1} parent=1 // pred_check
      _
    $region15: #{interactive_attn_forward.1} parent=1 // pred_check_branch
      %19 = sbr.rel (0) target = $region17
    $region16: #{interactive_attn_forward.1} parent=1 // pred_region
      %s21 = ssub.s32 2048, 2048
      %22 = vsyncadd [#allocation3], %s21
      %s23 = sshll.u32 [#allocation2], 4
      %s24 = int_to_ptr.vmem [resolvable:$true] %s23
      %29 = dma.hbm_to_vmem [thread:$0]  %s3, 2048, %s24, [#allocation3], 128, 128, 8
    $region17: #{interactive_attn_forward.1} parent=1 // pred_fallthru
      _
    // Predicated region
    $region18: #{interactive_attn_forward.1} parent=1 // pred_check
      _
    $region19: #{interactive_attn_forward.1} parent=1 // pred_check_branch
      %31 = sbr.rel (0) target = $region21
    $region20: #{interactive_attn_forward.1} parent=1 // pred_region
      _
    $region21: #{interactive_attn_forward.1} parent=1 // pred_fallthru
      _
    // Predicated region
    $region22: #{interactive_attn_forward.1} parent=1 // pred_check
      _
    $region23: #{interactive_attn_forward.1} parent=1 // pred_check_branch
      %33 = sbr.rel (0) target = $region25
    $region24: #{interactive_attn_forward.1} parent=1 // pred_region
      %34 = dma.done [#allocation3], 2048
    $region25: #{interactive_attn_forward.1} parent=1 // pred_fallthru
      _
    %v35 = vld [vmem:[%s2] sm:$0xff]
    %v36 = vld [vmem:[%s2 + $0x8] sm:$0xff]
    %v37 = vld [vmem:[%s2 + $0x10] sm:$0xff]
    %v38 = vld [vmem:[%s2 + $0x18] sm:$0xff]
    %v39 = vld [vmem:[%s2 + $0x20] sm:$0xff]
    %v40 = vld [vmem:[%s2 + $0x28] sm:$0xff]
    %v41 = vld [vmem:[%s2 + $0x30] sm:$0x3]
    %v42 = vld [vmem:[%s2 + $0x38] sm:$0xff]
    %v43 = vld [vmem:[%s2 + $0x40] sm:$0xff]
    %v44 = vld [vmem:[%s2 + $0x48] sm:$0xff]
    %v45 = vld [vmem:[%s2 + $0x50] sm:$0x3f]
    %v46 = vld [vmem:[%s0] sm:$0xff]
    %v47 = vld [vmem:[%s0 + $0x8] sm:$0xff]
    %v48 = vld [vmem:[%s0 + $0x10] sm:$0xff]
    %v49 = vld [vmem:[%s0 + $0x18] sm:$0xff]
    %v50 = vld [vmem:[%s0 + $0x20] sm:$0xff]
    %v51 = vld [vmem:[%s0 + $0x28] sm:$0xff]
    %v52 = vld [vmem:[%s0 + $0x30] sm:$0xff]
    %v53 = vld [vmem:[%s0 + $0x38] sm:$0xff]
    %v54 = vlaneseq
    %v55 = vand.u32 %v54, 127
    %56 = vset.pattern.permute.xlu0 0
    %57 = vperm.xlu0 %56, %v46
    %v58 = vpop.permute.xlu0 %57
    %59 = vset.pattern.permute.xlu0 0
    %60 = vperm.xlu0 %59, %v47
    %v61 = vpop.permute.xlu0 %60
    %62 = vset.pattern.permute.xlu0 0
    %63 = vperm.xlu0 %62, %v48
    %v64 = vpop.permute.xlu0 %63
    %65 = vset.pattern.permute.xlu0 0
    %66 = vperm.xlu0 %65, %v49
    %v67 = vpop.permute.xlu0 %66
    %68 = vset.pattern.permute.xlu0 0
    %69 = vperm.xlu0 %68, %v50
    %v70 = vpop.permute.xlu0 %69
    %71 = vset.pattern.permute.xlu0 0
    %72 = vperm.xlu0 %71, %v51
    %v73 = vpop.permute.xlu0 %72
    %74 = vset.pattern.permute.xlu0 0
    %75 = vperm.xlu0 %74, %v52
    %v76 = vpop.permute.xlu0 %75
    %77 = vset.pattern.permute.xlu0 0
    %78 = vperm.xlu0 %77, %v53
    %v79 = vpop.permute.xlu0 %78
    %vm80 = vcmp.eq.s32.totalorder %v55, %v58
    %vm81 = vcmp.eq.s32.totalorder %v55, %v61
    %vm82 = vcmp.eq.s32.totalorder %v55, %v64
    %vm83 = vcmp.eq.s32.totalorder %v55, %v67
    %vm84 = vcmp.eq.s32.totalorder %v55, %v70
    %vm85 = vcmp.eq.s32.totalorder %v55, %v73
    %vm86 = vcmp.eq.s32.totalorder %v55, %v76
    %vm87 = vcmp.eq.s32.totalorder %v55, %v79
    %v88 = vsel %vm80, 1.0, 0.0
    %v89 = vsel %vm81, 1.0, 0.0
    %v90 = vsel %vm82, 1.0, 0.0
    %v91 = vsel %vm83, 1.0, 0.0
    %v92 = vsel %vm84, 1.0, 0.0
    %v93 = vsel %vm85, 1.0, 0.0
    %v94 = vsel %vm86, 1.0, 0.0
    %v95 = vsel %vm87, 1.0, 0.0
    %vm96 = vcmask 408576
    %v98 = vsel %vm96, %v88, 0
    %v101 = vsel %vm96, %v89, 0
    %v104 = vsel %vm96, %v90, 0
    %v107 = vsel %vm96, %v91, 0
    %v110 = vsel %vm96, %v92, 0
    %v113 = vsel %vm96, %v93, 0
    %v116 = vsel %vm96, %v94, 0
    %v119 = vsel %vm96, %v95, 0
    %vm121 = vcmask 1041408
    %v123 = vsel %vm121, %v41, 0
    %125 = vmatprep.subr.mxu0 0.0
    %126 = vmatpush1.msra.mxu0 0.0
    %127 = vmatprep.subr.mxu0 0.0
    %128 = vmatpush1.msra.mxu0 0.0
    %129 = vmatprep.subr.mxu0 0.0
    %130 = vmatpush1.msra.mxu0 0.0
    %131 = vmatprep.subr.mxu0 0.0
    %132 = vmatpush1.msra.mxu0 0.0
    %133 = vmatprep.subr.mxu0 0.0
    %134 = vmatpush1.msra.mxu0 0.0
    %135 = vmatprep.subr.mxu0 0.0
    %136 = vmatpush1.msra.mxu0 0.0
    %137 = vmatprep.subr.mxu0 0.0
    %138 = vmatpush1.msra.mxu0 0.0
    %139 = vmatprep.subr.mxu0 0.0
    %140 = vmatpush1.msra.mxu0 0.0
    %141 = vmatprep.subr.mxu0 0.0
    %142 = vmatpush1.msra.mxu0 0.0
    %143 = vmatprep.subr.mxu0 0.0
    %144 = vmatpush1.msra.mxu0 %v123
    %145 = vmatprep.subr.mxu0 0.0
    %146 = vmatpush1.msra.mxu0 %v40
    %147 = vmatprep.subr.mxu0 0.0
    %148 = vmatpush1.msra.mxu0 %v39
    %149 = vmatprep.subr.mxu0 0.0
    %150 = vmatpush1.msra.mxu0 %v38
    %151 = vmatprep.subr.mxu0 0.0
    %152 = vmatpush1.msra.mxu0 %v37
    %153 = vmatprep.subr.mxu0 0.0
    %154 = vmatpush1.msra.mxu0 %v36
    %155 = vmatprep.subr.mxu0 0.0
    %156 = vmatpush1.msra.mxu0 %v35
    %157 = vmatprep.subr.mxu0 0.0
    %158 = vmatpush2.msra.mxu0 0.0
    %159 = vmatprep.subr.mxu0 0.0
    %160 = vmatpush2.msra.mxu0 0.0
    %161 = vmatprep.subr.mxu0 0.0
    %162 = vmatpush2.msra.mxu0 0.0
    %163 = vmatprep.subr.mxu0 0.0
    %164 = vmatpush2.msra.mxu0 0.0
    %165 = vmatprep.subr.mxu0 0.0
    %166 = vmatpush2.msra.mxu0 0.0
    %167 = vmatprep.subr.mxu0 0.0
    %168 = vmatpush2.msra.mxu0 0.0
    %169 = vmatprep.subr.mxu0 0.0
    %170 = vmatpush2.msra.mxu0 0.0
    %171 = vmatprep.subr.mxu0 0.0
    %172 = vmatpush2.msra.mxu0 0.0
    %173 = vmatprep.subr.mxu0 0.0
    %174 = vmatpush2.msra.mxu0 0.0
    %175 = vmatprep.subr.mxu0 0.0
    %176 = vmatpush2.msra.mxu0 0.0
    %177 = vmatprep.subr.mxu0 0.0
    %178 = vmatpush2.msra.mxu0 0.0
    %179 = vmatprep.subr.mxu0 0.0
    %180 = vmatpush2.msra.mxu0 0.0
    %181 = vmatprep.subr.mxu0 0.0
    %182 = vmatpush2.msra.mxu0 0.0
    %183 = vmatprep.subr.mxu0 0.0
    %184 = vmatpush2.msra.mxu0 0.0
    %185 = vmatprep.subr.mxu0 0.0
    %186 = vmatpush2.msra.mxu0 0.0
    %187 = vmatprep.subr.mxu0 0.0
    %188 = vmatpush2.msra.mxu0 0.0
    %189 = vmatprep.mubr.f32.mxu0 0.0
    %190 = vmatmul.mubr.f32.gmra.mxu0 %v98
    %v191 = vpop.f32.mrf.mxu0
    %v192 = vadd.f32 0.0, %v191
    %v193 = vpop.f32.mrf.mxu0
    %194 = vmatprep.mubr.f32.mxu0 0.0
    %195 = vmatmul.mubr.f32.gmra.mxu0 %v101
    %v196 = vpop.f32.mrf.mxu0
    %v197 = vadd.f32 0.0, %v196
    %v198 = vpop.f32.mrf.mxu0
    %199 = vmatprep.mubr.f32.mxu0 0.0
    %200 = vmatmul.mubr.f32.gmra.mxu0 %v104
    %v201 = vpop.f32.mrf.mxu0
    %v202 = vadd.f32 0.0, %v201
    %v203 = vpop.f32.mrf.mxu0
    %204 = vmatprep.mubr.f32.mxu0 0.0
    %205 = vmatmul.mubr.f32.gmra.mxu0 %v107
    %v206 = vpop.f32.mrf.mxu0
    %v207 = vadd.f32 0.0, %v206
    %v208 = vpop.f32.mrf.mxu0
    %209 = vmatprep.mubr.f32.mxu0 0.0
    %210 = vmatmul.mubr.f32.gmra.mxu0 %v110
    %v211 = vpop.f32.mrf.mxu0
    %v212 = vadd.f32 0.0, %v211
    %v213 = vpop.f32.mrf.mxu0
    %214 = vmatprep.mubr.f32.mxu0 0.0
    %215 = vmatmul.mubr.f32.gmra.mxu0 %v113
    %v216 = vpop.f32.mrf.mxu0
    %v217 = vadd.f32 0.0, %v216
    %v218 = vpop.f32.mrf.mxu0
    %219 = vmatprep.mubr.f32.mxu0 0.0
    %220 = vmatmul.mubr.f32.gmra.mxu0 %v116
    %v221 = vpop.f32.mrf.mxu0
    %v222 = vadd.f32 0.0, %v221
    %v223 = vpop.f32.mrf.mxu0
    %224 = vmatprep.mubr.f32.mxu0 0.0
    %225 = vmatmul.mubr.f32.gmra.mxu0 %v119
    %v226 = vpop.f32.mrf.mxu0
    %v227 = vadd.f32 0.0, %v226
    %v228 = vpop.f32.mrf.mxu0
    %229 = vdwg.mxu0
    %v230 = vld [vmem:[%s1] sm:$0xff]
    %v231 = vld [vmem:[%s1 + $0x8] sm:$0xff]
    %v232 = vld [vmem:[%s1 + $0x10] sm:$0xf]
    %233 = vset.pattern.permute.xlu0 0
    %234 = vperm.xlu0 %233, %v230
    %v235 = vpop.permute.xlu0 %234
    %236 = vset.pattern.permute.xlu0 0
    %237 = vperm.xlu0 %236, %v231
    %v238 = vpop.permute.xlu0 %237
    %239 = vset.pattern.permute.xlu0 0
    %240 = vperm.xlu0 %239, %v232
    %v241 = vpop.permute.xlu0 %240
    %vm242 = vcmp.eq.s32.totalorder %v55, %v235
    %vm243 = vcmp.eq.s32.totalorder %v55, %v238
    %vm244 = vcmp.eq.s32.totalorder %v55, %v241
    %v245 = vsel %vm242, 1.0, 0.0
    %v246 = vsel %vm243, 1.0, 0.0
    %v247 = vsel %vm244, 1.0, 0.0
    %vm248 = vcmask 244736
    %v250 = vsel %vm248, %v245, 0
    %v253 = vsel %vm248, %v246, 0
    %v256 = vsel %vm248, %v247, 0
    %vm258 = vcmask 1045504
    %v260 = vsel %vm258, %v45, 0
    %262 = vmatprep.subr.mxu0 0.0
    %263 = vmatpush1.msra.mxu0 0.0
    %264 = vmatprep.subr.mxu0 0.0
    %265 = vmatpush1.msra.mxu0 0.0
    %266 = vmatprep.subr.mxu0 0.0
    %267 = vmatpush1.msra.mxu0 0.0
    %268 = vmatprep.subr.mxu0 0.0
    %269 = vmatpush1.msra.mxu0 0.0
    %270 = vmatprep.subr.mxu0 0.0
    %271 = vmatpush1.msra.mxu0 0.0
    %272 = vmatprep.subr.mxu0 0.0
    %273 = vmatpush1.msra.mxu0 0.0
    %274 = vmatprep.subr.mxu0 0.0
    %275 = vmatpush1.msra.mxu0 0.0
    %276 = vmatprep.subr.mxu0 0.0
    %277 = vmatpush1.msra.mxu0 0.0
    %278 = vmatprep.subr.mxu0 0.0
    %279 = vmatpush1.msra.mxu0 0.0
    %280 = vmatprep.subr.mxu0 0.0
    %281 = vmatpush1.msra.mxu0 0.0
    %282 = vmatprep.subr.mxu0 0.0
    %283 = vmatpush1.msra.mxu0 0.0
    %284 = vmatprep.subr.mxu0 0.0
    %285 = vmatpush1.msra.mxu0 0.0
    %286 = vmatprep.subr.mxu0 0.0
    %287 = vmatpush1.msra.mxu0 %v260
    %288 = vmatprep.subr.mxu0 0.0
    %289 = vmatpush1.msra.mxu0 %v44
    %290 = vmatprep.subr.mxu0 0.0
    %291 = vmatpush1.msra.mxu0 %v43
    %292 = vmatprep.subr.mxu0 0.0
    %293 = vmatpush1.msra.mxu0 %v42
    %294 = vmatprep.subr.mxu0 0.0
    %295 = vmatpush2.msra.mxu0 0.0
    %296 = vmatprep.subr.mxu0 0.0
    %297 = vmatpush2.msra.mxu0 0.0
    %298 = vmatprep.subr.mxu0 0.0
    %299 = vmatpush2.msra.mxu0 0.0
    %300 = vmatprep.subr.mxu0 0.0
    %301 = vmatpush2.msra.mxu0 0.0
    %302 = vmatprep.subr.mxu0 0.0
    %303 = vmatpush2.msra.mxu0 0.0
    %304 = vmatprep.subr.mxu0 0.0
    %305 = vmatpush2.msra.mxu0 0.0
    %306 = vmatprep.subr.mxu0 0.0
    %307 = vmatpush2.msra.mxu0 0.0
    %308 = vmatprep.subr.mxu0 0.0
    %309 = vmatpush2.msra.mxu0 0.0
    %310 = vmatprep.subr.mxu0 0.0
    %311 = vmatpush2.msra.mxu0 0.0
    %312 = vmatprep.subr.mxu0 0.0
    %313 = vmatpush2.msra.mxu0 0.0
    %314 = vmatprep.subr.mxu0 0.0
    %315 = vmatpush2.msra.mxu0 0.0
    %316 = vmatprep.subr.mxu0 0.0
    %317 = vmatpush2.msra.mxu0 0.0
    %318 = vmatprep.subr.mxu0 0.0
    %319 = vmatpush2.msra.mxu0 0.0
    %320 = vmatprep.subr.mxu0 0.0
    %321 = vmatpush2.msra.mxu0 0.0
    %322 = vmatprep.subr.mxu0 0.0
    %323 = vmatpush2.msra.mxu0 0.0
    %324 = vmatprep.subr.mxu0 0.0
    %325 = vmatpush2.msra.mxu0 0.0
    %326 = vmatprep.mubr.f32.mxu0 0.0
    %327 = vmatmul.mubr.f32.gmra.mxu0 %v250
    %v328 = vpop.f32.mrf.mxu0
    %v329 = vadd.f32 0.0, %v328
    %v330 = vpop.f32.mrf.mxu0
    %331 = vmatprep.mubr.f32.mxu0 0.0
    %332 = vmatmul.mubr.f32.gmra.mxu0 %v253
    %v333 = vpop.f32.mrf.mxu0
    %v334 = vadd.f32 0.0, %v333
    %v335 = vpop.f32.mrf.mxu0
    %336 = vmatprep.mubr.f32.mxu0 0.0
    %337 = vmatmul.mubr.f32.gmra.mxu0 %v256
    %v338 = vpop.f32.mrf.mxu0
    %v339 = vadd.f32 0.0, %v338
    %v340 = vpop.f32.mrf.mxu0
    %341 = vdwg.mxu0
    %v342 = vlaneseq
    %v343 = vshrl.u32 %v342, 7
    %v344 = vmul.u32 %v343, 5
    %vm345 = vcmp.ge.s32.totalorder %v55, %v344
    %v346 = vadd.s32 %v343, 1
    %v347 = vmul.u32 %v346, 5
    %vm348 = vcmp.lt.s32.totalorder %v55, %v347
    %vm349 = vmand %vm345, %vm348
    %v350 = vsel %vm349, 1.0, 0.0
    %vm351 = vcmask 162816
    %v353 = vsel %vm351, %v350, 0
    %vm355 = vcmask 1043456
    %v357 = vsel %vm355, %v339, 0
    %359 = vmatprep.subr.mxu0 0.0
    %360 = vmatpush1.msra.mxu0 0.0
    %361 = vmatprep.subr.mxu0 0.0
    %362 = vmatpush1.msra.mxu0 0.0
    %363 = vmatprep.subr.mxu0 0.0
    %364 = vmatpush1.msra.mxu0 0.0
    %365 = vmatprep.subr.mxu0 0.0
    %366 = vmatpush1.msra.mxu0 0.0
    %367 = vmatprep.subr.mxu0 0.0
    %368 = vmatpush1.msra.mxu0 0.0
    %369 = vmatprep.subr.mxu0 0.0
    %370 = vmatpush1.msra.mxu0 0.0
    %371 = vmatprep.subr.mxu0 0.0
    %372 = vmatpush1.msra.mxu0 0.0
    %373 = vmatprep.subr.mxu0 0.0
    %374 = vmatpush1.msra.mxu0 0.0
    %375 = vmatprep.subr.mxu0 0.0
    %376 = vmatpush1.msra.mxu0 0.0
    %377 = vmatprep.subr.mxu0 0.0
    %378 = vmatpush1.msra.mxu0 0.0
    %379 = vmatprep.subr.mxu0 0.0
    %380 = vmatpush1.msra.mxu0 0.0
    %381 = vmatprep.subr.mxu0 0.0
    %382 = vmatpush1.msra.mxu0 0.0
    %383 = vmatprep.subr.mxu0 0.0
    %384 = vmatpush1.msra.mxu0 0.0
    %385 = vmatprep.subr.mxu0 0.0
    %386 = vmatpush1.msra.mxu0 %v357
    %387 = vmatprep.subr.mxu0 0.0
    %388 = vmatpush1.msra.mxu0 %v334
    %389 = vmatprep.subr.mxu0 0.0
    %390 = vmatpush1.msra.mxu0 %v329
    %391 = vmatprep.subr.mxu0 0.0
    %392 = vmatpush2.msra.mxu0 0.0
    %393 = vmatprep.subr.mxu0 0.0
    %394 = vmatpush2.msra.mxu0 0.0
    %395 = vmatprep.subr.mxu0 0.0
    %396 = vmatpush2.msra.mxu0 0.0
    %397 = vmatprep.subr.mxu0 0.0
    %398 = vmatpush2.msra.mxu0 0.0
    %399 = vmatprep.subr.mxu0 0.0
    %400 = vmatpush2.msra.mxu0 0.0
    %401 = vmatprep.subr.mxu0 0.0
    %402 = vmatpush2.msra.mxu0 0.0
    %403 = vmatprep.subr.mxu0 0.0
    %404 = vmatpush2.msra.mxu0 0.0
    %405 = vmatprep.subr.mxu0 0.0
    %406 = vmatpush2.msra.mxu0 0.0
    %407 = vmatprep.subr.mxu0 0.0
    %408 = vmatpush2.msra.mxu0 0.0
    %409 = vmatprep.subr.mxu0 0.0
    %410 = vmatpush2.msra.mxu0 0.0
    %411 = vmatprep.subr.mxu0 0.0
    %412 = vmatpush2.msra.mxu0 0.0
    %413 = vmatprep.subr.mxu0 0.0
    %414 = vmatpush2.msra.mxu0 0.0
    %415 = vmatprep.subr.mxu0 0.0
    %416 = vmatpush2.msra.mxu0 0.0
    %417 = vmatprep.subr.mxu0 0.0
    %418 = vmatpush2.msra.mxu0 0.0
    %419 = vmatprep.subr.mxu0 0.0
    %420 = vmatpush2.msra.mxu0 0.0
    %421 = vmatprep.subr.mxu0 0.0
    %422 = vmatpush2.msra.mxu0 0.0
    %423 = vmatprep.mubr.f32.mxu0 0.0
    %424 = vmatmul.mubr.f32.gmra.mxu0 %v353
    %v425 = vpop.f32.mrf.mxu0
    %v426 = vadd.f32 0.0, %v425
    %v427 = vpop.f32.mrf.mxu0
    %428 = vdwg.mxu0
    %v429 = vmul.f32 %v426, %v426
    %vm430 = vcmask 125952
    %v431 = vsel %vm430, %v429, 0.0
    %432 = vadd.xlane.f32.xlu0 %v431
    %v433 = vpop.xlane.xlu0 %432
    %v434 = vrsqrt.pop %v433
    %v435 = vmul.f32 %v433, %v434
    %vm436 = vcmp.eq.f32.partialorder %v433, inf
    %v437 = vsel %vm436, %v433, %v435
    %vm438 = vcmp.eq.f32.partialorder %v433, 0.0
    %v439 = vand.u32 %v433, 2147483648
    %v440 = vsel %vm438, %v439, %v437
    %v441 = vmax.f32 %v440, 1e-12
    %v442 = vrcp.pop %v441
    %v443 = vmul.f32 %v426, %v442
    %v445 = vrot.slane %v443, 2
    %446 = vrot.lane.b32.xlu0 %v445, 16
    %v447 = vpop.permute.xlu0 %446
    %vm449 = vcmask 130048
    %v450 = vsel %vm449, %v443, %v447
    %v451 = vld [vmem:[#allocation2] sm:$0xff]
    %v452 = vld [vmem:[#allocation2 + $0x8] sm:$0xff]
    %v453 = vld [vmem:[#allocation2 + $0x10] sm:$0xff]
    %v454 = vld [vmem:[#allocation2 + $0x18] sm:$0xff]
    %v455 = vld [vmem:[#allocation2 + $0x20] sm:$0xff]
    %v456 = vld [vmem:[#allocation2 + $0x28] sm:$0xff]
    %v457 = vld [vmem:[#allocation2 + $0x30] sm:$0xff]
    %v458 = vld [vmem:[#allocation2 + $0x38] sm:$0xff]
    %v459 = vld [vmem:[#allocation2 + $0x40] sm:$0xff]
    %v460 = vld [vmem:[#allocation2 + $0x48] sm:$0xff]
    %v461 = vld [vmem:[#allocation2 + $0x50] sm:$0xff]
    %v462 = vld [vmem:[#allocation2 + $0x58] sm:$0xff]
    %v463 = vld [vmem:[#allocation2 + $0x60] sm:$0xff]
    %v464 = vld [vmem:[#allocation2 + $0x68] sm:$0xff]
    %v465 = vld [vmem:[#allocation2 + $0x70] sm:$0x1]
    %v466 = vld [vmem:[#allocation2 + $0x78] sm:$0x1]
    %v467 = vand.u32 %v55, 31
    %vm468 = vcmp.lt.s32.totalorder %v467, 16
    %vm469 = vcmp.lt.s32.totalorder %v55, 16
    %v470 = vlaneseq
    %v471 = vshrl.u32 %v470, 7
    %v472 = vsub.s32 0, %v471
    %v473 = vrot.slane %v465, %v472
    %v475 = vsel %vm449, %v192, 0
    %v478 = vsel %vm449, %v197, 0
    %v481 = vsel %vm449, %v202, 0
    %v484 = vsel %vm449, %v207, 0
    %v487 = vsel %vm449, %v212, 0
    %v490 = vsel %vm449, %v217, 0
    %v493 = vsel %vm449, %v222, 0
    %v496 = vsel %vm449, %v227, 0
    %498 = vmatprep.subr.mxu0 0.0
    %499 = vmatpush1.msra.mxu0 0.0
    %500 = vmatprep.subr.mxu0 0.0
    %501 = vmatpush1.msra.mxu0 0.0
    %502 = vmatprep.subr.mxu0 0.0
    %503 = vmatpush1.msra.mxu0 0.0
    %504 = vmatprep.subr.mxu0 0.0
    %505 = vmatpush1.msra.mxu0 0.0
    %506 = vmatprep.subr.mxu0 0.0
    %507 = vmatpush1.msra.mxu0 0.0
    %508 = vmatprep.subr.mxu0 0.0
    %509 = vmatpush1.msra.mxu0 0.0
    %510 = vmatprep.subr.mxu0 0.0
    %511 = vmatpush1.msra.mxu0 0.0
    %512 = vmatprep.subr.mxu0 0.0
    %513 = vmatpush1.msra.mxu0 0.0
    %514 = vmatprep.subr.mxu0 0.0
    %515 = vmatpush1.msra.mxu0 0.0
    %516 = vmatprep.subr.mxu0 0.0
    %517 = vmatpush1.msra.mxu0 0.0
    %518 = vmatprep.subr.mxu0 0.0
    %519 = vmatpush1.msra.mxu0 0.0
    %520 = vmatprep.subr.mxu0 0.0
    %521 = vmatpush1.msra.mxu0 0.0
    %522 = vmatprep.subr.mxu0 0.0
    %523 = vmatpush1.msra.mxu0 0.0
    %524 = vmatprep.subr.mxu0 0.0
    %525 = vmatpush1.msra.mxu0 0.0
    %526 = vmatprep.subr.mxu0 0.0
    %527 = vmatpush1.msra.mxu0 %v452
    %528 = vmatprep.subr.mxu0 0.0
    %529 = vmatpush1.msra.mxu0 %v451
    %530 = vmatprep.subr.mxu0 0.0
    %531 = vmatpush2.msra.mxu0 0.0
    %532 = vmatprep.subr.mxu0 0.0
    %533 = vmatpush2.msra.mxu0 0.0
    %534 = vmatprep.subr.mxu0 0.0
    %535 = vmatpush2.msra.mxu0 0.0
    %536 = vmatprep.subr.mxu0 0.0
    %537 = vmatpush2.msra.mxu0 0.0
    %538 = vmatprep.subr.mxu0 0.0
    %539 = vmatpush2.msra.mxu0 0.0
    %540 = vmatprep.subr.mxu0 0.0
    %541 = vmatpush2.msra.mxu0 0.0
    %542 = vmatprep.subr.mxu0 0.0
    %543 = vmatpush2.msra.mxu0 0.0
    %544 = vmatprep.subr.mxu0 0.0
    %545 = vmatpush2.msra.mxu0 0.0
    %546 = vmatprep.subr.mxu0 0.0
    %547 = vmatpush2.msra.mxu0 0.0
    %548 = vmatprep.subr.mxu0 0.0
    %549 = vmatpush2.msra.mxu0 0.0
    %550 = vmatprep.subr.mxu0 0.0
    %551 = vmatpush2.msra.mxu0 0.0
    %552 = vmatprep.subr.mxu0 0.0
    %553 = vmatpush2.msra.mxu0 0.0
    %554 = vmatprep.subr.mxu0 0.0
    %555 = vmatpush2.msra.mxu0 0.0
    %556 = vmatprep.subr.mxu0 0.0
    %557 = vmatpush2.msra.mxu0 0.0
    %558 = vmatprep.subr.mxu0 0.0
    %559 = vmatpush2.msra.mxu0 0.0
    %560 = vmatprep.subr.mxu0 0.0
    %561 = vmatpush2.msra.mxu0 0.0
    %562 = vmatprep.mubr.f32.mxu0 0.0
    %563 = vmatmul.mubr.f32.gmra.mxu0 %v475
    %v564 = vpop.f32.mrf.mxu0
    %v565 = vadd.f32 %v473, %v564
    %v566 = vpop.f32.mrf.mxu0
    %567 = vmatprep.mubr.f32.mxu0 0.0
    %568 = vmatmul.mubr.f32.gmra.mxu0 %v478
    %v569 = vpop.f32.mrf.mxu0
    %v570 = vadd.f32 %v473, %v569
    %v571 = vpop.f32.mrf.mxu0
    %572 = vmatprep.mubr.f32.mxu0 0.0
    %573 = vmatmul.mubr.f32.gmra.mxu0 %v481
    %v574 = vpop.f32.mrf.mxu0
    %v575 = vadd.f32 %v473, %v574
    %v576 = vpop.f32.mrf.mxu0
    %577 = vmatprep.mubr.f32.mxu0 0.0
    %578 = vmatmul.mubr.f32.gmra.mxu0 %v484
    %v579 = vpop.f32.mrf.mxu0
    %v580 = vadd.f32 %v473, %v579
    %v581 = vpop.f32.mrf.mxu0
    %582 = vmatprep.mubr.f32.mxu0 0.0
    %583 = vmatmul.mubr.f32.gmra.mxu0 %v487
    %v584 = vpop.f32.mrf.mxu0
    %v585 = vadd.f32 %v473, %v584
    %v586 = vpop.f32.mrf.mxu0
    %587 = vmatprep.mubr.f32.mxu0 0.0
    %588 = vmatmul.mubr.f32.gmra.mxu0 %v490
    %v589 = vpop.f32.mrf.mxu0
    %v590 = vadd.f32 %v473, %v589
    %v591 = vpop.f32.mrf.mxu0
    %592 = vmatprep.mubr.f32.mxu0 0.0
    %593 = vmatmul.mubr.f32.gmra.mxu0 %v493
    %v594 = vpop.f32.mrf.mxu0
    %v595 = vadd.f32 %v473, %v594
    %v596 = vpop.f32.mrf.mxu0
    %597 = vmatprep.mubr.f32.mxu0 0.0
    %598 = vmatmul.mubr.f32.gmra.mxu0 %v496
    %v599 = vpop.f32.mrf.mxu0
    %v600 = vadd.f32 %v473, %v599
    %v601 = vpop.f32.mrf.mxu0
    %602 = vdwg.mxu0
    %v603 = vsel %vm468, %v565, %v600
    %v604 = vsel %vm468, %v570, %v595
    %v605 = vsel %vm468, %v575, %v590
    %v606 = vsel %vm468, %v580, %v585
    %v607 = vsel %vm468, %v585, %v580
    %v608 = vsel %vm468, %v590, %v575
    %v609 = vsel %vm468, %v595, %v570
    %v610 = vsel %vm468, %v600, %v565
    %vm611 = vcmask 261120
    %v613 = vsel %vm611, 0.0, 0
    %615 = vmatprep.subr.mxu0 0.0
    %616 = vmatpush1.msra.mxu0 0.0
    %617 = vmatprep.subr.mxu0 0.0
    %618 = vmatpush1.msra.mxu0 0.0
    %619 = vmatprep.subr.mxu0 0.0
    %620 = vmatpush1.msra.mxu0 0.0
    %621 = vmatprep.subr.mxu0 0.0
    %622 = vmatpush1.msra.mxu0 0.0
    %623 = vmatprep.subr.mxu0 0.0
    %624 = vmatpush1.msra.mxu0 0.0
    %625 = vmatprep.subr.mxu0 0.0
    %626 = vmatpush1.msra.mxu0 0.0
    %627 = vmatprep.subr.mxu0 0.0
    %628 = vmatpush1.msra.mxu0 0.0
    %629 = vmatprep.subr.mxu0 0.0
    %630 = vmatpush1.msra.mxu0 0.0
    %631 = vmatprep.subr.mxu0 0.0
    %632 = vmatpush1.msra.mxu0 0.0
    %633 = vmatprep.subr.mxu0 0.0
    %634 = vmatpush1.msra.mxu0 0.0
    %635 = vmatprep.subr.mxu0 0.0
    %636 = vmatpush1.msra.mxu0 0.0
    %637 = vmatprep.subr.mxu0 0.0
    %638 = vmatpush1.msra.mxu0 0.0
    %639 = vmatprep.subr.mxu0 0.0
    %640 = vmatpush1.msra.mxu0 %v460
    %641 = vmatprep.subr.mxu0 0.0
    %642 = vmatpush1.msra.mxu0 %v459
    %643 = vmatprep.subr.mxu0 0.0
    %644 = vmatpush1.msra.mxu0 %v458
    %645 = vmatprep.subr.mxu0 0.0
    %646 = vmatpush1.msra.mxu0 %v457
    %647 = vmatprep.subr.mxu0 0.0
    %648 = vmatpush2.msra.mxu0 0.0
    %649 = vmatprep.subr.mxu0 0.0
    %650 = vmatpush2.msra.mxu0 0.0
    %651 = vmatprep.subr.mxu0 0.0
    %652 = vmatpush2.msra.mxu0 0.0
    %653 = vmatprep.subr.mxu0 0.0
    %654 = vmatpush2.msra.mxu0 0.0
    %655 = vmatprep.subr.mxu0 0.0
    %656 = vmatpush2.msra.mxu0 0.0
    %657 = vmatprep.subr.mxu0 0.0
    %658 = vmatpush2.msra.mxu0 0.0
    %659 = vmatprep.subr.mxu0 0.0
    %660 = vmatpush2.msra.mxu0 0.0
    %661 = vmatprep.subr.mxu0 0.0
    %662 = vmatpush2.msra.mxu0 0.0
    %663 = vmatprep.subr.mxu0 0.0
    %664 = vmatpush2.msra.mxu0 0.0
    %665 = vmatprep.subr.mxu0 0.0
    %666 = vmatpush2.msra.mxu0 0.0
    %667 = vmatprep.subr.mxu0 0.0
    %668 = vmatpush2.msra.mxu0 0.0
    %669 = vmatprep.subr.mxu0 0.0
    %670 = vmatpush2.msra.mxu0 0.0
    %671 = vmatprep.subr.mxu0 0.0
    %672 = vmatpush2.msra.mxu0 0.0
    %673 = vmatprep.subr.mxu0 0.0
    %674 = vmatpush2.msra.mxu0 0.0
    %675 = vmatprep.subr.mxu0 0.0
    %676 = vmatpush2.msra.mxu0 0.0
    %677 = vmatprep.subr.mxu0 0.0
    %678 = vmatpush2.msra.mxu0 0.0
    %679 = vmatprep.mubr.f32.mxu0 0.0
    %680 = vmatmul.mubr.f32.gmra.mxu0 %v613
    %v681 = vpop.f32.mrf.mxu0
    %v682 = vadd.f32 %v603, %v681
    %v683 = vpop.f32.mrf.mxu0
    %684 = vdwg.mxu0
    %v685 = vxor.u32 %v682, 2147483648
    %v686 = vmul.f32 %v685, 1.442695
    %v687 = vpow.pop %v686
    %v688 = vadd.f32 %v687, 1.0
    %v689 = vrcp.pop %v688
    %v690 = vmul.f32 1.0, %v689
    %v691 = vtanh.pop %v682
    %v692 = vmul.f32 %v690, 0.0
    %694 = vrot.lane.b32.xlu0 %v691, 64
    %v695 = vpop.permute.xlu0 %694
    %v697 = vmul.f32 %v690, %v695
    %699 = vrot.lane.b32.xlu0 %v697, 32
    %v700 = vpop.permute.xlu0 %699
    %v702 = vadd.f32 %v692, %v700
    %v703 = vtanh.pop %v702
    %705 = vrot.lane.b32.xlu0 %v703, 64
    %v706 = vpop.permute.xlu0 %705
    %v708 = vmul.f32 %v690, %v706
    %710 = vrot.lane.b32.xlu0 %v708, 32
    %v711 = vpop.permute.xlu0 %710
    %v712 = vsel %vm611, %v711, 0
    %714 = vmatprep.subr.mxu0 0.0
    %715 = vmatpush1.msra.mxu0 0.0
    %716 = vmatprep.subr.mxu0 0.0
    %717 = vmatpush1.msra.mxu0 0.0
    %718 = vmatprep.subr.mxu0 0.0
    %719 = vmatpush1.msra.mxu0 0.0
    %720 = vmatprep.subr.mxu0 0.0
    %721 = vmatpush1.msra.mxu0 0.0
    %722 = vmatprep.subr.mxu0 0.0
    %723 = vmatpush1.msra.mxu0 0.0
    %724 = vmatprep.subr.mxu0 0.0
    %725 = vmatpush1.msra.mxu0 0.0
    %726 = vmatprep.subr.mxu0 0.0
    %727 = vmatpush1.msra.mxu0 0.0
    %728 = vmatprep.subr.mxu0 0.0
    %729 = vmatpush1.msra.mxu0 0.0
    %730 = vmatprep.subr.mxu0 0.0
    %731 = vmatpush1.msra.mxu0 0.0
    %732 = vmatprep.subr.mxu0 0.0
    %733 = vmatpush1.msra.mxu0 0.0
    %734 = vmatprep.subr.mxu0 0.0
    %735 = vmatpush1.msra.mxu0 0.0
    %736 = vmatprep.subr.mxu0 0.0
    %737 = vmatpush1.msra.mxu0 0.0
    %738 = vmatprep.subr.mxu0 0.0
    %739 = vmatpush1.msra.mxu0 %v460
    %740 = vmatprep.subr.mxu0 0.0
    %741 = vmatpush1.msra.mxu0 %v459
    %742 = vmatprep.subr.mxu0 0.0
    %743 = vmatpush1.msra.mxu0 %v458
    %744 = vmatprep.subr.mxu0 0.0
    %745 = vmatpush1.msra.mxu0 %v457
    %746 = vmatprep.subr.mxu0 0.0
    %747 = vmatpush2.msra.mxu0 0.0
    %748 = vmatprep.subr.mxu0 0.0
    %749 = vmatpush2.msra.mxu0 0.0
    %750 = vmatprep.subr.mxu0 0.0
    %751 = vmatpush2.msra.mxu0 0.0
    %752 = vmatprep.subr.mxu0 0.0
    %753 = vmatpush2.msra.mxu0 0.0
    %754 = vmatprep.subr.mxu0 0.0
    %755 = vmatpush2.msra.mxu0 0.0
    %756 = vmatprep.subr.mxu0 0.0
    %757 = vmatpush2.msra.mxu0 0.0
    %758 = vmatprep.subr.mxu0 0.0
    %759 = vmatpush2.msra.mxu0 0.0
    %760 = vmatprep.subr.mxu0 0.0
    %761 = vmatpush2.msra.mxu0 0.0
    %762 = vmatprep.subr.mxu0 0.0
    %763 = vmatpush2.msra.mxu0 0.0
    %764 = vmatprep.subr.mxu0 0.0
    %765 = vmatpush2.msra.mxu0 0.0
    %766 = vmatprep.subr.mxu0 0.0
    %767 = vmatpush2.msra.mxu0 0.0
    %768 = vmatprep.subr.mxu0 0.0
    %769 = vmatpush2.msra.mxu0 0.0
    %770 = vmatprep.subr.mxu0 0.0
    %771 = vmatpush2.msra.mxu0 0.0
    %772 = vmatprep.subr.mxu0 0.0
    %773 = vmatpush2.msra.mxu0 0.0
    %774 = vmatprep.subr.mxu0 0.0
    %775 = vmatpush2.msra.mxu0 0.0
    %776 = vmatprep.subr.mxu0 0.0
    %777 = vmatpush2.msra.mxu0 0.0
    %778 = vmatprep.mubr.f32.mxu0 0.0
    %779 = vmatmul.mubr.f32.gmra.mxu0 %v712
    %v780 = vpop.f32.mrf.mxu0
    %v781 = vadd.f32 %v604, %v780
    %v782 = vpop.f32.mrf.mxu0
    %783 = vdwg.mxu0
    %v784 = vxor.u32 %v781, 2147483648
    %v785 = vmul.f32 %v784, 1.442695
    %v786 = vpow.pop %v785
    %v787 = vadd.f32 %v786, 1.0
    %v788 = vrcp.pop %v787
    %v789 = vmul.f32 1.0, %v788
    %v790 = vtanh.pop %v781
    %v791 = vmul.f32 %v789, %v702
    %793 = vrot.lane.b32.xlu0 %v790, 64
    %v794 = vpop.permute.xlu0 %793
    %v796 = vmul.f32 %v789, %v794
    %798 = vrot.lane.b32.xlu0 %v796, 32
    %v799 = vpop.permute.xlu0 %798
    %v801 = vadd.f32 %v791, %v799
    %v802 = vtanh.pop %v801
    %804 = vrot.lane.b32.xlu0 %v802, 64
    %v805 = vpop.permute.xlu0 %804
    %v807 = vmul.f32 %v789, %v805
    %809 = vrot.lane.b32.xlu0 %v807, 32
    %v810 = vpop.permute.xlu0 %809
    %v811 = vsel %vm611, %v810, 0
    %813 = vmatprep.subr.mxu0 0.0
    %814 = vmatpush1.msra.mxu0 0.0
    %815 = vmatprep.subr.mxu0 0.0
    %816 = vmatpush1.msra.mxu0 0.0
    %817 = vmatprep.subr.mxu0 0.0
    %818 = vmatpush1.msra.mxu0 0.0
    %819 = vmatprep.subr.mxu0 0.0
    %820 = vmatpush1.msra.mxu0 0.0
    %821 = vmatprep.subr.mxu0 0.0
    %822 = vmatpush1.msra.mxu0 0.0
    %823 = vmatprep.subr.mxu0 0.0
    %824 = vmatpush1.msra.mxu0 0.0
    %825 = vmatprep.subr.mxu0 0.0
    %826 = vmatpush1.msra.mxu0 0.0
    %827 = vmatprep.subr.mxu0 0.0
    %828 = vmatpush1.msra.mxu0 0.0
    %829 = vmatprep.subr.mxu0 0.0
    %830 = vmatpush1.msra.mxu0 0.0
    %831 = vmatprep.subr.mxu0 0.0
    %832 = vmatpush1.msra.mxu0 0.0
    %833 = vmatprep.subr.mxu0 0.0
    %834 = vmatpush1.msra.mxu0 0.0
    %835 = vmatprep.subr.mxu0 0.0
    %836 = vmatpush1.msra.mxu0 0.0
    %837 = vmatprep.subr.mxu0 0.0
    %838 = vmatpush1.msra.mxu0 %v460
    %839 = vmatprep.subr.mxu0 0.0
    %840 = vmatpush1.msra.mxu0 %v459
    %841 = vmatprep.subr.mxu0 0.0
    %842 = vmatpush1.msra.mxu0 %v458
    %843 = vmatprep.subr.mxu0 0.0
    %844 = vmatpush1.msra.mxu0 %v457
    %845 = vmatprep.subr.mxu0 0.0
    %846 = vmatpush2.msra.mxu0 0.0
    %847 = vmatprep.subr.mxu0 0.0
    %848 = vmatpush2.msra.mxu0 0.0
    %849 = vmatprep.subr.mxu0 0.0
    %850 = vmatpush2.msra.mxu0 0.0
    %851 = vmatprep.subr.mxu0 0.0
    %852 = vmatpush2.msra.mxu0 0.0
    %853 = vmatprep.subr.mxu0 0.0
    %854 = vmatpush2.msra.mxu0 0.0
    %855 = vmatprep.subr.mxu0 0.0
    %856 = vmatpush2.msra.mxu0 0.0
    %857 = vmatprep.subr.mxu0 0.0
    %858 = vmatpush2.msra.mxu0 0.0
    %859 = vmatprep.subr.mxu0 0.0
    %860 = vmatpush2.msra.mxu0 0.0
    %861 = vmatprep.subr.mxu0 0.0
    %862 = vmatpush2.msra.mxu0 0.0
    %863 = vmatprep.subr.mxu0 0.0
    %864 = vmatpush2.msra.mxu0 0.0
    %865 = vmatprep.subr.mxu0 0.0
    %866 = vmatpush2.msra.mxu0 0.0
    %867 = vmatprep.subr.mxu0 0.0
    %868 = vmatpush2.msra.mxu0 0.0
    %869 = vmatprep.subr.mxu0 0.0
    %870 = vmatpush2.msra.mxu0 0.0
    %871 = vmatprep.subr.mxu0 0.0
    %872 = vmatpush2.msra.mxu0 0.0
    %873 = vmatprep.subr.mxu0 0.0
    %874 = vmatpush2.msra.mxu0 0.0
    %875 = vmatprep.subr.mxu0 0.0
    %876 = vmatpush2.msra.mxu0 0.0
    %877 = vmatprep.mubr.f32.mxu0 0.0
    %878 = vmatmul.mubr.f32.gmra.mxu0 %v811
    %v879 = vpop.f32.mrf.mxu0
    %v880 = vadd.f32 %v605, %v879
    %v881 = vpop.f32.mrf.mxu0
    %882 = vdwg.mxu0
    %v883 = vxor.u32 %v880, 2147483648
    %v884 = vmul.f32 %v883, 1.442695
    %v885 = vpow.pop %v884
    %v886 = vadd.f32 %v885, 1.0
    %v887 = vrcp.pop %v886
    %v888 = vmul.f32 1.0, %v887
    %v889 = vtanh.pop %v880
    %v890 = vmul.f32 %v888, %v801
    %892 = vrot.lane.b32.xlu0 %v889, 64
    %v893 = vpop.permute.xlu0 %892
    %v895 = vmul.f32 %v888, %v893
    %897 = vrot.lane.b32.xlu0 %v895, 32
    %v898 = vpop.permute.xlu0 %897
    %v900 = vadd.f32 %v890, %v898
    %v901 = vtanh.pop %v900
    %903 = vrot.lane.b32.xlu0 %v901, 64
    %v904 = vpop.permute.xlu0 %903
    %v906 = vmul.f32 %v888, %v904
    %908 = vrot.lane.b32.xlu0 %v906, 32
    %v909 = vpop.permute.xlu0 %908
    %v910 = vsel %vm611, %v909, 0
    %912 = vmatprep.subr.mxu0 0.0
    %913 = vmatpush1.msra.mxu0 0.0
    %914 = vmatprep.subr.mxu0 0.0
    %915 = vmatpush1.msra.mxu0 0.0
    %916 = vmatprep.subr.mxu0 0.0
    %917 = vmatpush1.msra.mxu0 0.0
    %918 = vmatprep.subr.mxu0 0.0
    %919 = vmatpush1.msra.mxu0 0.0
    %920 = vmatprep.subr.mxu0 0.0
    %921 = vmatpush1.msra.mxu0 0.0
    %922 = vmatprep.subr.mxu0 0.0
    %923 = vmatpush1.msra.mxu0 0.0
    %924 = vmatprep.subr.mxu0 0.0
    %925 = vmatpush1.msra.mxu0 0.0
    %926 = vmatprep.subr.mxu0 0.0
    %927 = vmatpush1.msra.mxu0 0.0
    %928 = vmatprep.subr.mxu0 0.0
    %929 = vmatpush1.msra.mxu0 0.0
    %930 = vmatprep.subr.mxu0 0.0
    %931 = vmatpush1.msra.mxu0 0.0
    %932 = vmatprep.subr.mxu0 0.0
    %933 = vmatpush1.msra.mxu0 0.0
    %934 = vmatprep.subr.mxu0 0.0
    %935 = vmatpush1.msra.mxu0 0.0
    %936 = vmatprep.subr.mxu0 0.0
    %937 = vmatpush1.msra.mxu0 %v460
    %938 = vmatprep.subr.mxu0 0.0
    %939 = vmatpush1.msra.mxu0 %v459
    %940 = vmatprep.subr.mxu0 0.0
    %941 = vmatpush1.msra.mxu0 %v458
    %942 = vmatprep.subr.mxu0 0.0
    %943 = vmatpush1.msra.mxu0 %v457
    %944 = vmatprep.subr.mxu0 0.0
    %945 = vmatpush2.msra.mxu0 0.0
    %946 = vmatprep.subr.mxu0 0.0
    %947 = vmatpush2.msra.mxu0 0.0
    %948 = vmatprep.subr.mxu0 0.0
    %949 = vmatpush2.msra.mxu0 0.0
    %950 = vmatprep.subr.mxu0 0.0
    %951 = vmatpush2.msra.mxu0 0.0
    %952 = vmatprep.subr.mxu0 0.0
    %953 = vmatpush2.msra.mxu0 0.0
    %954 = vmatprep.subr.mxu0 0.0
    %955 = vmatpush2.msra.mxu0 0.0
    %956 = vmatprep.subr.mxu0 0.0
    %957 = vmatpush2.msra.mxu0 0.0
    %958 = vmatprep.subr.mxu0 0.0
    %959 = vmatpush2.msra.mxu0 0.0
    %960 = vmatprep.subr.mxu0 0.0
    %961 = vmatpush2.msra.mxu0 0.0
    %962 = vmatprep.subr.mxu0 0.0
    %963 = vmatpush2.msra.mxu0 0.0
    %964 = vmatprep.subr.mxu0 0.0
    %965 = vmatpush2.msra.mxu0 0.0
    %966 = vmatprep.subr.mxu0 0.0
    %967 = vmatpush2.msra.mxu0 0.0
    %968 = vmatprep.subr.mxu0 0.0
    %969 = vmatpush2.msra.mxu0 0.0
    %970 = vmatprep.subr.mxu0 0.0
    %971 = vmatpush2.msra.mxu0 0.0
    %972 = vmatprep.subr.mxu0 0.0
    %973 = vmatpush2.msra.mxu0 0.0
    %974 = vmatprep.subr.mxu0 0.0
    %975 = vmatpush2.msra.mxu0 0.0
    %976 = vmatprep.mubr.f32.mxu0 0.0
    %977 = vmatmul.mubr.f32.gmra.mxu0 %v910
    %v978 = vpop.f32.mrf.mxu0
    %v979 = vadd.f32 %v606, %v978
    %v980 = vpop.f32.mrf.mxu0
    %981 = vdwg.mxu0
    %v982 = vxor.u32 %v979, 2147483648
    %v983 = vmul.f32 %v982, 1.442695
    %v984 = vpow.pop %v983
    %v985 = vadd.f32 %v984, 1.0
    %v986 = vrcp.pop %v985
    %v987 = vmul.f32 1.0, %v986
    %v988 = vtanh.pop %v979
    %v989 = vmul.f32 %v987, %v900
    %991 = vrot.lane.b32.xlu0 %v988, 64
    %v992 = vpop.permute.xlu0 %991
    %v994 = vmul.f32 %v987, %v992
    %996 = vrot.lane.b32.xlu0 %v994, 32
    %v997 = vpop.permute.xlu0 %996
    %v999 = vadd.f32 %v989, %v997
    %v1000 = vtanh.pop %v999
    %1002 = vrot.lane.b32.xlu0 %v1000, 64
    %v1003 = vpop.permute.xlu0 %1002
    %v1005 = vmul.f32 %v987, %v1003
    %1007 = vrot.lane.b32.xlu0 %v1005, 32
    %v1008 = vpop.permute.xlu0 %1007
    %v1009 = vsel %vm611, %v1008, 0
    %1011 = vmatprep.subr.mxu0 0.0
    %1012 = vmatpush1.msra.mxu0 0.0
    %1013 = vmatprep.subr.mxu0 0.0
    %1014 = vmatpush1.msra.mxu0 0.0
    %1015 = vmatprep.subr.mxu0 0.0
    %1016 = vmatpush1.msra.mxu0 0.0
    %1017 = vmatprep.subr.mxu0 0.0
    %1018 = vmatpush1.msra.mxu0 0.0
    %1019 = vmatprep.subr.mxu0 0.0
    %1020 = vmatpush1.msra.mxu0 0.0
    %1021 = vmatprep.subr.mxu0 0.0
    %1022 = vmatpush1.msra.mxu0 0.0
    %1023 = vmatprep.subr.mxu0 0.0
    %1024 = vmatpush1.msra.mxu0 0.0
    %1025 = vmatprep.subr.mxu0 0.0
    %1026 = vmatpush1.msra.mxu0 0.0
    %1027 = vmatprep.subr.mxu0 0.0
    %1028 = vmatpush1.msra.mxu0 0.0
    %1029 = vmatprep.subr.mxu0 0.0
    %1030 = vmatpush1.msra.mxu0 0.0
    %1031 = vmatprep.subr.mxu0 0.0
    %1032 = vmatpush1.msra.mxu0 0.0
    %1033 = vmatprep.subr.mxu0 0.0
    %1034 = vmatpush1.msra.mxu0 0.0
    %1035 = vmatprep.subr.mxu0 0.0
    %1036 = vmatpush1.msra.mxu0 %v460
    %1037 = vmatprep.subr.mxu0 0.0
    %1038 = vmatpush1.msra.mxu0 %v459
    %1039 = vmatprep.subr.mxu0 0.0
    %1040 = vmatpush1.msra.mxu0 %v458
    %1041 = vmatprep.subr.mxu0 0.0
    %1042 = vmatpush1.msra.mxu0 %v457
    %1043 = vmatprep.subr.mxu0 0.0
    %1044 = vmatpush2.msra.mxu0 0.0
    %1045 = vmatprep.subr.mxu0 0.0
    %1046 = vmatpush2.msra.mxu0 0.0
    %1047 = vmatprep.subr.mxu0 0.0
    %1048 = vmatpush2.msra.mxu0 0.0
    %1049 = vmatprep.subr.mxu0 0.0
    %1050 = vmatpush2.msra.mxu0 0.0
    %1051 = vmatprep.subr.mxu0 0.0
    %1052 = vmatpush2.msra.mxu0 0.0
    %1053 = vmatprep.subr.mxu0 0.0
    %1054 = vmatpush2.msra.mxu0 0.0
    %1055 = vmatprep.subr.mxu0 0.0
    %1056 = vmatpush2.msra.mxu0 0.0
    %1057 = vmatprep.subr.mxu0 0.0
    %1058 = vmatpush2.msra.mxu0 0.0
    %1059 = vmatprep.subr.mxu0 0.0
    %1060 = vmatpush2.msra.mxu0 0.0
    %1061 = vmatprep.subr.mxu0 0.0
    %1062 = vmatpush2.msra.mxu0 0.0
    %1063 = vmatprep.subr.mxu0 0.0
    %1064 = vmatpush2.msra.mxu0 0.0
    %1065 = vmatprep.subr.mxu0 0.0
    %1066 = vmatpush2.msra.mxu0 0.0
    %1067 = vmatprep.subr.mxu0 0.0
    %1068 = vmatpush2.msra.mxu0 0.0
    %1069 = vmatprep.subr.mxu0 0.0
    %1070 = vmatpush2.msra.mxu0 0.0
    %1071 = vmatprep.subr.mxu0 0.0
    %1072 = vmatpush2.msra.mxu0 0.0
    %1073 = vmatprep.subr.mxu0 0.0
    %1074 = vmatpush2.msra.mxu0 0.0
    %1075 = vmatprep.mubr.f32.mxu0 0.0
    %1076 = vmatmul.mubr.f32.gmra.mxu0 %v1009
    %v1077 = vpop.f32.mrf.mxu0
    %v1078 = vadd.f32 %v607, %v1077
    %v1079 = vpop.f32.mrf.mxu0
    %1080 = vdwg.mxu0
    %v1081 = vxor.u32 %v1078, 2147483648
    %v1082 = vmul.f32 %v1081, 1.442695
    %v1083 = vpow.pop %v1082
    %v1084 = vadd.f32 %v1083, 1.0
    %v1085 = vrcp.pop %v1084
    %v1086 = vmul.f32 1.0, %v1085
    %v1087 = vtanh.pop %v1078
    %v1088 = vmul.f32 %v1086, %v999
    %1090 = vrot.lane.b32.xlu0 %v1087, 64
    %v1091 = vpop.permute.xlu0 %1090
    %v1093 = vmul.f32 %v1086, %v1091
    %1095 = vrot.lane.b32.xlu0 %v1093, 32
    %v1096 = vpop.permute.xlu0 %1095
    %v1098 = vadd.f32 %v1088, %v1096
    %v1099 = vtanh.pop %v1098
    %1101 = vrot.lane.b32.xlu0 %v1099, 64
    %v1102 = vpop.permute.xlu0 %1101
    %v1104 = vmul.f32 %v1086, %v1102
    %1106 = vrot.lane.b32.xlu0 %v1104, 32
    %v1107 = vpop.permute.xlu0 %1106
    %v1108 = vsel %vm611, %v1107, 0
    %1110 = vmatprep.subr.mxu0 0.0
    %1111 = vmatpush1.msra.mxu0 0.0
    %1112 = vmatprep.subr.mxu0 0.0
    %1113 = vmatpush1.msra.mxu0 0.0
    %1114 = vmatprep.subr.mxu0 0.0
    %1115 = vmatpush1.msra.mxu0 0.0
    %1116 = vmatprep.subr.mxu0 0.0
    %1117 = vmatpush1.msra.mxu0 0.0
    %1118 = vmatprep.subr.mxu0 0.0
    %1119 = vmatpush1.msra.mxu0 0.0
    %1120 = vmatprep.subr.mxu0 0.0
    %1121 = vmatpush1.msra.mxu0 0.0
    %1122 = vmatprep.subr.mxu0 0.0
    %1123 = vmatpush1.msra.mxu0 0.0
    %1124 = vmatprep.subr.mxu0 0.0
    %1125 = vmatpush1.msra.mxu0 0.0
    %1126 = vmatprep.subr.mxu0 0.0
    %1127 = vmatpush1.msra.mxu0 0.0
    %1128 = vmatprep.subr.mxu0 0.0
    %1129 = vmatpush1.msra.mxu0 0.0
    %1130 = vmatprep.subr.mxu0 0.0
    %1131 = vmatpush1.msra.mxu0 0.0
    %1132 = vmatprep.subr.mxu0 0.0
    %1133 = vmatpush1.msra.mxu0 0.0
    %1134 = vmatprep.subr.mxu0 0.0
    %1135 = vmatpush1.msra.mxu0 %v460
    %1136 = vmatprep.subr.mxu0 0.0
    %1137 = vmatpush1.msra.mxu0 %v459
    %1138 = vmatprep.subr.mxu0 0.0
    %1139 = vmatpush1.msra.mxu0 %v458
    %1140 = vmatprep.subr.mxu0 0.0
    %1141 = vmatpush1.msra.mxu0 %v457
    %1142 = vmatprep.subr.mxu0 0.0
    %1143 = vmatpush2.msra.mxu0 0.0
    %1144 = vmatprep.subr.mxu0 0.0
    %1145 = vmatpush2.msra.mxu0 0.0
    %1146 = vmatprep.subr.mxu0 0.0
    %1147 = vmatpush2.msra.mxu0 0.0
    %1148 = vmatprep.subr.mxu0 0.0
    %1149 = vmatpush2.msra.mxu0 0.0
    %1150 = vmatprep.subr.mxu0 0.0
    %1151 = vmatpush2.msra.mxu0 0.0
    %1152 = vmatprep.subr.mxu0 0.0
    %1153 = vmatpush2.msra.mxu0 0.0
    %1154 = vmatprep.subr.mxu0 0.0
    %1155 = vmatpush2.msra.mxu0 0.0
    %1156 = vmatprep.subr.mxu0 0.0
    %1157 = vmatpush2.msra.mxu0 0.0
    %1158 = vmatprep.subr.mxu0 0.0
    %1159 = vmatpush2.msra.mxu0 0.0
    %1160 = vmatprep.subr.mxu0 0.0
    %1161 = vmatpush2.msra.mxu0 0.0
    %1162 = vmatprep.subr.mxu0 0.0
    %1163 = vmatpush2.msra.mxu0 0.0
    %1164 = vmatprep.subr.mxu0 0.0
    %1165 = vmatpush2.msra.mxu0 0.0
    %1166 = vmatprep.subr.mxu0 0.0
    %1167 = vmatpush2.msra.mxu0 0.0
    %1168 = vmatprep.subr.mxu0 0.0
    %1169 = vmatpush2.msra.mxu0 0.0
    %1170 = vmatprep.subr.mxu0 0.0
    %1171 = vmatpush2.msra.mxu0 0.0
    %1172 = vmatprep.subr.mxu0 0.0
    %1173 = vmatpush2.msra.mxu0 0.0
    %1174 = vmatprep.mubr.f32.mxu0 0.0
    %1175 = vmatmul.mubr.f32.gmra.mxu0 %v1108
    %v1176 = vpop.f32.mrf.mxu0
    %v1177 = vadd.f32 %v608, %v1176
    %v1178 = vpop.f32.mrf.mxu0
    %1179 = vdwg.mxu0
    %v1180 = vxor.u32 %v1177, 2147483648
    %v1181 = vmul.f32 %v1180, 1.442695
    %v1182 = vpow.pop %v1181
    %v1183 = vadd.f32 %v1182, 1.0
    %v1184 = vrcp.pop %v1183
    %v1185 = vmul.f32 1.0, %v1184
    %v1186 = vtanh.pop %v1177
    %v1187 = vmul.f32 %v1185, %v1098
    %1189 = vrot.lane.b32.xlu0 %v1186, 64
    %v1190 = vpop.permute.xlu0 %1189
    %v1192 = vmul.f32 %v1185, %v1190
    %1194 = vrot.lane.b32.xlu0 %v1192, 32
    %v1195 = vpop.permute.xlu0 %1194
    %v1197 = vadd.f32 %v1187, %v1195
    %v1198 = vtanh.pop %v1197
    %1200 = vrot.lane.b32.xlu0 %v1198, 64
    %v1201 = vpop.permute.xlu0 %1200
    %v1203 = vmul.f32 %v1185, %v1201
    %1205 = vrot.lane.b32.xlu0 %v1203, 32
    %v1206 = vpop.permute.xlu0 %1205
    %v1207 = vsel %vm611, %v1206, 0
    %1209 = vmatprep.subr.mxu0 0.0
    %1210 = vmatpush1.msra.mxu0 0.0
    %1211 = vmatprep.subr.mxu0 0.0
    %1212 = vmatpush1.msra.mxu0 0.0
    %1213 = vmatprep.subr.mxu0 0.0
    %1214 = vmatpush1.msra.mxu0 0.0
    %1215 = vmatprep.subr.mxu0 0.0
    %1216 = vmatpush1.msra.mxu0 0.0
    %1217 = vmatprep.subr.mxu0 0.0
    %1218 = vmatpush1.msra.mxu0 0.0
    %1219 = vmatprep.subr.mxu0 0.0
    %1220 = vmatpush1.msra.mxu0 0.0
    %1221 = vmatprep.subr.mxu0 0.0
    %1222 = vmatpush1.msra.mxu0 0.0
    %1223 = vmatprep.subr.mxu0 0.0
    %1224 = vmatpush1.msra.mxu0 0.0
    %1225 = vmatprep.subr.mxu0 0.0
    %1226 = vmatpush1.msra.mxu0 0.0
    %1227 = vmatprep.subr.mxu0 0.0
    %1228 = vmatpush1.msra.mxu0 0.0
    %1229 = vmatprep.subr.mxu0 0.0
    %1230 = vmatpush1.msra.mxu0 0.0
    %1231 = vmatprep.subr.mxu0 0.0
    %1232 = vmatpush1.msra.mxu0 0.0
    %1233 = vmatprep.subr.mxu0 0.0
    %1234 = vmatpush1.msra.mxu0 %v460
    %1235 = vmatprep.subr.mxu0 0.0
    %1236 = vmatpush1.msra.mxu0 %v459
    %1237 = vmatprep.subr.mxu0 0.0
    %1238 = vmatpush1.msra.mxu0 %v458
    %1239 = vmatprep.subr.mxu0 0.0
    %1240 = vmatpush1.msra.mxu0 %v457
    %1241 = vmatprep.subr.mxu0 0.0
    %1242 = vmatpush2.msra.mxu0 0.0
    %1243 = vmatprep.subr.mxu0 0.0
    %1244 = vmatpush2.msra.mxu0 0.0
    %1245 = vmatprep.subr.mxu0 0.0
    %1246 = vmatpush2.msra.mxu0 0.0
    %1247 = vmatprep.subr.mxu0 0.0
    %1248 = vmatpush2.msra.mxu0 0.0
    %1249 = vmatprep.subr.mxu0 0.0
    %1250 = vmatpush2.msra.mxu0 0.0
    %1251 = vmatprep.subr.mxu0 0.0
    %1252 = vmatpush2.msra.mxu0 0.0
    %1253 = vmatprep.subr.mxu0 0.0
    %1254 = vmatpush2.msra.mxu0 0.0
    %1255 = vmatprep.subr.mxu0 0.0
    %1256 = vmatpush2.msra.mxu0 0.0
    %1257 = vmatprep.subr.mxu0 0.0
    %1258 = vmatpush2.msra.mxu0 0.0
    %1259 = vmatprep.subr.mxu0 0.0
    %1260 = vmatpush2.msra.mxu0 0.0
    %1261 = vmatprep.subr.mxu0 0.0
    %1262 = vmatpush2.msra.mxu0 0.0
    %1263 = vmatprep.subr.mxu0 0.0
    %1264 = vmatpush2.msra.mxu0 0.0
    %1265 = vmatprep.subr.mxu0 0.0
    %1266 = vmatpush2.msra.mxu0 0.0
    %1267 = vmatprep.subr.mxu0 0.0
    %1268 = vmatpush2.msra.mxu0 0.0
    %1269 = vmatprep.subr.mxu0 0.0
    %1270 = vmatpush2.msra.mxu0 0.0
    %1271 = vmatprep.subr.mxu0 0.0
    %1272 = vmatpush2.msra.mxu0 0.0
    %1273 = vmatprep.mubr.f32.mxu0 0.0
    %1274 = vmatmul.mubr.f32.gmra.mxu0 %v1207
    %v1275 = vpop.f32.mrf.mxu0
    %v1276 = vadd.f32 %v609, %v1275
    %v1277 = vpop.f32.mrf.mxu0
    %1278 = vdwg.mxu0
    %v1279 = vxor.u32 %v1276, 2147483648
    %v1280 = vmul.f32 %v1279, 1.442695
    %v1281 = vpow.pop %v1280
    %v1282 = vadd.f32 %v1281, 1.0
    %v1283 = vrcp.pop %v1282
    %v1284 = vmul.f32 1.0, %v1283
    %v1285 = vtanh.pop %v1276
    %v1286 = vmul.f32 %v1284, %v1197
    %1288 = vrot.lane.b32.xlu0 %v1285, 64
    %v1289 = vpop.permute.xlu0 %1288
    %v1291 = vmul.f32 %v1284, %v1289
    %1293 = vrot.lane.b32.xlu0 %v1291, 32
    %v1294 = vpop.permute.xlu0 %1293
    %v1296 = vadd.f32 %v1286, %v1294
    %v1297 = vtanh.pop %v1296
    %1299 = vrot.lane.b32.xlu0 %v1297, 64
    %v1300 = vpop.permute.xlu0 %1299
    %v1302 = vmul.f32 %v1284, %v1300
    %1304 = vrot.lane.b32.xlu0 %v1302, 32
    %v1305 = vpop.permute.xlu0 %1304
    %v1306 = vsel %vm611, %v1305, 0
    %1308 = vmatprep.subr.mxu0 0.0
    %1309 = vmatpush1.msra.mxu0 0.0
    %1310 = vmatprep.subr.mxu0 0.0
    %1311 = vmatpush1.msra.mxu0 0.0
    %1312 = vmatprep.subr.mxu0 0.0
    %1313 = vmatpush1.msra.mxu0 0.0
    %1314 = vmatprep.subr.mxu0 0.0
    %1315 = vmatpush1.msra.mxu0 0.0
    %1316 = vmatprep.subr.mxu0 0.0
    %1317 = vmatpush1.msra.mxu0 0.0
    %1318 = vmatprep.subr.mxu0 0.0
    %1319 = vmatpush1.msra.mxu0 0.0
    %1320 = vmatprep.subr.mxu0 0.0
    %1321 = vmatpush1.msra.mxu0 0.0
    %1322 = vmatprep.subr.mxu0 0.0
    %1323 = vmatpush1.msra.mxu0 0.0
    %1324 = vmatprep.subr.mxu0 0.0
    %1325 = vmatpush1.msra.mxu0 0.0
    %1326 = vmatprep.subr.mxu0 0.0
    %1327 = vmatpush1.msra.mxu0 0.0
    %1328 = vmatprep.subr.mxu0 0.0
    %1329 = vmatpush1.msra.mxu0 0.0
    %1330 = vmatprep.subr.mxu0 0.0
    %1331 = vmatpush1.msra.mxu0 0.0
    %1332 = vmatprep.subr.mxu0 0.0
    %1333 = vmatpush1.msra.mxu0 %v460
    %1334 = vmatprep.subr.mxu0 0.0
    %1335 = vmatpush1.msra.mxu0 %v459
    %1336 = vmatprep.subr.mxu0 0.0
    %1337 = vmatpush1.msra.mxu0 %v458
    %1338 = vmatprep.subr.mxu0 0.0
    %1339 = vmatpush1.msra.mxu0 %v457
    %1340 = vmatprep.subr.mxu0 0.0
    %1341 = vmatpush2.msra.mxu0 0.0
    %1342 = vmatprep.subr.mxu0 0.0
    %1343 = vmatpush2.msra.mxu0 0.0
    %1344 = vmatprep.subr.mxu0 0.0
    %1345 = vmatpush2.msra.mxu0 0.0
    %1346 = vmatprep.subr.mxu0 0.0
    %1347 = vmatpush2.msra.mxu0 0.0
    %1348 = vmatprep.subr.mxu0 0.0
    %1349 = vmatpush2.msra.mxu0 0.0
    %1350 = vmatprep.subr.mxu0 0.0
    %1351 = vmatpush2.msra.mxu0 0.0
    %1352 = vmatprep.subr.mxu0 0.0
    %1353 = vmatpush2.msra.mxu0 0.0
    %1354 = vmatprep.subr.mxu0 0.0
    %1355 = vmatpush2.msra.mxu0 0.0
    %1356 = vmatprep.subr.mxu0 0.0
    %1357 = vmatpush2.msra.mxu0 0.0
    %1358 = vmatprep.subr.mxu0 0.0
    %1359 = vmatpush2.msra.mxu0 0.0
    %1360 = vmatprep.subr.mxu0 0.0
    %1361 = vmatpush2.msra.mxu0 0.0
    %1362 = vmatprep.subr.mxu0 0.0
    %1363 = vmatpush2.msra.mxu0 0.0
    %1364 = vmatprep.subr.mxu0 0.0
    %1365 = vmatpush2.msra.mxu0 0.0
    %1366 = vmatprep.subr.mxu0 0.0
    %1367 = vmatpush2.msra.mxu0 0.0
    %1368 = vmatprep.subr.mxu0 0.0
    %1369 = vmatpush2.msra.mxu0 0.0
    %1370 = vmatprep.subr.mxu0 0.0
    %1371 = vmatpush2.msra.mxu0 0.0
    %1372 = vmatprep.mubr.f32.mxu0 0.0
    %1373 = vmatmul.mubr.f32.gmra.mxu0 %v1306
    %v1374 = vpop.f32.mrf.mxu0
    %v1375 = vadd.f32 %v610, %v1374
    %v1376 = vpop.f32.mrf.mxu0
    %1377 = vdwg.mxu0
    %v1378 = vxor.u32 %v1375, 2147483648
    %v1379 = vmul.f32 %v1378, 1.442695
    %v1380 = vpow.pop %v1379
    %v1381 = vadd.f32 %v1380, 1.0
    %v1382 = vrcp.pop %v1381
    %v1383 = vmul.f32 1.0, %v1382
    %v1384 = vtanh.pop %v1375
    %v1385 = vmul.f32 %v1383, %v1296
    %1387 = vrot.lane.b32.xlu0 %v1384, 64
    %v1388 = vpop.permute.xlu0 %1387
    %v1390 = vmul.f32 %v1383, %v1388
    %1392 = vrot.lane.b32.xlu0 %v1390, 32
    %v1393 = vpop.permute.xlu0 %1392
    %v1395 = vadd.f32 %v1385, %v1393
    %v1396 = vtanh.pop %v1395
    %1398 = vrot.lane.b32.xlu0 %v1396, 64
    %v1399 = vpop.permute.xlu0 %1398
    %v1401 = vmul.f32 %v1383, %v1399
    %1404 = vrot.lane.b32.xlu0 %v1401, 32
    %v1405 = vpop.permute.xlu0 %1404
    %v1407 = vsel %vm469, %v711, %v1405
    %v1410 = vsel %vm469, %v810, %v1305
    %v1413 = vsel %vm469, %v909, %v1206
    %v1416 = vsel %vm469, %v1008, %v1107
    %v1417 = vsel %vm469, %v1107, %v1008
    %v1418 = vsel %vm469, %v1206, %v909
    %v1419 = vsel %vm469, %v1305, %v810
    %v1420 = vsel %vm469, %v1405, %v711
    %v1421 = vlaneseq
    %v1422 = vshrl.u32 %v1421, 7
    %v1423 = vsub.s32 0, %v1422
    %v1424 = vrot.slane %v466, %v1423
    %v1426 = vsel %vm611, %v1407, 0
    %v1429 = vsel %vm611, %v1410, 0
    %v1432 = vsel %vm611, %v1413, 0
    %v1435 = vsel %vm611, %v1416, 0
    %v1438 = vsel %vm611, %v1417, 0
    %v1441 = vsel %vm611, %v1418, 0
    %v1444 = vsel %vm611, %v1419, 0
    %v1447 = vsel %vm611, %v1420, 0
    %1449 = vmatprep.subr.mxu0 0.0
    %1450 = vmatpush1.msra.mxu0 0.0
    %1451 = vmatprep.subr.mxu0 0.0
    %1452 = vmatpush1.msra.mxu0 0.0
    %1453 = vmatprep.subr.mxu0 0.0
    %1454 = vmatpush1.msra.mxu0 0.0
    %1455 = vmatprep.subr.mxu0 0.0
    %1456 = vmatpush1.msra.mxu0 0.0
    %1457 = vmatprep.subr.mxu0 0.0
    %1458 = vmatpush1.msra.mxu0 0.0
    %1459 = vmatprep.subr.mxu0 0.0
    %1460 = vmatpush1.msra.mxu0 0.0
    %1461 = vmatprep.subr.mxu0 0.0
    %1462 = vmatpush1.msra.mxu0 0.0
    %1463 = vmatprep.subr.mxu0 0.0
    %1464 = vmatpush1.msra.mxu0 0.0
    %1465 = vmatprep.subr.mxu0 0.0
    %1466 = vmatpush1.msra.mxu0 0.0
    %1467 = vmatprep.subr.mxu0 0.0
    %1468 = vmatpush1.msra.mxu0 0.0
    %1469 = vmatprep.subr.mxu0 0.0
    %1470 = vmatpush1.msra.mxu0 0.0
    %1471 = vmatprep.subr.mxu0 0.0
    %1472 = vmatpush1.msra.mxu0 0.0
    %1473 = vmatprep.subr.mxu0 0.0
    %1474 = vmatpush1.msra.mxu0 %v456
    %1475 = vmatprep.subr.mxu0 0.0
    %1476 = vmatpush1.msra.mxu0 %v455
    %1477 = vmatprep.subr.mxu0 0.0
    %1478 = vmatpush1.msra.mxu0 %v454
    %1479 = vmatprep.subr.mxu0 0.0
    %1480 = vmatpush1.msra.mxu0 %v453
    %1481 = vmatprep.subr.mxu0 0.0
    %1482 = vmatpush2.msra.mxu0 0.0
    %1483 = vmatprep.subr.mxu0 0.0
    %1484 = vmatpush2.msra.mxu0 0.0
    %1485 = vmatprep.subr.mxu0 0.0
    %1486 = vmatpush2.msra.mxu0 0.0
    %1487 = vmatprep.subr.mxu0 0.0
    %1488 = vmatpush2.msra.mxu0 0.0
    %1489 = vmatprep.subr.mxu0 0.0
    %1490 = vmatpush2.msra.mxu0 0.0
    %1491 = vmatprep.subr.mxu0 0.0
    %1492 = vmatpush2.msra.mxu0 0.0
    %1493 = vmatprep.subr.mxu0 0.0
    %1494 = vmatpush2.msra.mxu0 0.0
    %1495 = vmatprep.subr.mxu0 0.0
    %1496 = vmatpush2.msra.mxu0 0.0
    %1497 = vmatprep.subr.mxu0 0.0
    %1498 = vmatpush2.msra.mxu0 0.0
    %1499 = vmatprep.subr.mxu0 0.0
    %1500 = vmatpush2.msra.mxu0 0.0
    %1501 = vmatprep.subr.mxu0 0.0
    %1502 = vmatpush2.msra.mxu0 0.0
    %1503 = vmatprep.subr.mxu0 0.0
    %1504 = vmatpush2.msra.mxu0 0.0
    %1505 = vmatprep.subr.mxu0 0.0
    %1506 = vmatpush2.msra.mxu0 0.0
    %1507 = vmatprep.subr.mxu0 0.0
    %1508 = vmatpush2.msra.mxu0 0.0
    %1509 = vmatprep.subr.mxu0 0.0
    %1510 = vmatpush2.msra.mxu0 0.0
    %1511 = vmatprep.subr.mxu0 0.0
    %1512 = vmatpush2.msra.mxu0 0.0
    %1513 = vmatprep.mubr.f32.mxu0 0.0
    %1514 = vmatmul.mubr.f32.gmra.mxu0 %v1426
    %v1515 = vpop.f32.mrf.mxu0
    %v1516 = vadd.f32 %v1424, %v1515
    %v1517 = vpop.f32.mrf.mxu0
    %1518 = vmatprep.mubr.f32.mxu0 0.0
    %1519 = vmatmul.mubr.f32.gmra.mxu0 %v1429
    %v1520 = vpop.f32.mrf.mxu0
    %v1521 = vadd.f32 %v1424, %v1520
    %v1522 = vpop.f32.mrf.mxu0
    %1523 = vmatprep.mubr.f32.mxu0 0.0
    %1524 = vmatmul.mubr.f32.gmra.mxu0 %v1432
    %v1525 = vpop.f32.mrf.mxu0
    %v1526 = vadd.f32 %v1424, %v1525
    %v1527 = vpop.f32.mrf.mxu0
    %1528 = vmatprep.mubr.f32.mxu0 0.0
    %1529 = vmatmul.mubr.f32.gmra.mxu0 %v1435
    %v1530 = vpop.f32.mrf.mxu0
    %v1531 = vadd.f32 %v1424, %v1530
    %v1532 = vpop.f32.mrf.mxu0
    %1533 = vmatprep.mubr.f32.mxu0 0.0
    %1534 = vmatmul.mubr.f32.gmra.mxu0 %v1438
    %v1535 = vpop.f32.mrf.mxu0
    %v1536 = vadd.f32 %v1424, %v1535
    %v1537 = vpop.f32.mrf.mxu0
    %1538 = vmatprep.mubr.f32.mxu0 0.0
    %1539 = vmatmul.mubr.f32.gmra.mxu0 %v1441
    %v1540 = vpop.f32.mrf.mxu0
    %v1541 = vadd.f32 %v1424, %v1540
    %v1542 = vpop.f32.mrf.mxu0
    %1543 = vmatprep.mubr.f32.mxu0 0.0
    %1544 = vmatmul.mubr.f32.gmra.mxu0 %v1444
    %v1545 = vpop.f32.mrf.mxu0
    %v1546 = vadd.f32 %v1424, %v1545
    %v1547 = vpop.f32.mrf.mxu0
    %1548 = vmatprep.mubr.f32.mxu0 0.0
    %1549 = vmatmul.mubr.f32.gmra.mxu0 %v1447
    %v1550 = vpop.f32.mrf.mxu0
    %v1551 = vadd.f32 %v1424, %v1550
    %v1552 = vpop.f32.mrf.mxu0
    %1553 = vdwg.mxu0
    %v1554 = vsel %vm468, %v1516, %v1551
    %v1555 = vsel %vm468, %v1521, %v1546
    %v1556 = vsel %vm468, %v1526, %v1541
    %v1557 = vsel %vm468, %v1531, %v1536
    %v1558 = vsel %vm468, %v1536, %v1531
    %v1559 = vsel %vm468, %v1541, %v1526
    %v1560 = vsel %vm468, %v1546, %v1521
    %v1561 = vsel %vm468, %v1551, %v1516
    %1562 = vmatprep.subr.mxu0 0.0
    %1563 = vmatpush1.msra.mxu0 0.0
    %1564 = vmatprep.subr.mxu0 0.0
    %1565 = vmatpush1.msra.mxu0 0.0
    %1566 = vmatprep.subr.mxu0 0.0
    %1567 = vmatpush1.msra.mxu0 0.0
    %1568 = vmatprep.subr.mxu0 0.0
    %1569 = vmatpush1.msra.mxu0 0.0
    %1570 = vmatprep.subr.mxu0 0.0
    %1571 = vmatpush1.msra.mxu0 0.0
    %1572 = vmatprep.subr.mxu0 0.0
    %1573 = vmatpush1.msra.mxu0 0.0
    %1574 = vmatprep.subr.mxu0 0.0
    %1575 = vmatpush1.msra.mxu0 0.0
    %1576 = vmatprep.subr.mxu0 0.0
    %1577 = vmatpush1.msra.mxu0 0.0
    %1578 = vmatprep.subr.mxu0 0.0
    %1579 = vmatpush1.msra.mxu0 0.0
    %1580 = vmatprep.subr.mxu0 0.0
    %1581 = vmatpush1.msra.mxu0 0.0
    %1582 = vmatprep.subr.mxu0 0.0
    %1583 = vmatpush1.msra.mxu0 0.0
    %1584 = vmatprep.subr.mxu0 0.0
    %1585 = vmatpush1.msra.mxu0 0.0
    %1586 = vmatprep.subr.mxu0 0.0
    %1587 = vmatpush1.msra.mxu0 %v464
    %1588 = vmatprep.subr.mxu0 0.0
    %1589 = vmatpush1.msra.mxu0 %v463
    %1590 = vmatprep.subr.mxu0 0.0
    %1591 = vmatpush1.msra.mxu0 %v462
    %1592 = vmatprep.subr.mxu0 0.0
    %1593 = vmatpush1.msra.mxu0 %v461
    %1594 = vmatprep.subr.mxu0 0.0
    %1595 = vmatpush2.msra.mxu0 0.0
    %1596 = vmatprep.subr.mxu0 0.0
    %1597 = vmatpush2.msra.mxu0 0.0
    %1598 = vmatprep.subr.mxu0 0.0
    %1599 = vmatpush2.msra.mxu0 0.0
    %1600 = vmatprep.subr.mxu0 0.0
    %1601 = vmatpush2.msra.mxu0 0.0
    %1602 = vmatprep.subr.mxu0 0.0
    %1603 = vmatpush2.msra.mxu0 0.0
    %1604 = vmatprep.subr.mxu0 0.0
    %1605 = vmatpush2.msra.mxu0 0.0
    %1606 = vmatprep.subr.mxu0 0.0
    %1607 = vmatpush2.msra.mxu0 0.0
    %1608 = vmatprep.subr.mxu0 0.0
    %1609 = vmatpush2.msra.mxu0 0.0
    %1610 = vmatprep.subr.mxu0 0.0
    %1611 = vmatpush2.msra.mxu0 0.0
    %1612 = vmatprep.subr.mxu0 0.0
    %1613 = vmatpush2.msra.mxu0 0.0
    %1614 = vmatprep.subr.mxu0 0.0
    %1615 = vmatpush2.msra.mxu0 0.0
    %1616 = vmatprep.subr.mxu0 0.0
    %1617 = vmatpush2.msra.mxu0 0.0
    %1618 = vmatprep.subr.mxu0 0.0
    %1619 = vmatpush2.msra.mxu0 0.0
    %1620 = vmatprep.subr.mxu0 0.0
    %1621 = vmatpush2.msra.mxu0 0.0
    %1622 = vmatprep.subr.mxu0 0.0
    %1623 = vmatpush2.msra.mxu0 0.0
    %1624 = vmatprep.subr.mxu0 0.0
    %1625 = vmatpush2.msra.mxu0 0.0
    %1626 = vmatprep.mubr.f32.mxu0 0.0
    %1627 = vmatmul.mubr.f32.gmra.mxu0 %v613
    %v1628 = vpop.f32.mrf.mxu0
    %v1629 = vadd.f32 %v1554, %v1628
    %v1630 = vpop.f32.mrf.mxu0
    %1631 = vdwg.mxu0
    %v1632 = vxor.u32 %v1629, 2147483648
    %v1633 = vmul.f32 %v1632, 1.442695
    %v1634 = vpow.pop %v1633
    %v1635 = vadd.f32 %v1634, 1.0
    %v1636 = vrcp.pop %v1635
    %v1637 = vmul.f32 1.0, %v1636
    %v1638 = vtanh.pop %v1629
    %v1639 = vmul.f32 %v1637, 0.0
    %1641 = vrot.lane.b32.xlu0 %v1638, 64
    %v1642 = vpop.permute.xlu0 %1641
    %v1644 = vmul.f32 %v1637, %v1642
    %1646 = vrot.lane.b32.xlu0 %v1644, 32
    %v1647 = vpop.permute.xlu0 %1646
    %v1649 = vadd.f32 %v1639, %v1647
    %v1650 = vtanh.pop %v1649
    %1652 = vrot.lane.b32.xlu0 %v1650, 64
    %v1653 = vpop.permute.xlu0 %1652
    %v1655 = vmul.f32 %v1637, %v1653
    %1657 = vrot.lane.b32.xlu0 %v1655, 32
    %v1658 = vpop.permute.xlu0 %1657
    %v1659 = vsel %vm611, %v1658, 0
    %1661 = vmatprep.subr.mxu0 0.0
    %1662 = vmatpush1.msra.mxu0 0.0
    %1663 = vmatprep.subr.mxu0 0.0
    %1664 = vmatpush1.msra.mxu0 0.0
    %1665 = vmatprep.subr.mxu0 0.0
    %1666 = vmatpush1.msra.mxu0 0.0
    %1667 = vmatprep.subr.mxu0 0.0
    %1668 = vmatpush1.msra.mxu0 0.0
    %1669 = vmatprep.subr.mxu0 0.0
    %1670 = vmatpush1.msra.mxu0 0.0
    %1671 = vmatprep.subr.mxu0 0.0
    %1672 = vmatpush1.msra.mxu0 0.0
    %1673 = vmatprep.subr.mxu0 0.0
    %1674 = vmatpush1.msra.mxu0 0.0
    %1675 = vmatprep.subr.mxu0 0.0
    %1676 = vmatpush1.msra.mxu0 0.0
    %1677 = vmatprep.subr.mxu0 0.0
    %1678 = vmatpush1.msra.mxu0 0.0
    %1679 = vmatprep.subr.mxu0 0.0
    %1680 = vmatpush1.msra.mxu0 0.0
    %1681 = vmatprep.subr.mxu0 0.0
    %1682 = vmatpush1.msra.mxu0 0.0
    %1683 = vmatprep.subr.mxu0 0.0
    %1684 = vmatpush1.msra.mxu0 0.0
    %1685 = vmatprep.subr.mxu0 0.0
    %1686 = vmatpush1.msra.mxu0 %v464
    %1687 = vmatprep.subr.mxu0 0.0
    %1688 = vmatpush1.msra.mxu0 %v463
    %1689 = vmatprep.subr.mxu0 0.0
    %1690 = vmatpush1.msra.mxu0 %v462
    %1691 = vmatprep.subr.mxu0 0.0
    %1692 = vmatpush1.msra.mxu0 %v461
    %1693 = vmatprep.subr.mxu0 0.0
    %1694 = vmatpush2.msra.mxu0 0.0
    %1695 = vmatprep.subr.mxu0 0.0
    %1696 = vmatpush2.msra.mxu0 0.0
    %1697 = vmatprep.subr.mxu0 0.0
    %1698 = vmatpush2.msra.mxu0 0.0
    %1699 = vmatprep.subr.mxu0 0.0
    %1700 = vmatpush2.msra.mxu0 0.0
    %1701 = vmatprep.subr.mxu0 0.0
    %1702 = vmatpush2.msra.mxu0 0.0
    %1703 = vmatprep.subr.mxu0 0.0
    %1704 = vmatpush2.msra.mxu0 0.0
    %1705 = vmatprep.subr.mxu0 0.0
    %1706 = vmatpush2.msra.mxu0 0.0
    %1707 = vmatprep.subr.mxu0 0.0
    %1708 = vmatpush2.msra.mxu0 0.0
    %1709 = vmatprep.subr.mxu0 0.0
    %1710 = vmatpush2.msra.mxu0 0.0
    %1711 = vmatprep.subr.mxu0 0.0
    %1712 = vmatpush2.msra.mxu0 0.0
    %1713 = vmatprep.subr.mxu0 0.0
    %1714 = vmatpush2.msra.mxu0 0.0
    %1715 = vmatprep.subr.mxu0 0.0
    %1716 = vmatpush2.msra.mxu0 0.0
    %1717 = vmatprep.subr.mxu0 0.0
    %1718 = vmatpush2.msra.mxu0 0.0
    %1719 = vmatprep.subr.mxu0 0.0
    %1720 = vmatpush2.msra.mxu0 0.0
    %1721 = vmatprep.subr.mxu0 0.0
    %1722 = vmatpush2.msra.mxu0 0.0
    %1723 = vmatprep.subr.mxu0 0.0
    %1724 = vmatpush2.msra.mxu0 0.0
    %1725 = vmatprep.mubr.f32.mxu0 0.0
    %1726 = vmatmul.mubr.f32.gmra.mxu0 %v1659
    %v1727 = vpop.f32.mrf.mxu0
    %v1728 = vadd.f32 %v1555, %v1727
    %v1729 = vpop.f32.mrf.mxu0
    %1730 = vdwg.mxu0
    %v1731 = vxor.u32 %v1728, 2147483648
    %v1732 = vmul.f32 %v1731, 1.442695
    %v1733 = vpow.pop %v1732
    %v1734 = vadd.f32 %v1733, 1.0
    %v1735 = vrcp.pop %v1734
    %v1736 = vmul.f32 1.0, %v1735
    %v1737 = vtanh.pop %v1728
    %v1738 = vmul.f32 %v1736, %v1649
    %1740 = vrot.lane.b32.xlu0 %v1737, 64
    %v1741 = vpop.permute.xlu0 %1740
    %v1743 = vmul.f32 %v1736, %v1741
    %1745 = vrot.lane.b32.xlu0 %v1743, 32
    %v1746 = vpop.permute.xlu0 %1745
    %v1748 = vadd.f32 %v1738, %v1746
    %v1749 = vtanh.pop %v1748
    %1751 = vrot.lane.b32.xlu0 %v1749, 64
    %v1752 = vpop.permute.xlu0 %1751
    %v1754 = vmul.f32 %v1736, %v1752
    %1756 = vrot.lane.b32.xlu0 %v1754, 32
    %v1757 = vpop.permute.xlu0 %1756
    %v1758 = vsel %vm611, %v1757, 0
    %1760 = vmatprep.subr.mxu0 0.0
    %1761 = vmatpush1.msra.mxu0 0.0
    %1762 = vmatprep.subr.mxu0 0.0
    %1763 = vmatpush1.msra.mxu0 0.0
    %1764 = vmatprep.subr.mxu0 0.0
    %1765 = vmatpush1.msra.mxu0 0.0
    %1766 = vmatprep.subr.mxu0 0.0
    %1767 = vmatpush1.msra.mxu0 0.0
    %1768 = vmatprep.subr.mxu0 0.0
    %1769 = vmatpush1.msra.mxu0 0.0
    %1770 = vmatprep.subr.mxu0 0.0
    %1771 = vmatpush1.msra.mxu0 0.0
    %1772 = vmatprep.subr.mxu0 0.0
    %1773 = vmatpush1.msra.mxu0 0.0
    %1774 = vmatprep.subr.mxu0 0.0
    %1775 = vmatpush1.msra.mxu0 0.0
    %1776 = vmatprep.subr.mxu0 0.0
    %1777 = vmatpush1.msra.mxu0 0.0
    %1778 = vmatprep.subr.mxu0 0.0
    %1779 = vmatpush1.msra.mxu0 0.0
    %1780 = vmatprep.subr.mxu0 0.0
    %1781 = vmatpush1.msra.mxu0 0.0
    %1782 = vmatprep.subr.mxu0 0.0
    %1783 = vmatpush1.msra.mxu0 0.0
    %1784 = vmatprep.subr.mxu0 0.0
    %1785 = vmatpush1.msra.mxu0 %v464
    %1786 = vmatprep.subr.mxu0 0.0
    %1787 = vmatpush1.msra.mxu0 %v463
    %1788 = vmatprep.subr.mxu0 0.0
    %1789 = vmatpush1.msra.mxu0 %v462
    %1790 = vmatprep.subr.mxu0 0.0
    %1791 = vmatpush1.msra.mxu0 %v461
    %1792 = vmatprep.subr.mxu0 0.0
    %1793 = vmatpush2.msra.mxu0 0.0
    %1794 = vmatprep.subr.mxu0 0.0
    %1795 = vmatpush2.msra.mxu0 0.0
    %1796 = vmatprep.subr.mxu0 0.0
    %1797 = vmatpush2.msra.mxu0 0.0
    %1798 = vmatprep.subr.mxu0 0.0
    %1799 = vmatpush2.msra.mxu0 0.0
    %1800 = vmatprep.subr.mxu0 0.0
    %1801 = vmatpush2.msra.mxu0 0.0
    %1802 = vmatprep.subr.mxu0 0.0
    %1803 = vmatpush2.msra.mxu0 0.0
    %1804 = vmatprep.subr.mxu0 0.0
    %1805 = vmatpush2.msra.mxu0 0.0
    %1806 = vmatprep.subr.mxu0 0.0
    %1807 = vmatpush2.msra.mxu0 0.0
    %1808 = vmatprep.subr.mxu0 0.0
    %1809 = vmatpush2.msra.mxu0 0.0
    %1810 = vmatprep.subr.mxu0 0.0
    %1811 = vmatpush2.msra.mxu0 0.0
    %1812 = vmatprep.subr.mxu0 0.0
    %1813 = vmatpush2.msra.mxu0 0.0
    %1814 = vmatprep.subr.mxu0 0.0
    %1815 = vmatpush2.msra.mxu0 0.0
    %1816 = vmatprep.subr.mxu0 0.0
    %1817 = vmatpush2.msra.mxu0 0.0
    %1818 = vmatprep.subr.mxu0 0.0
    %1819 = vmatpush2.msra.mxu0 0.0
    %1820 = vmatprep.subr.mxu0 0.0
    %1821 = vmatpush2.msra.mxu0 0.0
    %1822 = vmatprep.subr.mxu0 0.0
    %1823 = vmatpush2.msra.mxu0 0.0
    %1824 = vmatprep.mubr.f32.mxu0 0.0
    %1825 = vmatmul.mubr.f32.gmra.mxu0 %v1758
    %v1826 = vpop.f32.mrf.mxu0
    %v1827 = vadd.f32 %v1556, %v1826
    %v1828 = vpop.f32.mrf.mxu0
    %1829 = vdwg.mxu0
    %v1830 = vxor.u32 %v1827, 2147483648
    %v1831 = vmul.f32 %v1830, 1.442695
    %v1832 = vpow.pop %v1831
    %v1833 = vadd.f32 %v1832, 1.0
    %v1834 = vrcp.pop %v1833
    %v1835 = vmul.f32 1.0, %v1834
    %v1836 = vtanh.pop %v1827
    %v1837 = vmul.f32 %v1835, %v1748
    %1839 = vrot.lane.b32.xlu0 %v1836, 64
    %v1840 = vpop.permute.xlu0 %1839
    %v1842 = vmul.f32 %v1835, %v1840
    %1844 = vrot.lane.b32.xlu0 %v1842, 32
    %v1845 = vpop.permute.xlu0 %1844
    %v1847 = vadd.f32 %v1837, %v1845
    %v1848 = vtanh.pop %v1847
    %1850 = vrot.lane.b32.xlu0 %v1848, 64
    %v1851 = vpop.permute.xlu0 %1850
    %v1853 = vmul.f32 %v1835, %v1851
    %1855 = vrot.lane.b32.xlu0 %v1853, 32
    %v1856 = vpop.permute.xlu0 %1855
    %v1857 = vsel %vm611, %v1856, 0
    %1859 = vmatprep.subr.mxu0 0.0
    %1860 = vmatpush1.msra.mxu0 0.0
    %1861 = vmatprep.subr.mxu0 0.0
    %1862 = vmatpush1.msra.mxu0 0.0
    %1863 = vmatprep.subr.mxu0 0.0
    %1864 = vmatpush1.msra.mxu0 0.0
    %1865 = vmatprep.subr.mxu0 0.0
    %1866 = vmatpush1.msra.mxu0 0.0
    %1867 = vmatprep.subr.mxu0 0.0
    %1868 = vmatpush1.msra.mxu0 0.0
    %1869 = vmatprep.subr.mxu0 0.0
    %1870 = vmatpush1.msra.mxu0 0.0
    %1871 = vmatprep.subr.mxu0 0.0
    %1872 = vmatpush1.msra.mxu0 0.0
    %1873 = vmatprep.subr.mxu0 0.0
    %1874 = vmatpush1.msra.mxu0 0.0
    %1875 = vmatprep.subr.mxu0 0.0
    %1876 = vmatpush1.msra.mxu0 0.0
    %1877 = vmatprep.subr.mxu0 0.0
    %1878 = vmatpush1.msra.mxu0 0.0
    %1879 = vmatprep.subr.mxu0 0.0
    %1880 = vmatpush1.msra.mxu0 0.0
    %1881 = vmatprep.subr.mxu0 0.0
    %1882 = vmatpush1.msra.mxu0 0.0
    %1883 = vmatprep.subr.mxu0 0.0
    %1884 = vmatpush1.msra.mxu0 %v464
    %1885 = vmatprep.subr.mxu0 0.0
    %1886 = vmatpush1.msra.mxu0 %v463
    %1887 = vmatprep.subr.mxu0 0.0
    %1888 = vmatpush1.msra.mxu0 %v462
    %1889 = vmatprep.subr.mxu0 0.0
    %1890 = vmatpush1.msra.mxu0 %v461
    %1891 = vmatprep.subr.mxu0 0.0
    %1892 = vmatpush2.msra.mxu0 0.0
    %1893 = vmatprep.subr.mxu0 0.0
    %1894 = vmatpush2.msra.mxu0 0.0
    %1895 = vmatprep.subr.mxu0 0.0
    %1896 = vmatpush2.msra.mxu0 0.0
    %1897 = vmatprep.subr.mxu0 0.0
    %1898 = vmatpush2.msra.mxu0 0.0
    %1899 = vmatprep.subr.mxu0 0.0
    %1900 = vmatpush2.msra.mxu0 0.0
    %1901 = vmatprep.subr.mxu0 0.0
    %1902 = vmatpush2.msra.mxu0 0.0
    %1903 = vmatprep.subr.mxu0 0.0
    %1904 = vmatpush2.msra.mxu0 0.0
    %1905 = vmatprep.subr.mxu0 0.0
    %1906 = vmatpush2.msra.mxu0 0.0
    %1907 = vmatprep.subr.mxu0 0.0
    %1908 = vmatpush2.msra.mxu0 0.0
    %1909 = vmatprep.subr.mxu0 0.0
    %1910 = vmatpush2.msra.mxu0 0.0
    %1911 = vmatprep.subr.mxu0 0.0
    %1912 = vmatpush2.msra.mxu0 0.0
    %1913 = vmatprep.subr.mxu0 0.0
    %1914 = vmatpush2.msra.mxu0 0.0
    %1915 = vmatprep.subr.mxu0 0.0
    %1916 = vmatpush2.msra.mxu0 0.0
    %1917 = vmatprep.subr.mxu0 0.0
    %1918 = vmatpush2.msra.mxu0 0.0
    %1919 = vmatprep.subr.mxu0 0.0
    %1920 = vmatpush2.msra.mxu0 0.0
    %1921 = vmatprep.subr.mxu0 0.0
    %1922 = vmatpush2.msra.mxu0 0.0
    %1923 = vmatprep.mubr.f32.mxu0 0.0
    %1924 = vmatmul.mubr.f32.gmra.mxu0 %v1857
    %v1925 = vpop.f32.mrf.mxu0
    %v1926 = vadd.f32 %v1557, %v1925
    %v1927 = vpop.f32.mrf.mxu0
    %1928 = vdwg.mxu0
    %v1929 = vxor.u32 %v1926, 2147483648
    %v1930 = vmul.f32 %v1929, 1.442695
    %v1931 = vpow.pop %v1930
    %v1932 = vadd.f32 %v1931, 1.0
    %v1933 = vrcp.pop %v1932
    %v1934 = vmul.f32 1.0, %v1933
    %v1935 = vtanh.pop %v1926
    %v1936 = vmul.f32 %v1934, %v1847
    %1938 = vrot.lane.b32.xlu0 %v1935, 64
    %v1939 = vpop.permute.xlu0 %1938
    %v1941 = vmul.f32 %v1934, %v1939
    %1943 = vrot.lane.b32.xlu0 %v1941, 32
    %v1944 = vpop.permute.xlu0 %1943
    %v1946 = vadd.f32 %v1936, %v1944
    %v1947 = vtanh.pop %v1946
    %1949 = vrot.lane.b32.xlu0 %v1947, 64
    %v1950 = vpop.permute.xlu0 %1949
    %v1952 = vmul.f32 %v1934, %v1950
    %1954 = vrot.lane.b32.xlu0 %v1952, 32
    %v1955 = vpop.permute.xlu0 %1954
    %v1956 = vsel %vm611, %v1955, 0
    %1958 = vmatprep.subr.mxu0 0.0
    %1959 = vmatpush1.msra.mxu0 0.0
    %1960 = vmatprep.subr.mxu0 0.0
    %1961 = vmatpush1.msra.mxu0 0.0
    %1962 = vmatprep.subr.mxu0 0.0
    %1963 = vmatpush1.msra.mxu0 0.0
    %1964 = vmatprep.subr.mxu0 0.0
    %1965 = vmatpush1.msra.mxu0 0.0
    %1966 = vmatprep.subr.mxu0 0.0
    %1967 = vmatpush1.msra.mxu0 0.0
    %1968 = vmatprep.subr.mxu0 0.0
    %1969 = vmatpush1.msra.mxu0 0.0
    %1970 = vmatprep.subr.mxu0 0.0
    %1971 = vmatpush1.msra.mxu0 0.0
    %1972 = vmatprep.subr.mxu0 0.0
    %1973 = vmatpush1.msra.mxu0 0.0
    %1974 = vmatprep.subr.mxu0 0.0
    %1975 = vmatpush1.msra.mxu0 0.0
    %1976 = vmatprep.subr.mxu0 0.0
    %1977 = vmatpush1.msra.mxu0 0.0
    %1978 = vmatprep.subr.mxu0 0.0
    %1979 = vmatpush1.msra.mxu0 0.0
    %1980 = vmatprep.subr.mxu0 0.0
    %1981 = vmatpush1.msra.mxu0 0.0
    %1982 = vmatprep.subr.mxu0 0.0
    %1983 = vmatpush1.msra.mxu0 %v464
    %1984 = vmatprep.subr.mxu0 0.0
    %1985 = vmatpush1.msra.mxu0 %v463
    %1986 = vmatprep.subr.mxu0 0.0
    %1987 = vmatpush1.msra.mxu0 %v462
    %1988 = vmatprep.subr.mxu0 0.0
    %1989 = vmatpush1.msra.mxu0 %v461
    %1990 = vmatprep.subr.mxu0 0.0
    %1991 = vmatpush2.msra.mxu0 0.0
    %1992 = vmatprep.subr.mxu0 0.0
    %1993 = vmatpush2.msra.mxu0 0.0
    %1994 = vmatprep.subr.mxu0 0.0
    %1995 = vmatpush2.msra.mxu0 0.0
    %1996 = vmatprep.subr.mxu0 0.0
    %1997 = vmatpush2.msra.mxu0 0.0
    %1998 = vmatprep.subr.mxu0 0.0
    %1999 = vmatpush2.msra.mxu0 0.0
    %2000 = vmatprep.subr.mxu0 0.0
    %2001 = vmatpush2.msra.mxu0 0.0
    %2002 = vmatprep.subr.mxu0 0.0
    %2003 = vmatpush2.msra.mxu0 0.0
    %2004 = vmatprep.subr.mxu0 0.0
    %2005 = vmatpush2.msra.mxu0 0.0
    %2006 = vmatprep.subr.mxu0 0.0
    %2007 = vmatpush2.msra.mxu0 0.0
    %2008 = vmatprep.subr.mxu0 0.0
    %2009 = vmatpush2.msra.mxu0 0.0
    %2010 = vmatprep.subr.mxu0 0.0
    %2011 = vmatpush2.msra.mxu0 0.0
    %2012 = vmatprep.subr.mxu0 0.0
    %2013 = vmatpush2.msra.mxu0 0.0
    %2014 = vmatprep.subr.mxu0 0.0
    %2015 = vmatpush2.msra.mxu0 0.0
    %2016 = vmatprep.subr.mxu0 0.0
    %2017 = vmatpush2.msra.mxu0 0.0
    %2018 = vmatprep.subr.mxu0 0.0
    %2019 = vmatpush2.msra.mxu0 0.0
    %2020 = vmatprep.subr.mxu0 0.0
    %2021 = vmatpush2.msra.mxu0 0.0
    %2022 = vmatprep.mubr.f32.mxu0 0.0
    %2023 = vmatmul.mubr.f32.gmra.mxu0 %v1956
    %v2024 = vpop.f32.mrf.mxu0
    %v2025 = vadd.f32 %v1558, %v2024
    %v2026 = vpop.f32.mrf.mxu0
    %2027 = vdwg.mxu0
    %v2028 = vxor.u32 %v2025, 2147483648
    %v2029 = vmul.f32 %v2028, 1.442695
    %v2030 = vpow.pop %v2029
    %v2031 = vadd.f32 %v2030, 1.0
    %v2032 = vrcp.pop %v2031
    %v2033 = vmul.f32 1.0, %v2032
    %v2034 = vtanh.pop %v2025
    %v2035 = vmul.f32 %v2033, %v1946
    %2037 = vrot.lane.b32.xlu0 %v2034, 64
    %v2038 = vpop.permute.xlu0 %2037
    %v2040 = vmul.f32 %v2033, %v2038
    %2042 = vrot.lane.b32.xlu0 %v2040, 32
    %v2043 = vpop.permute.xlu0 %2042
    %v2045 = vadd.f32 %v2035, %v2043
    %v2046 = vtanh.pop %v2045
    %2048 = vrot.lane.b32.xlu0 %v2046, 64
    %v2049 = vpop.permute.xlu0 %2048
    %v2051 = vmul.f32 %v2033, %v2049
    %2053 = vrot.lane.b32.xlu0 %v2051, 32
    %v2054 = vpop.permute.xlu0 %2053
    %v2055 = vsel %vm611, %v2054, 0
    %2057 = vmatprep.subr.mxu0 0.0
    %2058 = vmatpush1.msra.mxu0 0.0
    %2059 = vmatprep.subr.mxu0 0.0
    %2060 = vmatpush1.msra.mxu0 0.0
    %2061 = vmatprep.subr.mxu0 0.0
    %2062 = vmatpush1.msra.mxu0 0.0
    %2063 = vmatprep.subr.mxu0 0.0
    %2064 = vmatpush1.msra.mxu0 0.0
    %2065 = vmatprep.subr.mxu0 0.0
    %2066 = vmatpush1.msra.mxu0 0.0
    %2067 = vmatprep.subr.mxu0 0.0
    %2068 = vmatpush1.msra.mxu0 0.0
    %2069 = vmatprep.subr.mxu0 0.0
    %2070 = vmatpush1.msra.mxu0 0.0
    %2071 = vmatprep.subr.mxu0 0.0
    %2072 = vmatpush1.msra.mxu0 0.0
    %2073 = vmatprep.subr.mxu0 0.0
    %2074 = vmatpush1.msra.mxu0 0.0
    %2075 = vmatprep.subr.mxu0 0.0
    %2076 = vmatpush1.msra.mxu0 0.0
    %2077 = vmatprep.subr.mxu0 0.0
    %2078 = vmatpush1.msra.mxu0 0.0
    %2079 = vmatprep.subr.mxu0 0.0
    %2080 = vmatpush1.msra.mxu0 0.0
    %2081 = vmatprep.subr.mxu0 0.0
    %2082 = vmatpush1.msra.mxu0 %v464
    %2083 = vmatprep.subr.mxu0 0.0
    %2084 = vmatpush1.msra.mxu0 %v463
    %2085 = vmatprep.subr.mxu0 0.0
    %2086 = vmatpush1.msra.mxu0 %v462
    %2087 = vmatprep.subr.mxu0 0.0
    %2088 = vmatpush1.msra.mxu0 %v461
    %2089 = vmatprep.subr.mxu0 0.0
    %2090 = vmatpush2.msra.mxu0 0.0
    %2091 = vmatprep.subr.mxu0 0.0
    %2092 = vmatpush2.msra.mxu0 0.0
    %2093 = vmatprep.subr.mxu0 0.0
    %2094 = vmatpush2.msra.mxu0 0.0
    %2095 = vmatprep.subr.mxu0 0.0
    %2096 = vmatpush2.msra.mxu0 0.0
    %2097 = vmatprep.subr.mxu0 0.0
    %2098 = vmatpush2.msra.mxu0 0.0
    %2099 = vmatprep.subr.mxu0 0.0
    %2100 = vmatpush2.msra.mxu0 0.0
    %2101 = vmatprep.subr.mxu0 0.0
    %2102 = vmatpush2.msra.mxu0 0.0
    %2103 = vmatprep.subr.mxu0 0.0
    %2104 = vmatpush2.msra.mxu0 0.0
    %2105 = vmatprep.subr.mxu0 0.0
    %2106 = vmatpush2.msra.mxu0 0.0
    %2107 = vmatprep.subr.mxu0 0.0
    %2108 = vmatpush2.msra.mxu0 0.0
    %2109 = vmatprep.subr.mxu0 0.0
    %2110 = vmatpush2.msra.mxu0 0.0
    %2111 = vmatprep.subr.mxu0 0.0
    %2112 = vmatpush2.msra.mxu0 0.0
    %2113 = vmatprep.subr.mxu0 0.0
    %2114 = vmatpush2.msra.mxu0 0.0
    %2115 = vmatprep.subr.mxu0 0.0
    %2116 = vmatpush2.msra.mxu0 0.0
    %2117 = vmatprep.subr.mxu0 0.0
    %2118 = vmatpush2.msra.mxu0 0.0
    %2119 = vmatprep.subr.mxu0 0.0
    %2120 = vmatpush2.msra.mxu0 0.0
    %2121 = vmatprep.mubr.f32.mxu0 0.0
    %2122 = vmatmul.mubr.f32.gmra.mxu0 %v2055
    %v2123 = vpop.f32.mrf.mxu0
    %v2124 = vadd.f32 %v1559, %v2123
    %v2125 = vpop.f32.mrf.mxu0
    %2126 = vdwg.mxu0
    %v2127 = vxor.u32 %v2124, 2147483648
    %v2128 = vmul.f32 %v2127, 1.442695
    %v2129 = vpow.pop %v2128
    %v2130 = vadd.f32 %v2129, 1.0
    %v2131 = vrcp.pop %v2130
    %v2132 = vmul.f32 1.0, %v2131
    %v2133 = vtanh.pop %v2124
    %v2134 = vmul.f32 %v2132, %v2045
    %2136 = vrot.lane.b32.xlu0 %v2133, 64
    %v2137 = vpop.permute.xlu0 %2136
    %v2139 = vmul.f32 %v2132, %v2137
    %2141 = vrot.lane.b32.xlu0 %v2139, 32
    %v2142 = vpop.permute.xlu0 %2141
    %v2144 = vadd.f32 %v2134, %v2142
    %v2145 = vtanh.pop %v2144
    %2147 = vrot.lane.b32.xlu0 %v2145, 64
    %v2148 = vpop.permute.xlu0 %2147
    %v2150 = vmul.f32 %v2132, %v2148
    %2152 = vrot.lane.b32.xlu0 %v2150, 32
    %v2153 = vpop.permute.xlu0 %2152
    %v2154 = vsel %vm611, %v2153, 0
    %2156 = vmatprep.subr.mxu0 0.0
    %2157 = vmatpush1.msra.mxu0 0.0
    %2158 = vmatprep.subr.mxu0 0.0
    %2159 = vmatpush1.msra.mxu0 0.0
    %2160 = vmatprep.subr.mxu0 0.0
    %2161 = vmatpush1.msra.mxu0 0.0
    %2162 = vmatprep.subr.mxu0 0.0
    %2163 = vmatpush1.msra.mxu0 0.0
    %2164 = vmatprep.subr.mxu0 0.0
    %2165 = vmatpush1.msra.mxu0 0.0
    %2166 = vmatprep.subr.mxu0 0.0
    %2167 = vmatpush1.msra.mxu0 0.0
    %2168 = vmatprep.subr.mxu0 0.0
    %2169 = vmatpush1.msra.mxu0 0.0
    %2170 = vmatprep.subr.mxu0 0.0
    %2171 = vmatpush1.msra.mxu0 0.0
    %2172 = vmatprep.subr.mxu0 0.0
    %2173 = vmatpush1.msra.mxu0 0.0
    %2174 = vmatprep.subr.mxu0 0.0
    %2175 = vmatpush1.msra.mxu0 0.0
    %2176 = vmatprep.subr.mxu0 0.0
    %2177 = vmatpush1.msra.mxu0 0.0
    %2178 = vmatprep.subr.mxu0 0.0
    %2179 = vmatpush1.msra.mxu0 0.0
    %2180 = vmatprep.subr.mxu0 0.0
    %2181 = vmatpush1.msra.mxu0 %v464
    %2182 = vmatprep.subr.mxu0 0.0
    %2183 = vmatpush1.msra.mxu0 %v463
    %2184 = vmatprep.subr.mxu0 0.0
    %2185 = vmatpush1.msra.mxu0 %v462
    %2186 = vmatprep.subr.mxu0 0.0
    %2187 = vmatpush1.msra.mxu0 %v461
    %2188 = vmatprep.subr.mxu0 0.0
    %2189 = vmatpush2.msra.mxu0 0.0
    %2190 = vmatprep.subr.mxu0 0.0
    %2191 = vmatpush2.msra.mxu0 0.0
    %2192 = vmatprep.subr.mxu0 0.0
    %2193 = vmatpush2.msra.mxu0 0.0
    %2194 = vmatprep.subr.mxu0 0.0
    %2195 = vmatpush2.msra.mxu0 0.0
    %2196 = vmatprep.subr.mxu0 0.0
    %2197 = vmatpush2.msra.mxu0 0.0
    %2198 = vmatprep.subr.mxu0 0.0
    %2199 = vmatpush2.msra.mxu0 0.0
    %2200 = vmatprep.subr.mxu0 0.0
    %2201 = vmatpush2.msra.mxu0 0.0
    %2202 = vmatprep.subr.mxu0 0.0
    %2203 = vmatpush2.msra.mxu0 0.0
    %2204 = vmatprep.subr.mxu0 0.0
    %2205 = vmatpush2.msra.mxu0 0.0
    %2206 = vmatprep.subr.mxu0 0.0
    %2207 = vmatpush2.msra.mxu0 0.0
    %2208 = vmatprep.subr.mxu0 0.0
    %2209 = vmatpush2.msra.mxu0 0.0
    %2210 = vmatprep.subr.mxu0 0.0
    %2211 = vmatpush2.msra.mxu0 0.0
    %2212 = vmatprep.subr.mxu0 0.0
    %2213 = vmatpush2.msra.mxu0 0.0
    %2214 = vmatprep.subr.mxu0 0.0
    %2215 = vmatpush2.msra.mxu0 0.0
    %2216 = vmatprep.subr.mxu0 0.0
    %2217 = vmatpush2.msra.mxu0 0.0
    %2218 = vmatprep.subr.mxu0 0.0
    %2219 = vmatpush2.msra.mxu0 0.0
    %2220 = vmatprep.mubr.f32.mxu0 0.0
    %2221 = vmatmul.mubr.f32.gmra.mxu0 %v2154
    %v2222 = vpop.f32.mrf.mxu0
    %v2223 = vadd.f32 %v1560, %v2222
    %v2224 = vpop.f32.mrf.mxu0
    %2225 = vdwg.mxu0
    %v2226 = vxor.u32 %v2223, 2147483648
    %v2227 = vmul.f32 %v2226, 1.442695
    %v2228 = vpow.pop %v2227
    %v2229 = vadd.f32 %v2228, 1.0
    %v2230 = vrcp.pop %v2229
    %v2231 = vmul.f32 1.0, %v2230
    %v2232 = vtanh.pop %v2223
    %v2233 = vmul.f32 %v2231, %v2144
    %2235 = vrot.lane.b32.xlu0 %v2232, 64
    %v2236 = vpop.permute.xlu0 %2235
    %v2238 = vmul.f32 %v2231, %v2236
    %2240 = vrot.lane.b32.xlu0 %v2238, 32
    %v2241 = vpop.permute.xlu0 %2240
    %v2243 = vadd.f32 %v2233, %v2241
    %v2244 = vtanh.pop %v2243
    %2246 = vrot.lane.b32.xlu0 %v2244, 64
    %v2247 = vpop.permute.xlu0 %2246
    %v2249 = vmul.f32 %v2231, %v2247
    %2251 = vrot.lane.b32.xlu0 %v2249, 32
    %v2252 = vpop.permute.xlu0 %2251
    %v2253 = vsel %vm611, %v2252, 0
    %2255 = vmatprep.subr.mxu0 0.0
    %2256 = vmatpush1.msra.mxu0 0.0
    %2257 = vmatprep.subr.mxu0 0.0
    %2258 = vmatpush1.msra.mxu0 0.0
    %2259 = vmatprep.subr.mxu0 0.0
    %2260 = vmatpush1.msra.mxu0 0.0
    %2261 = vmatprep.subr.mxu0 0.0
    %2262 = vmatpush1.msra.mxu0 0.0
    %2263 = vmatprep.subr.mxu0 0.0
    %2264 = vmatpush1.msra.mxu0 0.0
    %2265 = vmatprep.subr.mxu0 0.0
    %2266 = vmatpush1.msra.mxu0 0.0
    %2267 = vmatprep.subr.mxu0 0.0
    %2268 = vmatpush1.msra.mxu0 0.0
    %2269 = vmatprep.subr.mxu0 0.0
    %2270 = vmatpush1.msra.mxu0 0.0
    %2271 = vmatprep.subr.mxu0 0.0
    %2272 = vmatpush1.msra.mxu0 0.0
    %2273 = vmatprep.subr.mxu0 0.0
    %2274 = vmatpush1.msra.mxu0 0.0
    %2275 = vmatprep.subr.mxu0 0.0
    %2276 = vmatpush1.msra.mxu0 0.0
    %2277 = vmatprep.subr.mxu0 0.0
    %2278 = vmatpush1.msra.mxu0 0.0
    %2279 = vmatprep.subr.mxu0 0.0
    %2280 = vmatpush1.msra.mxu0 %v464
    %2281 = vmatprep.subr.mxu0 0.0
    %2282 = vmatpush1.msra.mxu0 %v463
    %2283 = vmatprep.subr.mxu0 0.0
    %2284 = vmatpush1.msra.mxu0 %v462
    %2285 = vmatprep.subr.mxu0 0.0
    %2286 = vmatpush1.msra.mxu0 %v461
    %2287 = vmatprep.subr.mxu0 0.0
    %2288 = vmatpush2.msra.mxu0 0.0
    %2289 = vmatprep.subr.mxu0 0.0
    %2290 = vmatpush2.msra.mxu0 0.0
    %2291 = vmatprep.subr.mxu0 0.0
    %2292 = vmatpush2.msra.mxu0 0.0
    %2293 = vmatprep.subr.mxu0 0.0
    %2294 = vmatpush2.msra.mxu0 0.0
    %2295 = vmatprep.subr.mxu0 0.0
    %2296 = vmatpush2.msra.mxu0 0.0
    %2297 = vmatprep.subr.mxu0 0.0
    %2298 = vmatpush2.msra.mxu0 0.0
    %2299 = vmatprep.subr.mxu0 0.0
    %2300 = vmatpush2.msra.mxu0 0.0
    %2301 = vmatprep.subr.mxu0 0.0
    %2302 = vmatpush2.msra.mxu0 0.0
    %2303 = vmatprep.subr.mxu0 0.0
    %2304 = vmatpush2.msra.mxu0 0.0
    %2305 = vmatprep.subr.mxu0 0.0
    %2306 = vmatpush2.msra.mxu0 0.0
    %2307 = vmatprep.subr.mxu0 0.0
    %2308 = vmatpush2.msra.mxu0 0.0
    %2309 = vmatprep.subr.mxu0 0.0
    %2310 = vmatpush2.msra.mxu0 0.0
    %2311 = vmatprep.subr.mxu0 0.0
    %2312 = vmatpush2.msra.mxu0 0.0
    %2313 = vmatprep.subr.mxu0 0.0
    %2314 = vmatpush2.msra.mxu0 0.0
    %2315 = vmatprep.subr.mxu0 0.0
    %2316 = vmatpush2.msra.mxu0 0.0
    %2317 = vmatprep.subr.mxu0 0.0
    %2318 = vmatpush2.msra.mxu0 0.0
    %2319 = vmatprep.mubr.f32.mxu0 0.0
    %2320 = vmatmul.mubr.f32.gmra.mxu0 %v2253
    %v2321 = vpop.f32.mrf.mxu0
    %v2322 = vadd.f32 %v1561, %v2321
    %v2323 = vpop.f32.mrf.mxu0
    %2324 = vdwg.mxu0
    %v2325 = vxor.u32 %v2322, 2147483648
    %v2326 = vmul.f32 %v2325, 1.442695
    %v2327 = vpow.pop %v2326
    %v2328 = vadd.f32 %v2327, 1.0
    %v2329 = vrcp.pop %v2328
    %v2330 = vmul.f32 1.0, %v2329
    %v2331 = vtanh.pop %v2322
    %v2332 = vmul.f32 %v2330, %v2243
    %2334 = vrot.lane.b32.xlu0 %v2331, 64
    %v2335 = vpop.permute.xlu0 %2334
    %v2337 = vmul.f32 %v2330, %v2335
    %2339 = vrot.lane.b32.xlu0 %v2337, 32
    %v2340 = vpop.permute.xlu0 %2339
    %v2342 = vadd.f32 %v2332, %v2340
    %v2343 = vtanh.pop %v2342
    %2345 = vrot.lane.b32.xlu0 %v2343, 64
    %v2346 = vpop.permute.xlu0 %2345
    %v2348 = vmul.f32 %v2330, %v2346
    %2351 = vrot.lane.b32.xlu0 %v2348, 32
    %v2352 = vpop.permute.xlu0 %2351
    %v2354 = vsel %vm469, %v1658, %v2352
    %v2357 = vsel %vm469, %v1757, %v2252
    %v2360 = vsel %vm469, %v1856, %v2153
    %v2363 = vsel %vm469, %v1955, %v2054
    %v2364 = vsel %vm469, %v2054, %v1955
    %v2365 = vsel %vm469, %v2153, %v1856
    %v2366 = vsel %vm469, %v2252, %v1757
    %v2367 = vsel %vm469, %v2352, %v1658
    %v2368 = vld [vmem:[%s4] sm:$0xff]
    %v2369 = vld [vmem:[%s4 + $0x8] sm:$0xff]
    %v2370 = vld [vmem:[%s4 + $0x10] sm:$0xff]
    %v2371 = vld [vmem:[%s4 + $0x18] sm:$0xff]
    %v2372 = vld [vmem:[%s4 + $0x20] sm:$0xff]
    %v2373 = vld [vmem:[%s4 + $0x28] sm:$0xff]
    %v2374 = vld [vmem:[%s4 + $0x30] sm:$0xff]
    %v2375 = vld [vmem:[%s4 + $0x38] sm:$0xff]
    %v2376 = vld [vmem:[%s4 + $0x40] sm:$0xff]
    %v2377 = vld [vmem:[%s4 + $0x48] sm:$0xff]
    %v2378 = vld [vmem:[%s4 + $0x50] sm:$0xff]
    %v2379 = vld [vmem:[%s4 + $0x58] sm:$0xff]
    %v2380 = vld [vmem:[%s4 + $0x60] sm:$0xff]
    %v2381 = vld [vmem:[%s4 + $0x68] sm:$0xff]
    %v2382 = vld [vmem:[%s4 + $0x70] sm:$0xff]
    %v2383 = vld [vmem:[%s4 + $0x78] sm:$0xff]
    %v2384 = vld [vmem:[%s4 + $0x80] sm:$0xff]
    %v2385 = vld [vmem:[%s4 + $0x88] sm:$0xff]
    %v2386 = vld [vmem:[%s4 + $0x90] sm:$0xff]
    %v2387 = vlaneseq
    %v2388 = vshrl.u32 %v2387, 7
    %v2389 = vsub.s32 0, %v2388
    %v2390 = vrot.slane %v2386, %v2389
    %v2392 = vsel %vm611, %v2354, 0
    %v2395 = vsel %vm611, %v2357, 0
    %v2398 = vsel %vm611, %v2360, 0
    %v2401 = vsel %vm611, %v2363, 0
    %v2404 = vsel %vm611, %v2364, 0
    %v2407 = vsel %vm611, %v2365, 0
    %v2410 = vsel %vm611, %v2366, 0
    %v2413 = vsel %vm611, %v2367, 0
    %2415 = vmatprep.subr.mxu0 0.0
    %2416 = vmatpush1.msra.mxu0 0.0
    %2417 = vmatprep.subr.mxu0 0.0
    %2418 = vmatpush1.msra.mxu0 0.0
    %2419 = vmatprep.subr.mxu0 0.0
    %2420 = vmatpush1.msra.mxu0 0.0
    %2421 = vmatprep.subr.mxu0 0.0
    %2422 = vmatpush1.msra.mxu0 0.0
    %2423 = vmatprep.subr.mxu0 0.0
    %2424 = vmatpush1.msra.mxu0 0.0
    %2425 = vmatprep.subr.mxu0 0.0
    %2426 = vmatpush1.msra.mxu0 0.0
    %2427 = vmatprep.subr.mxu0 0.0
    %2428 = vmatpush1.msra.mxu0 0.0
    %2429 = vmatprep.subr.mxu0 0.0
    %2430 = vmatpush1.msra.mxu0 0.0
    %2431 = vmatprep.subr.mxu0 0.0
    %2432 = vmatpush1.msra.mxu0 0.0
    %2433 = vmatprep.subr.mxu0 0.0
    %2434 = vmatpush1.msra.mxu0 0.0
    %2435 = vmatprep.subr.mxu0 0.0
    %2436 = vmatpush1.msra.mxu0 0.0
    %2437 = vmatprep.subr.mxu0 0.0
    %2438 = vmatpush1.msra.mxu0 0.0
    %2439 = vmatprep.subr.mxu0 0.0
    %2440 = vmatpush1.msra.mxu0 %v2371
    %2441 = vmatprep.subr.mxu0 0.0
    %2442 = vmatpush1.msra.mxu0 %v2370
    %2443 = vmatprep.subr.mxu0 0.0
    %2444 = vmatpush1.msra.mxu0 %v2369
    %2445 = vmatprep.subr.mxu0 0.0
    %2446 = vmatpush1.msra.mxu0 %v2368
    %2447 = vmatprep.subr.mxu0 0.0
    %2448 = vmatpush2.msra.mxu0 0.0
    %2449 = vmatprep.subr.mxu0 0.0
    %2450 = vmatpush2.msra.mxu0 0.0
    %2451 = vmatprep.subr.mxu0 0.0
    %2452 = vmatpush2.msra.mxu0 0.0
    %2453 = vmatprep.subr.mxu0 0.0
    %2454 = vmatpush2.msra.mxu0 0.0
    %2455 = vmatprep.subr.mxu0 0.0
    %2456 = vmatpush2.msra.mxu0 0.0
    %2457 = vmatprep.subr.mxu0 0.0
    %2458 = vmatpush2.msra.mxu0 0.0
    %2459 = vmatprep.subr.mxu0 0.0
    %2460 = vmatpush2.msra.mxu0 0.0
    %2461 = vmatprep.subr.mxu0 0.0
    %2462 = vmatpush2.msra.mxu0 0.0
    %2463 = vmatprep.subr.mxu0 0.0
    %2464 = vmatpush2.msra.mxu0 0.0
    %2465 = vmatprep.subr.mxu0 0.0
    %2466 = vmatpush2.msra.mxu0 0.0
    %2467 = vmatprep.subr.mxu0 0.0
    %2468 = vmatpush2.msra.mxu0 0.0
    %2469 = vmatprep.subr.mxu0 0.0
    %2470 = vmatpush2.msra.mxu0 0.0
    %2471 = vmatprep.subr.mxu0 0.0
    %2472 = vmatpush2.msra.mxu0 0.0
    %2473 = vmatprep.subr.mxu0 0.0
    %2474 = vmatpush2.msra.mxu0 0.0
    %2475 = vmatprep.subr.mxu0 0.0
    %2476 = vmatpush2.msra.mxu0 0.0
    %2477 = vmatprep.subr.mxu0 0.0
    %2478 = vmatpush2.msra.mxu0 0.0
    %2479 = vmatprep.mubr.f32.mxu0 0.0
    %2480 = vmatmul.mubr.f32.gmra.mxu0 %v2392
    %v2481 = vpop.f32.mrf.mxu0
    %v2482 = vadd.f32 %v2390, %v2481
    %v2483 = vpop.f32.mrf.mxu0
    %2484 = vmatprep.mubr.f32.mxu0 0.0
    %2485 = vmatmul.mubr.f32.gmra.mxu0 %v2395
    %v2486 = vpop.f32.mrf.mxu0
    %v2487 = vadd.f32 %v2390, %v2486
    %v2488 = vpop.f32.mrf.mxu0
    %2489 = vmatprep.mubr.f32.mxu0 0.0
    %2490 = vmatmul.mubr.f32.gmra.mxu0 %v2398
    %v2491 = vpop.f32.mrf.mxu0
    %v2492 = vadd.f32 %v2390, %v2491
    %v2493 = vpop.f32.mrf.mxu0
    %2494 = vmatprep.mubr.f32.mxu0 0.0
    %2495 = vmatmul.mubr.f32.gmra.mxu0 %v2401
    %v2496 = vpop.f32.mrf.mxu0
    %v2497 = vadd.f32 %v2390, %v2496
    %v2498 = vpop.f32.mrf.mxu0
    %2499 = vmatprep.mubr.f32.mxu0 0.0
    %2500 = vmatmul.mubr.f32.gmra.mxu0 %v2404
    %v2501 = vpop.f32.mrf.mxu0
    %v2502 = vadd.f32 %v2390, %v2501
    %v2503 = vpop.f32.mrf.mxu0
    %2504 = vmatprep.mubr.f32.mxu0 0.0
    %2505 = vmatmul.mubr.f32.gmra.mxu0 %v2407
    %v2506 = vpop.f32.mrf.mxu0
    %v2507 = vadd.f32 %v2390, %v2506
    %v2508 = vpop.f32.mrf.mxu0
    %2509 = vmatprep.mubr.f32.mxu0 0.0
    %2510 = vmatmul.mubr.f32.gmra.mxu0 %v2410
    %v2511 = vpop.f32.mrf.mxu0
    %v2512 = vadd.f32 %v2390, %v2511
    %v2513 = vpop.f32.mrf.mxu0
    %2514 = vmatprep.mubr.f32.mxu0 0.0
    %2515 = vmatmul.mubr.f32.gmra.mxu0 %v2413
    %v2516 = vpop.f32.mrf.mxu0
    %v2517 = vadd.f32 %v2390, %v2516
    %v2518 = vpop.f32.mrf.mxu0
    %2519 = vdwg.mxu0
    %v2520 = vmax.f32 %v2482, 0.0
    %v2521 = vmax.f32 %v2487, 0.0
    %v2522 = vmax.f32 %v2492, 0.0
    %v2523 = vmax.f32 %v2497, 0.0
    %v2524 = vmax.f32 %v2502, 0.0
    %v2525 = vmax.f32 %v2507, 0.0
    %v2526 = vmax.f32 %v2512, 0.0
    %v2527 = vmax.f32 %v2517, 0.0
    %v2528 = vlaneseq
    %v2529 = vshrl.u32 %v2528, 7
    %v2530 = vsub.s32 1, %v2529
    %v2531 = vrot.slane %v2386, %v2530
    %v2532 = vmul.f32 %v2520, %v2531
    %v2533 = vmul.f32 %v2521, %v2531
    %v2534 = vmul.f32 %v2522, %v2531
    %v2535 = vmul.f32 %v2523, %v2531
    %v2536 = vmul.f32 %v2524, %v2531
    %v2537 = vmul.f32 %v2525, %v2531
    %v2538 = vmul.f32 %v2526, %v2531
    %v2539 = vmul.f32 %v2527, %v2531
    %v2540 = vsel %vm611, %v2532, 0.0
    %2541 = vadd.xlane.f32.xlu0 %v2540
    %v2542 = vpop.xlane.xlu0 %2541
    %v2543 = vsel %vm611, %v2533, 0.0
    %2544 = vadd.xlane.f32.xlu0 %v2543
    %v2545 = vpop.xlane.xlu0 %2544
    %v2546 = vsel %vm611, %v2534, 0.0
    %2547 = vadd.xlane.f32.xlu0 %v2546
    %v2548 = vpop.xlane.xlu0 %2547
    %v2549 = vsel %vm611, %v2535, 0.0
    %2550 = vadd.xlane.f32.xlu0 %v2549
    %v2551 = vpop.xlane.xlu0 %2550
    %v2552 = vsel %vm611, %v2536, 0.0
    %2553 = vadd.xlane.f32.xlu0 %v2552
    %v2554 = vpop.xlane.xlu0 %2553
    %v2555 = vsel %vm611, %v2537, 0.0
    %2556 = vadd.xlane.f32.xlu0 %v2555
    %v2557 = vpop.xlane.xlu0 %2556
    %v2558 = vsel %vm611, %v2538, 0.0
    %2559 = vadd.xlane.f32.xlu0 %v2558
    %v2560 = vpop.xlane.xlu0 %2559
    %v2561 = vsel %vm611, %v2539, 0.0
    %2562 = vadd.xlane.f32.xlu0 %v2561
    %v2563 = vpop.xlane.xlu0 %2562
    %v2564 = vlaneseq
    %v2565 = vshrl.u32 %v2564, 7
    %v2566 = vsub.s32 2, %v2565
    %v2567 = vrot.slane %v2386, %v2566
    %v2568 = vadd.f32 %v2542, %v2567
    %v2569 = vadd.f32 %v2545, %v2567
    %v2570 = vadd.f32 %v2548, %v2567
    %v2571 = vadd.f32 %v2551, %v2567
    %v2572 = vadd.f32 %v2554, %v2567
    %v2573 = vadd.f32 %v2557, %v2567
    %v2574 = vadd.f32 %v2560, %v2567
    %v2575 = vadd.f32 %v2563, %v2567
    %2584 = vrot.lane.b32.xlu0 %v2532, 96
    %v2585 = vpop.permute.xlu0 %2584
    %2586 = vrot.lane.b32.xlu0 %v2533, 96
    %v2587 = vpop.permute.xlu0 %2586
    %2588 = vrot.lane.b32.xlu0 %v2534, 96
    %v2589 = vpop.permute.xlu0 %2588
    %2590 = vrot.lane.b32.xlu0 %v2535, 96
    %v2591 = vpop.permute.xlu0 %2590
    %2592 = vrot.lane.b32.xlu0 %v2536, 96
    %v2593 = vpop.permute.xlu0 %2592
    %2594 = vrot.lane.b32.xlu0 %v2537, 96
    %v2595 = vpop.permute.xlu0 %2594
    %2596 = vrot.lane.b32.xlu0 %v2538, 96
    %v2597 = vpop.permute.xlu0 %2596
    %2598 = vrot.lane.b32.xlu0 %v2539, 96
    %v2599 = vpop.permute.xlu0 %2598
    %v2608 = vsel %vm611, %v2585, 0.0
    %2609 = vadd.xlane.f32.xlu0 %v2608
    %v2610 = vpop.xlane.xlu0 %2609
    %v2611 = vsel %vm611, %v2587, 0.0
    %2612 = vadd.xlane.f32.xlu0 %v2611
    %v2613 = vpop.xlane.xlu0 %2612
    %v2614 = vsel %vm611, %v2589, 0.0
    %2615 = vadd.xlane.f32.xlu0 %v2614
    %v2616 = vpop.xlane.xlu0 %2615
    %v2617 = vsel %vm611, %v2591, 0.0
    %2618 = vadd.xlane.f32.xlu0 %v2617
    %v2619 = vpop.xlane.xlu0 %2618
    %v2620 = vsel %vm611, %v2593, 0.0
    %2621 = vadd.xlane.f32.xlu0 %v2620
    %v2622 = vpop.xlane.xlu0 %2621
    %v2623 = vsel %vm611, %v2595, 0.0
    %2624 = vadd.xlane.f32.xlu0 %v2623
    %v2625 = vpop.xlane.xlu0 %2624
    %v2626 = vsel %vm611, %v2597, 0.0
    %2627 = vadd.xlane.f32.xlu0 %v2626
    %v2628 = vpop.xlane.xlu0 %2627
    %v2629 = vsel %vm611, %v2599, 0.0
    %2630 = vadd.xlane.f32.xlu0 %v2629
    %v2631 = vpop.xlane.xlu0 %2630
    %v2632 = vadd.f32 %v2610, %v2567
    %v2633 = vadd.f32 %v2613, %v2567
    %v2634 = vadd.f32 %v2616, %v2567
    %v2635 = vadd.f32 %v2619, %v2567
    %v2636 = vadd.f32 %v2622, %v2567
    %v2637 = vadd.f32 %v2625, %v2567
    %v2638 = vadd.f32 %v2628, %v2567
    %v2639 = vadd.f32 %v2631, %v2567
    %vm2640 = vcmp.ge.s32.totalorder %v343, 6
    %2649 = vrot.lane.b32.xlu0 %v2568, 1
    %v2650 = vpop.permute.xlu0 %2649
    %2651 = vrot.lane.b32.xlu0 %v2569, 1
    %v2652 = vpop.permute.xlu0 %2651
    %2653 = vrot.lane.b32.xlu0 %v2570, 1
    %v2654 = vpop.permute.xlu0 %2653
    %2655 = vrot.lane.b32.xlu0 %v2571, 1
    %v2656 = vpop.permute.xlu0 %2655
    %2657 = vrot.lane.b32.xlu0 %v2572, 1
    %v2658 = vpop.permute.xlu0 %2657
    %2659 = vrot.lane.b32.xlu0 %v2573, 1
    %v2660 = vpop.permute.xlu0 %2659
    %2661 = vrot.lane.b32.xlu0 %v2574, 1
    %v2662 = vpop.permute.xlu0 %2661
    %2663 = vrot.lane.b32.xlu0 %v2575, 1
    %v2664 = vpop.permute.xlu0 %2663
    %v2673 = vsel %vm2640, %v2632, %v2650
    %v2674 = vsel %vm2640, %v2633, %v2652
    %v2675 = vsel %vm2640, %v2634, %v2654
    %v2676 = vsel %vm2640, %v2635, %v2656
    %v2677 = vsel %vm2640, %v2636, %v2658
    %v2678 = vsel %vm2640, %v2637, %v2660
    %v2679 = vsel %vm2640, %v2638, %v2662
    %v2680 = vsel %vm2640, %v2639, %v2664
    %vm2681 = vcmask 15368
    %v2682 = vsel %vm2681, %v2673, -inf
    %v2683 = vsel %vm2681, %v2674, -inf
    %v2684 = vsel %vm2681, %v2675, -inf
    %v2685 = vsel %vm2681, %v2676, -inf
    %v2686 = vsel %vm2681, %v2677, -inf
    %v2687 = vmax.f32 %v2682, %v2686
    %v2688 = vsel %vm2681, %v2678, -inf
    %v2689 = vmax.f32 %v2683, %v2688
    %v2690 = vsel %vm2681, %v2679, -inf
    %v2691 = vmax.f32 %v2684, %v2690
    %v2692 = vsel %vm2681, %v2680, -inf
    %v2693 = vmax.f32 %v2685, %v2692
    %v2694 = vmax.f32 %v2687, %v2689
    %v2695 = vmax.f32 %v2691, %v2693
    %v2696 = vmax.f32 %v2694, %v2695
    %v2697 = vsub.f32 %v2673, %v2696
    %v2698 = vsub.f32 %v2674, %v2696
    %v2699 = vsub.f32 %v2675, %v2696
    %v2700 = vsub.f32 %v2676, %v2696
    %v2701 = vsub.f32 %v2677, %v2696
    %v2702 = vsub.f32 %v2678, %v2696
    %v2703 = vsub.f32 %v2679, %v2696
    %v2704 = vsub.f32 %v2680, %v2696
    %v2705 = vmul.f32 %v2697, 1.442695
    %v2706 = vpow.pop %v2705
    %v2707 = vmul.f32 %v2698, 1.442695
    %v2708 = vpow.pop %v2707
    %v2709 = vmul.f32 %v2699, 1.442695
    %v2710 = vpow.pop %v2709
    %v2711 = vmul.f32 %v2700, 1.442695
    %v2712 = vpow.pop %v2711
    %v2713 = vmul.f32 %v2701, 1.442695
    %v2714 = vpow.pop %v2713
    %v2715 = vmul.f32 %v2702, 1.442695
    %v2716 = vpow.pop %v2715
    %v2717 = vmul.f32 %v2703, 1.442695
    %v2718 = vpow.pop %v2717
    %v2719 = vmul.f32 %v2704, 1.442695
    %v2720 = vpow.pop %v2719
    %v2721 = vsel %vm2681, %v2706, 0.0
    %v2722 = vsel %vm2681, %v2708, 0.0
    %v2723 = vadd.f32 %v2721, %v2722
    %v2724 = vsel %vm2681, %v2710, 0.0
    %v2725 = vadd.f32 %v2723, %v2724
    %v2726 = vsel %vm2681, %v2712, 0.0
    %v2727 = vadd.f32 %v2725, %v2726
    %v2728 = vsel %vm2681, %v2714, 0.0
    %v2729 = vadd.f32 %v2727, %v2728
    %v2730 = vsel %vm2681, %v2716, 0.0
    %v2731 = vadd.f32 %v2729, %v2730
    %v2732 = vsel %vm2681, %v2718, 0.0
    %v2733 = vadd.f32 %v2731, %v2732
    %v2734 = vsel %vm2681, %v2720, 0.0
    %v2735 = vadd.f32 %v2733, %v2734
    %v2736 = vrcp.pop %v2735
    %v2737 = vmul.f32 %v2706, %v2736
    %v2738 = vmul.f32 %v2708, %v2736
    %v2739 = vmul.f32 %v2710, %v2736
    %v2740 = vmul.f32 %v2712, %v2736
    %v2741 = vmul.f32 %v2714, %v2736
    %v2742 = vmul.f32 %v2716, %v2736
    %v2743 = vmul.f32 %v2718, %v2736
    %v2744 = vmul.f32 %v2720, %v2736
    %2746 = vset.pattern.permute.xlu0 1
    %2747 = vperm.xlu0 %2746, %v2737
    %v2748 = vpop.permute.xlu0 %2747
    %2751 = vset.pattern.permute.xlu0 1
    %2752 = vperm.xlu0 %2751, %v2738
    %v2753 = vpop.permute.xlu0 %2752
    %2756 = vset.pattern.permute.xlu0 1
    %2757 = vperm.xlu0 %2756, %v2739
    %v2758 = vpop.permute.xlu0 %2757
    %2761 = vset.pattern.permute.xlu0 1
    %2762 = vperm.xlu0 %2761, %v2740
    %v2763 = vpop.permute.xlu0 %2762
    %2766 = vset.pattern.permute.xlu0 1
    %2767 = vperm.xlu0 %2766, %v2741
    %v2768 = vpop.permute.xlu0 %2767
    %2771 = vset.pattern.permute.xlu0 1
    %2772 = vperm.xlu0 %2771, %v2742
    %v2773 = vpop.permute.xlu0 %2772
    %2776 = vset.pattern.permute.xlu0 1
    %2777 = vperm.xlu0 %2776, %v2743
    %v2778 = vpop.permute.xlu0 %2777
    %2781 = vset.pattern.permute.xlu0 1
    %2782 = vperm.xlu0 %2781, %v2744
    %v2783 = vpop.permute.xlu0 %2782
    %v2785 = vmul.f32 %v2748, %v2354
    %v2786 = vmul.f32 %v2753, %v2357
    %v2787 = vmul.f32 %v2758, %v2360
    %v2788 = vmul.f32 %v2763, %v2363
    %v2789 = vmul.f32 %v2768, %v2364
    %v2790 = vmul.f32 %v2773, %v2365
    %v2791 = vmul.f32 %v2778, %v2366
    %v2792 = vmul.f32 %v2783, %v2367
    %v2793 = vsel %vm611, %v2785, 0.0
    %v2794 = vsel %vm611, %v2786, 0.0
    %v2795 = vadd.f32 %v2793, %v2794
    %v2796 = vsel %vm611, %v2787, 0.0
    %v2797 = vadd.f32 %v2795, %v2796
    %v2798 = vsel %vm611, %v2788, 0.0
    %v2799 = vadd.f32 %v2797, %v2798
    %v2800 = vsel %vm611, %v2789, 0.0
    %v2801 = vadd.f32 %v2799, %v2800
    %v2802 = vsel %vm611, %v2790, 0.0
    %v2803 = vadd.f32 %v2801, %v2802
    %v2804 = vsel %vm611, %v2791, 0.0
    %v2805 = vadd.f32 %v2803, %v2804
    %v2806 = vsel %vm611, %v2792, 0.0
    %v2807 = vadd.f32 %v2805, %v2806
    %v2809 = vrot.slane %v2807, 4
    %v2811 = vrot.slane %v2807, 6
    %v2813 = vrot.slane %v2807, 2
    %v2816 = vrot.slane %v450, 6
    %v2818 = vrot.slane %v2813, 2
    %v2819 = vrot.slane %v2816, 2
    %2820 = vrot.lane.b32.xlu0 %v2813, 32
    %v2821 = vpop.permute.xlu0 %2820
    %2822 = vrot.lane.b32.xlu0 %v2818, 32
    %v2823 = vpop.permute.xlu0 %2822
    %2824 = vrot.lane.b32.xlu0 %v2819, 32
    %v2825 = vpop.permute.xlu0 %2824
    %v2829 = vsel %vm611, %v2807, %v2821
    %v2830 = vsel %vm611, %v2809, %v2821
    %v2831 = vsel %vm611, %v2807, %v2823
    %v2832 = vsel %vm611, %v450, %v2821
    %v2833 = vsel %vm611, %v2811, %v2821
    %v2834 = vsel %vm611, %v2811, %v2825
    %v2835 = vlaneseq
    %v2836 = vshrl.u32 %v2835, 7
    %v2837 = vsub.s32 3, %v2836
    %v2838 = vrot.slane %v2386, %v2837
    %v2845 = vcombine.low %v2829, %v2830
    %v2846 = vcombine.low %v2831, %v2832
    %v2848 = vunpack.c.l.s4 1983009808
    %v2849 = vunpack.c.0.s8 %v2848
    %v2850 = vlaneseq
    %v2851 = vshrl.u32 %v2850, 7
    %v2852 = vsub.s32 %v2849, %v2851
    %v2853 = vrot.slane %v2845, %v2852
    %v2855 = vunpack.c.l.s4 1983009808
    %v2856 = vunpack.c.0.s8 %v2855
    %v2857 = vlaneseq
    %v2858 = vshrl.u32 %v2857, 7
    %v2859 = vsub.s32 %v2856, %v2858
    %v2860 = vrot.slane %v2846, %v2859
    %v2861 = vcombine.low %v2853, %v2860
    %v2862 = vcombine.low %v2833, %v2834
    %v2864 = vunpack.c.l.s4 1983009808
    %v2865 = vunpack.c.0.s8 %v2864
    %v2866 = vlaneseq
    %v2867 = vshrl.u32 %v2866, 7
    %v2868 = vsub.s32 %v2865, %v2867
    %v2869 = vrot.slane %v2862, %v2868
    %vm2870 = vcmask 523264
    %v2871 = vsel %vm2870, %v2861, 0
    %v2873 = vsel %vm2870, %v2869, 0
    %2875 = vmatprep.subr.mxu0 0.0
    %2876 = vmatpush1.msra.mxu0 0.0
    %2877 = vmatprep.subr.mxu0 0.0
    %2878 = vmatpush1.msra.mxu0 0.0
    %2879 = vmatprep.subr.mxu0 0.0
    %2880 = vmatpush1.msra.mxu0 0.0
    %2881 = vmatprep.subr.mxu0 0.0
    %2882 = vmatpush1.msra.mxu0 0.0
    %2883 = vmatprep.subr.mxu0 0.0
    %2884 = vmatpush1.msra.mxu0 0.0
    %2885 = vmatprep.subr.mxu0 0.0
    %2886 = vmatpush1.msra.mxu0 0.0
    %2887 = vmatprep.subr.mxu0 0.0
    %2888 = vmatpush1.msra.mxu0 0.0
    %2889 = vmatprep.subr.mxu0 0.0
    %2890 = vmatpush1.msra.mxu0 0.0
    %2891 = vmatprep.subr.mxu0 0.0
    %2892 = vmatpush1.msra.mxu0 %v2379
    %2893 = vmatprep.subr.mxu0 0.0
    %2894 = vmatpush1.msra.mxu0 %v2378
    %2895 = vmatprep.subr.mxu0 0.0
    %2896 = vmatpush1.msra.mxu0 %v2377
    %2897 = vmatprep.subr.mxu0 0.0
    %2898 = vmatpush1.msra.mxu0 %v2376
    %2899 = vmatprep.subr.mxu0 0.0
    %2900 = vmatpush1.msra.mxu0 %v2375
    %2901 = vmatprep.subr.mxu0 0.0
    %2902 = vmatpush1.msra.mxu0 %v2374
    %2903 = vmatprep.subr.mxu0 0.0
    %2904 = vmatpush1.msra.mxu0 %v2373
    %2905 = vmatprep.subr.mxu0 0.0
    %2906 = vmatpush1.msra.mxu0 %v2372
    %2907 = vmatprep.subr.mxu0 0.0
    %2908 = vmatpush2.msra.mxu0 0.0
    %2909 = vmatprep.subr.mxu0 0.0
    %2910 = vmatpush2.msra.mxu0 0.0
    %2911 = vmatprep.subr.mxu0 0.0
    %2912 = vmatpush2.msra.mxu0 0.0
    %2913 = vmatprep.subr.mxu0 0.0
    %2914 = vmatpush2.msra.mxu0 0.0
    %2915 = vmatprep.subr.mxu0 0.0
    %2916 = vmatpush2.msra.mxu0 0.0
    %2917 = vmatprep.subr.mxu0 0.0
    %2918 = vmatpush2.msra.mxu0 0.0
    %2919 = vmatprep.subr.mxu0 0.0
    %2920 = vmatpush2.msra.mxu0 0.0
    %2921 = vmatprep.subr.mxu0 0.0
    %2922 = vmatpush2.msra.mxu0 0.0
    %2923 = vmatprep.subr.mxu0 0.0
    %2924 = vmatpush2.msra.mxu0 0.0
    %2925 = vmatprep.subr.mxu0 0.0
    %2926 = vmatpush2.msra.mxu0 0.0
    %2927 = vmatprep.subr.mxu0 0.0
    %2928 = vmatpush2.msra.mxu0 0.0
    %2929 = vmatprep.subr.mxu0 0.0
    %2930 = vmatpush2.msra.mxu0 0.0
    %2931 = vmatprep.subr.mxu0 0.0
    %2932 = vmatpush2.msra.mxu0 0.0
    %2933 = vmatprep.subr.mxu0 0.0
    %2934 = vmatpush2.msra.mxu0 0.0
    %2935 = vmatprep.subr.mxu0 0.0
    %2936 = vmatpush2.msra.mxu0 0.0
    %2937 = vmatprep.subr.mxu0 0.0
    %2938 = vmatpush2.msra.mxu0 0.0
    %2939 = vmatprep.mubr.f32.mxu0 0.0
    %2940 = vmatmul.mubr.f32.gmra.mxu0 %v2871
    %v2941 = vpop.f32.mrf.mxu0
    %v2942 = vadd.f32 %v2838, %v2941
    %v2943 = vpop.f32.mrf.mxu0
    %2944 = vmatprep.mubr.f32.mxu0 0.0
    %2945 = vmatmul.mubr.f32.gmra.mxu0 %v2873
    %v2946 = vpop.f32.mrf.mxu0
    %v2947 = vadd.f32 %v2838, %v2946
    %v2948 = vpop.f32.mrf.mxu0
    %2949 = vdwg.mxu0
    %v2950 = vmax.f32 %v2942, 0.0
    %v2951 = vmax.f32 %v2947, 0.0
    %v2952 = vlaneseq
    %v2953 = vshrl.u32 %v2952, 7
    %v2954 = vsub.s32 4, %v2953
    %v2955 = vrot.slane %v2386, %v2954
    %v2956 = vmul.f32 %v2950, %v2955
    %v2957 = vmul.f32 %v2951, %v2955
    %v2958 = vsel %vm611, %v2956, 0.0
    %2959 = vadd.xlane.f32.xlu0 %v2958
    %v2960 = vpop.xlane.xlu0 %2959
    %vm2961 = vcmask 257024
    %v2962 = vsel %vm2961, %v2957, 0.0
    %2963 = vadd.xlane.f32.xlu0 %v2962
    %v2964 = vpop.xlane.xlu0 %2963
    %v2965 = vlaneseq
    %v2966 = vshrl.u32 %v2965, 7
    %v2967 = vsub.s32 5, %v2966
    %v2968 = vrot.slane %v2386, %v2967
    %v2969 = vadd.f32 %v2960, %v2968
    %v2970 = vadd.f32 %v2964, %v2968
    %v2971 = vxor.u32 %v2969, 2147483648
    %v2972 = vxor.u32 %v2970, 2147483648
    %v2973 = vmul.f32 %v2971, 1.442695
    %v2974 = vpow.pop %v2973
    %v2975 = vmul.f32 %v2972, 1.442695
    %v2976 = vpow.pop %v2975
    %v2977 = vadd.f32 %v2974, 1.0
    %v2978 = vadd.f32 %v2976, 1.0
    %v2979 = vrcp.pop %v2977
    %v2980 = vmul.f32 1.0, %v2979
    %v2981 = vrcp.pop %v2978
    %v2982 = vmul.f32 1.0, %v2981
    %v2985 = vcombine.high %v2980, %v2980
    %v2987 = vunpack.c.l.s4 1983009808
    %v2988 = vunpack.c.0.s8 %v2987
    %v2989 = vlaneseq
    %v2990 = vshrl.u32 %v2989, 7
    %v2991 = vsub.s32 %v2988, %v2990
    %v2992 = vrot.slane %v2980, %v2991
    %v2994 = vunpack.c.l.s4 1983009808
    %v2995 = vunpack.c.0.s8 %v2994
    %v2996 = vlaneseq
    %v2997 = vshrl.u32 %v2996, 7
    %v2998 = vsub.s32 %v2995, %v2997
    %v2999 = vrot.slane %v2985, %v2998
    %v3000 = vcombine.high %v2992, %v2992
    %v3001 = vcombine.high %v2999, %v2999
    %v3003 = vunpack.c.l.s4 1983009808
    %v3004 = vunpack.c.0.s8 %v3003
    %v3005 = vlaneseq
    %v3006 = vshrl.u32 %v3005, 7
    %v3007 = vsub.s32 %v3004, %v3006
    %v3008 = vrot.slane %v2982, %v3007
    %v3009 = vcombine.high %v3008, %v3008
    %3010 = vset.pattern.permute.xlu0 0
    %3011 = vperm.xlu0 %3010, %v2992
    %v3012 = vpop.permute.xlu0 %3011
    %v3015 = vunpack.c.l.s4 269488144
    %v3016 = vunpack.c.0.s8 %v3015
    %v3017 = vlaneseq
    %v3018 = vshrl.u32 %v3017, 7
    %v3019 = vsub.s32 %v3016, %v3018
    %v3020 = vrot.slane %v3012, %v3019
    %3021 = vset.pattern.permute.xlu0 0
    %3022 = vperm.xlu0 %3021, %v3000
    %v3023 = vpop.permute.xlu0 %3022
    %v3026 = vunpack.c.l.s4 269488144
    %v3027 = vunpack.c.0.s8 %v3026
    %v3028 = vlaneseq
    %v3029 = vshrl.u32 %v3028, 7
    %v3030 = vsub.s32 %v3027, %v3029
    %v3031 = vrot.slane %v3023, %v3030
    %3032 = vset.pattern.permute.xlu0 0
    %3033 = vperm.xlu0 %3032, %v2999
    %v3034 = vpop.permute.xlu0 %3033
    %v3037 = vunpack.c.l.s4 269488144
    %v3038 = vunpack.c.0.s8 %v3037
    %v3039 = vlaneseq
    %v3040 = vshrl.u32 %v3039, 7
    %v3041 = vsub.s32 %v3038, %v3040
    %v3042 = vrot.slane %v3034, %v3041
    %3043 = vset.pattern.permute.xlu0 0
    %3044 = vperm.xlu0 %3043, %v3001
    %v3045 = vpop.permute.xlu0 %3044
    %v3048 = vunpack.c.l.s4 269488144
    %v3049 = vunpack.c.0.s8 %v3048
    %v3050 = vlaneseq
    %v3051 = vshrl.u32 %v3050, 7
    %v3052 = vsub.s32 %v3049, %v3051
    %v3053 = vrot.slane %v3045, %v3052
    %3054 = vset.pattern.permute.xlu0 0
    %3055 = vperm.xlu0 %3054, %v3008
    %v3056 = vpop.permute.xlu0 %3055
    %v3059 = vunpack.c.l.s4 269488144
    %v3060 = vunpack.c.0.s8 %v3059
    %v3061 = vlaneseq
    %v3062 = vshrl.u32 %v3061, 7
    %v3063 = vsub.s32 %v3060, %v3062
    %v3064 = vrot.slane %v3056, %v3063
    %3065 = vset.pattern.permute.xlu0 0
    %3066 = vperm.xlu0 %3065, %v3009
    %v3067 = vpop.permute.xlu0 %3066
    %v3070 = vunpack.c.l.s4 269488144
    %v3071 = vunpack.c.0.s8 %v3070
    %v3072 = vlaneseq
    %v3073 = vshrl.u32 %v3072, 7
    %v3074 = vsub.s32 %v3071, %v3073
    %v3075 = vrot.slane %v3067, %v3074
    %v3076 = vmul.f32 %v3020, %v2807
    %v3077 = vmul.f32 %v3031, %v2809
    %v3078 = vmul.f32 %v3042, %v2809
    %v3079 = vmul.f32 %v3053, %v450
    %v3080 = vmul.f32 %v3064, %v2811
    %v3081 = vmul.f32 %v3075, %v2811
    %v3088 = vcombine.low %v3076, %v3076
    %v3090 = vunpack.c.l.s4 1983009808
    %v3091 = vunpack.c.0.s8 %v3090
    %v3092 = vlaneseq
    %v3093 = vshrl.u32 %v3092, 7
    %v3094 = vsub.s32 %v3091, %v3093
    %v3095 = vrot.slane %v3088, %v3094
    %v3096 = vcombine.low %v3077, %v3077
    %v3098 = vunpack.c.l.s4 1983009808
    %v3099 = vunpack.c.0.s8 %v3098
    %v3100 = vlaneseq
    %v3101 = vshrl.u32 %v3100, 7
    %v3102 = vsub.s32 %v3099, %v3101
    %v3103 = vrot.slane %v3096, %v3102
    %v3104 = vcombine.low %v3078, %v3078
    %v3106 = vunpack.c.l.s4 1983009808
    %v3107 = vunpack.c.0.s8 %v3106
    %v3108 = vlaneseq
    %v3109 = vshrl.u32 %v3108, 7
    %v3110 = vsub.s32 %v3107, %v3109
    %v3111 = vrot.slane %v3104, %v3110
    %v3112 = vcombine.low %v3079, %v3079
    %v3114 = vunpack.c.l.s4 1983009808
    %v3115 = vunpack.c.0.s8 %v3114
    %v3116 = vlaneseq
    %v3117 = vshrl.u32 %v3116, 7
    %v3118 = vsub.s32 %v3115, %v3117
    %v3119 = vrot.slane %v3112, %v3118
    %v3120 = vcombine.low %v3080, %v3080
    %v3122 = vunpack.c.l.s4 1983009808
    %v3123 = vunpack.c.0.s8 %v3122
    %v3124 = vlaneseq
    %v3125 = vshrl.u32 %v3124, 7
    %v3126 = vsub.s32 %v3123, %v3125
    %v3127 = vrot.slane %v3120, %v3126
    %v3128 = vcombine.low %v3081, %v3081
    %v3130 = vunpack.c.l.s4 1983009808
    %v3131 = vunpack.c.0.s8 %v3130
    %v3132 = vlaneseq
    %v3133 = vshrl.u32 %v3132, 7
    %v3134 = vsub.s32 %v3131, %v3133
    %v3135 = vrot.slane %v3128, %v3134
    %v3142 = vadd.f32 %v2807, %v3095
    %v3143 = vadd.f32 %v2807, %v3103
    %v3144 = vadd.f32 %v2813, %v3111
    %v3145 = vadd.f32 %v2807, %v3119
    %v3146 = vadd.f32 %v2807, %v3127
    %v3147 = vadd.f32 %v2816, %v3135
    %v3155 = vunpack.c.l.s4 1983009808
    %v3156 = vunpack.c.0.s8 %v3155
    %v3157 = vlaneseq
    %v3158 = vshrl.u32 %v3157, 7
    %v3159 = vsub.s32 %v3156, %v3158
    %v3160 = vrot.slane %v3142, %v3159
    %v3161 = vcombine.high %v3160, %v3160
    %v3163 = vunpack.c.l.s4 1983009808
    %v3164 = vunpack.c.0.s8 %v3163
    %v3165 = vlaneseq
    %v3166 = vshrl.u32 %v3165, 7
    %v3167 = vsub.s32 %v3164, %v3166
    %v3168 = vrot.slane %v3143, %v3167
    %v3169 = vcombine.high %v3168, %v3168
    %v3171 = vunpack.c.l.s4 1983009808
    %v3172 = vunpack.c.0.s8 %v3171
    %v3173 = vlaneseq
    %v3174 = vshrl.u32 %v3173, 7
    %v3175 = vsub.s32 %v3172, %v3174
    %v3176 = vrot.slane %v3144, %v3175
    %v3177 = vcombine.high %v3176, %v3176
    %v3179 = vunpack.c.l.s4 1983009808
    %v3180 = vunpack.c.0.s8 %v3179
    %v3181 = vlaneseq
    %v3182 = vshrl.u32 %v3181, 7
    %v3183 = vsub.s32 %v3180, %v3182
    %v3184 = vrot.slane %v3145, %v3183
    %v3185 = vcombine.high %v3184, %v3184
    %v3187 = vunpack.c.l.s4 1983009808
    %v3188 = vunpack.c.0.s8 %v3187
    %v3189 = vlaneseq
    %v3190 = vshrl.u32 %v3189, 7
    %v3191 = vsub.s32 %v3188, %v3190
    %v3192 = vrot.slane %v3146, %v3191
    %v3193 = vcombine.high %v3192, %v3192
    %v3195 = vunpack.c.l.s4 1983009808
    %v3196 = vunpack.c.0.s8 %v3195
    %v3197 = vlaneseq
    %v3198 = vshrl.u32 %v3197, 7
    %v3199 = vsub.s32 %v3196, %v3198
    %v3200 = vrot.slane %v3147, %v3199
    %v3201 = vcombine.high %v3200, %v3200
    %v3202 = vcombine.low %v3161, %v3169
    %v3203 = vcombine.low %v3177, %v3185
    %v3205 = vunpack.c.l.s4 1983009808
    %v3206 = vunpack.c.0.s8 %v3205
    %v3207 = vlaneseq
    %v3208 = vshrl.u32 %v3207, 7
    %v3209 = vsub.s32 %v3206, %v3208
    %v3210 = vrot.slane %v3202, %v3209
    %v3212 = vunpack.c.l.s4 1983009808
    %v3213 = vunpack.c.0.s8 %v3212
    %v3214 = vlaneseq
    %v3215 = vshrl.u32 %v3214, 7
    %v3216 = vsub.s32 %v3213, %v3215
    %v3217 = vrot.slane %v3203, %v3216
    %v3218 = vcombine.low %v3210, %v3217
    %v3219 = vcombine.low %v3193, %v3201
    %v3221 = vunpack.c.l.s4 1983009808
    %v3222 = vunpack.c.0.s8 %v3221
    %v3223 = vlaneseq
    %v3224 = vshrl.u32 %v3223, 7
    %v3225 = vsub.s32 %v3222, %v3224
    %v3226 = vrot.slane %v3219, %v3225
    %3231 = vrot.lane.b32.xlu0 %v2368, 64
    %v3232 = vpop.permute.xlu0 %3231
    %3233 = vrot.lane.b32.xlu0 %v2369, 64
    %v3234 = vpop.permute.xlu0 %3233
    %3235 = vrot.lane.b32.xlu0 %v2370, 64
    %v3236 = vpop.permute.xlu0 %3235
    %3237 = vrot.lane.b32.xlu0 %v2371, 64
    %v3238 = vpop.permute.xlu0 %3237
    %3244 = vrot.lane.b32.xlu0 %v2390, 64
    %v3245 = vpop.permute.xlu0 %3244
    %v3247 = vsel %vm611, %v3218, 0
    %v3249 = vsel %vm611, %v3226, 0
    %3251 = vmatprep.subr.mxu0 0.0
    %3252 = vmatpush1.msra.mxu0 0.0
    %3253 = vmatprep.subr.mxu0 0.0
    %3254 = vmatpush1.msra.mxu0 0.0
    %3255 = vmatprep.subr.mxu0 0.0
    %3256 = vmatpush1.msra.mxu0 0.0
    %3257 = vmatprep.subr.mxu0 0.0
    %3258 = vmatpush1.msra.mxu0 0.0
    %3259 = vmatprep.subr.mxu0 0.0
    %3260 = vmatpush1.msra.mxu0 0.0
    %3261 = vmatprep.subr.mxu0 0.0
    %3262 = vmatpush1.msra.mxu0 0.0
    %3263 = vmatprep.subr.mxu0 0.0
    %3264 = vmatpush1.msra.mxu0 0.0
    %3265 = vmatprep.subr.mxu0 0.0
    %3266 = vmatpush1.msra.mxu0 0.0
    %3267 = vmatprep.subr.mxu0 0.0
    %3268 = vmatpush1.msra.mxu0 0.0
    %3269 = vmatprep.subr.mxu0 0.0
    %3270 = vmatpush1.msra.mxu0 0.0
    %3271 = vmatprep.subr.mxu0 0.0
    %3272 = vmatpush1.msra.mxu0 0.0
    %3273 = vmatprep.subr.mxu0 0.0
    %3274 = vmatpush1.msra.mxu0 0.0
    %3275 = vmatprep.subr.mxu0 0.0
    %3276 = vmatpush1.msra.mxu0 %v3238
    %3277 = vmatprep.subr.mxu0 0.0
    %3278 = vmatpush1.msra.mxu0 %v3236
    %3279 = vmatprep.subr.mxu0 0.0
    %3280 = vmatpush1.msra.mxu0 %v3234
    %3281 = vmatprep.subr.mxu0 0.0
    %3282 = vmatpush1.msra.mxu0 %v3232
    %3283 = vmatprep.subr.mxu0 0.0
    %3284 = vmatpush2.msra.mxu0 0.0
    %3285 = vmatprep.subr.mxu0 0.0
    %3286 = vmatpush2.msra.mxu0 0.0
    %3287 = vmatprep.subr.mxu0 0.0
    %3288 = vmatpush2.msra.mxu0 0.0
    %3289 = vmatprep.subr.mxu0 0.0
    %3290 = vmatpush2.msra.mxu0 0.0
    %3291 = vmatprep.subr.mxu0 0.0
    %3292 = vmatpush2.msra.mxu0 0.0
    %3293 = vmatprep.subr.mxu0 0.0
    %3294 = vmatpush2.msra.mxu0 0.0
    %3295 = vmatprep.subr.mxu0 0.0
    %3296 = vmatpush2.msra.mxu0 0.0
    %3297 = vmatprep.subr.mxu0 0.0
    %3298 = vmatpush2.msra.mxu0 0.0
    %3299 = vmatprep.subr.mxu0 0.0
    %3300 = vmatpush2.msra.mxu0 0.0
    %3301 = vmatprep.subr.mxu0 0.0
    %3302 = vmatpush2.msra.mxu0 0.0
    %3303 = vmatprep.subr.mxu0 0.0
    %3304 = vmatpush2.msra.mxu0 0.0
    %3305 = vmatprep.subr.mxu0 0.0
    %3306 = vmatpush2.msra.mxu0 0.0
    %3307 = vmatprep.subr.mxu0 0.0
    %3308 = vmatpush2.msra.mxu0 0.0
    %3309 = vmatprep.subr.mxu0 0.0
    %3310 = vmatpush2.msra.mxu0 0.0
    %3311 = vmatprep.subr.mxu0 0.0
    %3312 = vmatpush2.msra.mxu0 0.0
    %3313 = vmatprep.subr.mxu0 0.0
    %3314 = vmatpush2.msra.mxu0 0.0
    %3315 = vmatprep.mubr.f32.mxu0 0.0
    %3316 = vmatmul.mubr.f32.gmra.mxu0 %v3247
    %v3317 = vpop.f32.mrf.mxu0
    %v3318 = vadd.f32 %v3245, %v3317
    %v3319 = vpop.f32.mrf.mxu0
    %3320 = vmatprep.mubr.f32.mxu0 0.0
    %3321 = vmatmul.mubr.f32.gmra.mxu0 %v3249
    %v3322 = vpop.f32.mrf.mxu0
    %v3323 = vadd.f32 %v3245, %v3322
    %v3324 = vpop.f32.mrf.mxu0
    %3325 = vdwg.mxu0
    %v3326 = vmax.f32 %v3318, 0.0
    %v3327 = vmax.f32 %v3323, 0.0
    %3329 = vrot.lane.b32.xlu0 %v2531, 64
    %v3330 = vpop.permute.xlu0 %3329
    %v3332 = vmul.f32 %v3326, %v3330
    %v3333 = vmul.f32 %v3327, %v3330
    %v3334 = vsel %vm611, %v3332, 0.0
    %3335 = vadd.xlane.f32.xlu0 %v3334
    %v3336 = vpop.xlane.xlu0 %3335
    %v3337 = vsel %vm2961, %v3333, 0.0
    %3338 = vadd.xlane.f32.xlu0 %v3337
    %v3339 = vpop.xlane.xlu0 %3338
    %v3340 = vadd.f32 %v3336, %v2567
    %v3341 = vadd.f32 %v3339, %v2567
    %v3344 = vcombine.high %v3340, %v3340
    %v3346 = vunpack.c.l.s4 1983009808
    %v3347 = vunpack.c.0.s8 %v3346
    %v3348 = vlaneseq
    %v3349 = vshrl.u32 %v3348, 7
    %v3350 = vsub.s32 %v3347, %v3349
    %v3351 = vrot.slane %v3340, %v3350
    %v3353 = vunpack.c.l.s4 1983009808
    %v3354 = vunpack.c.0.s8 %v3353
    %v3355 = vlaneseq
    %v3356 = vshrl.u32 %v3355, 7
    %v3357 = vsub.s32 %v3354, %v3356
    %v3358 = vrot.slane %v3344, %v3357
    %v3359 = vcombine.high %v3351, %v3351
    %v3360 = vcombine.high %v3358, %v3358
    %v3362 = vunpack.c.l.s4 1983009808
    %v3363 = vunpack.c.0.s8 %v3362
    %v3364 = vlaneseq
    %v3365 = vshrl.u32 %v3364, 7
    %v3366 = vsub.s32 %v3363, %v3365
    %v3367 = vrot.slane %v3341, %v3366
    %v3368 = vcombine.high %v3367, %v3367
    %vm3375 = vcmask 17424
    %v3376 = vsel %vm3375, %v3351, -inf
    %v3377 = vsel %vm3375, %v3359, -inf
    %v3378 = vsel %vm3375, %v3358, -inf
    %v3379 = vsel %vm3375, %v3360, -inf
    %v3380 = vsel %vm3375, %v3367, -inf
    %v3381 = vmax.f32 %v3376, %v3380
    %v3382 = vsel %vm3375, %v3368, -inf
    %v3383 = vmax.f32 %v3377, %v3382
    %v3384 = vmax.f32 %v3381, %v3383
    %v3385 = vmax.f32 %v3378, %v3379
    %v3386 = vmax.f32 %v3384, %v3385
    %v3387 = vsub.f32 %v3351, %v3386
    %v3388 = vsub.f32 %v3359, %v3386
    %v3389 = vsub.f32 %v3358, %v3386
    %v3390 = vsub.f32 %v3360, %v3386
    %v3391 = vsub.f32 %v3367, %v3386
    %v3392 = vsub.f32 %v3368, %v3386
    %v3393 = vmul.f32 %v3387, 1.442695
    %v3394 = vpow.pop %v3393
    %v3395 = vmul.f32 %v3388, 1.442695
    %v3396 = vpow.pop %v3395
    %v3397 = vmul.f32 %v3389, 1.442695
    %v3398 = vpow.pop %v3397
    %v3399 = vmul.f32 %v3390, 1.442695
    %v3400 = vpow.pop %v3399
    %v3401 = vmul.f32 %v3391, 1.442695
    %v3402 = vpow.pop %v3401
    %v3403 = vmul.f32 %v3392, 1.442695
    %v3404 = vpow.pop %v3403
    %v3405 = vsel %vm3375, %v3394, 0.0
    %v3406 = vsel %vm3375, %v3396, 0.0
    %v3407 = vadd.f32 %v3405, %v3406
    %v3408 = vsel %vm3375, %v3398, 0.0
    %v3409 = vadd.f32 %v3407, %v3408
    %v3410 = vsel %vm3375, %v3400, 0.0
    %v3411 = vadd.f32 %v3409, %v3410
    %v3412 = vsel %vm3375, %v3402, 0.0
    %v3413 = vadd.f32 %v3411, %v3412
    %v3414 = vsel %vm3375, %v3404, 0.0
    %v3415 = vadd.f32 %v3413, %v3414
    %v3416 = vrcp.pop %v3415
    %v3417 = vmul.f32 %v3394, %v3416
    %v3418 = vmul.f32 %v3396, %v3416
    %v3419 = vmul.f32 %v3398, %v3416
    %v3420 = vmul.f32 %v3400, %v3416
    %v3421 = vmul.f32 %v3402, %v3416
    %v3422 = vmul.f32 %v3404, %v3416
    %3424 = vset.pattern.permute.xlu0 2
    %3425 = vperm.xlu0 %3424, %v3417
    %v3426 = vpop.permute.xlu0 %3425
    %v3429 = vunpack.c.l.s4 269488144
    %v3430 = vunpack.c.0.s8 %v3429
    %v3431 = vlaneseq
    %v3432 = vshrl.u32 %v3431, 7
    %v3433 = vsub.s32 %v3430, %v3432
    %v3434 = vrot.slane %v3426, %v3433
    %3436 = vset.pattern.permute.xlu0 2
    %3437 = vperm.xlu0 %3436, %v3418
    %v3438 = vpop.permute.xlu0 %3437
    %v3441 = vunpack.c.l.s4 269488144
    %v3442 = vunpack.c.0.s8 %v3441
    %v3443 = vlaneseq
    %v3444 = vshrl.u32 %v3443, 7
    %v3445 = vsub.s32 %v3442, %v3444
    %v3446 = vrot.slane %v3438, %v3445
    %3448 = vset.pattern.permute.xlu0 2
    %3449 = vperm.xlu0 %3448, %v3419
    %v3450 = vpop.permute.xlu0 %3449
    %v3453 = vunpack.c.l.s4 269488144
    %v3454 = vunpack.c.0.s8 %v3453
    %v3455 = vlaneseq
    %v3456 = vshrl.u32 %v3455, 7
    %v3457 = vsub.s32 %v3454, %v3456
    %v3458 = vrot.slane %v3450, %v3457
    %3460 = vset.pattern.permute.xlu0 2
    %3461 = vperm.xlu0 %3460, %v3420
    %v3462 = vpop.permute.xlu0 %3461
    %v3465 = vunpack.c.l.s4 269488144
    %v3466 = vunpack.c.0.s8 %v3465
    %v3467 = vlaneseq
    %v3468 = vshrl.u32 %v3467, 7
    %v3469 = vsub.s32 %v3466, %v3468
    %v3470 = vrot.slane %v3462, %v3469
    %3472 = vset.pattern.permute.xlu0 2
    %3473 = vperm.xlu0 %3472, %v3421
    %v3474 = vpop.permute.xlu0 %3473
    %v3477 = vunpack.c.l.s4 269488144
    %v3478 = vunpack.c.0.s8 %v3477
    %v3479 = vlaneseq
    %v3480 = vshrl.u32 %v3479, 7
    %v3481 = vsub.s32 %v3478, %v3480
    %v3482 = vrot.slane %v3474, %v3481
    %3484 = vset.pattern.permute.xlu0 2
    %3485 = vperm.xlu0 %3484, %v3422
    %v3486 = vpop.permute.xlu0 %3485
    %v3489 = vunpack.c.l.s4 269488144
    %v3490 = vunpack.c.0.s8 %v3489
    %v3491 = vlaneseq
    %v3492 = vshrl.u32 %v3491, 7
    %v3493 = vsub.s32 %v3490, %v3492
    %v3494 = vrot.slane %v3486, %v3493
    %v3501 = vmul.f32 %v3434, %v3161
    %v3502 = vmul.f32 %v3446, %v3169
    %v3503 = vmul.f32 %v3458, %v3177
    %v3504 = vmul.f32 %v3470, %v3185
    %v3505 = vmul.f32 %v3482, %v3193
    %v3506 = vmul.f32 %v3494, %v3201
    %vm3507 = vcmask 254976
    %v3508 = vsel %vm3507, %v3501, 0.0
    %v3509 = vsel %vm3507, %v3502, 0.0
    %v3510 = vadd.f32 %v3508, %v3509
    %v3511 = vsel %vm3507, %v3503, 0.0
    %v3512 = vadd.f32 %v3510, %v3511
    %v3513 = vsel %vm3507, %v3504, 0.0
    %v3514 = vadd.f32 %v3512, %v3513
    %v3515 = vsel %vm3507, %v3505, 0.0
    %v3516 = vadd.f32 %v3514, %v3515
    %v3517 = vsel %vm3507, %v3506, 0.0
    %v3518 = vadd.f32 %v3516, %v3517
    %v3519 = vlaneseq
    %v3520 = vshrl.u32 %v3519, 7
    %v3521 = vsub.s32 6, %v3520
    %v3522 = vrot.slane %v2386, %v3521
    %v3524 = vsel %vm611, %v3518, 0
    %3526 = vmatprep.subr.mxu0 0.0
    %3527 = vmatpush1.msra.mxu0 0.0
    %3528 = vmatprep.subr.mxu0 0.0
    %3529 = vmatpush1.msra.mxu0 0.0
    %3530 = vmatprep.subr.mxu0 0.0
    %3531 = vmatpush1.msra.mxu0 0.0
    %3532 = vmatprep.subr.mxu0 0.0
    %3533 = vmatpush1.msra.mxu0 0.0
    %3534 = vmatprep.subr.mxu0 0.0
    %3535 = vmatpush1.msra.mxu0 0.0
    %3536 = vmatprep.subr.mxu0 0.0
    %3537 = vmatpush1.msra.mxu0 0.0
    %3538 = vmatprep.subr.mxu0 0.0
    %3539 = vmatpush1.msra.mxu0 0.0
    %3540 = vmatprep.subr.mxu0 0.0
    %3541 = vmatpush1.msra.mxu0 0.0
    %3542 = vmatprep.subr.mxu0 0.0
    %3543 = vmatpush1.msra.mxu0 0.0
    %3544 = vmatprep.subr.mxu0 0.0
    %3545 = vmatpush1.msra.mxu0 0.0
    %3546 = vmatprep.subr.mxu0 0.0
    %3547 = vmatpush1.msra.mxu0 0.0
    %3548 = vmatprep.subr.mxu0 0.0
    %3549 = vmatpush1.msra.mxu0 0.0
    %3550 = vmatprep.subr.mxu0 0.0
    %3551 = vmatpush1.msra.mxu0 %v2383
    %3552 = vmatprep.subr.mxu0 0.0
    %3553 = vmatpush1.msra.mxu0 %v2382
    %3554 = vmatprep.subr.mxu0 0.0
    %3555 = vmatpush1.msra.mxu0 %v2381
    %3556 = vmatprep.subr.mxu0 0.0
    %3557 = vmatpush1.msra.mxu0 %v2380
    %3558 = vmatprep.subr.mxu0 0.0
    %3559 = vmatpush2.msra.mxu0 0.0
    %3560 = vmatprep.subr.mxu0 0.0
    %3561 = vmatpush2.msra.mxu0 0.0
    %3562 = vmatprep.subr.mxu0 0.0
    %3563 = vmatpush2.msra.mxu0 0.0
    %3564 = vmatprep.subr.mxu0 0.0
    %3565 = vmatpush2.msra.mxu0 0.0
    %3566 = vmatprep.subr.mxu0 0.0
    %3567 = vmatpush2.msra.mxu0 0.0
    %3568 = vmatprep.subr.mxu0 0.0
    %3569 = vmatpush2.msra.mxu0 0.0
    %3570 = vmatprep.subr.mxu0 0.0
    %3571 = vmatpush2.msra.mxu0 0.0
    %3572 = vmatprep.subr.mxu0 0.0
    %3573 = vmatpush2.msra.mxu0 0.0
    %3574 = vmatprep.subr.mxu0 0.0
    %3575 = vmatpush2.msra.mxu0 0.0
    %3576 = vmatprep.subr.mxu0 0.0
    %3577 = vmatpush2.msra.mxu0 0.0
    %3578 = vmatprep.subr.mxu0 0.0
    %3579 = vmatpush2.msra.mxu0 0.0
    %3580 = vmatprep.subr.mxu0 0.0
    %3581 = vmatpush2.msra.mxu0 0.0
    %3582 = vmatprep.subr.mxu0 0.0
    %3583 = vmatpush2.msra.mxu0 0.0
    %3584 = vmatprep.subr.mxu0 0.0
    %3585 = vmatpush2.msra.mxu0 0.0
    %3586 = vmatprep.subr.mxu0 0.0
    %3587 = vmatpush2.msra.mxu0 0.0
    %3588 = vmatprep.subr.mxu0 0.0
    %3589 = vmatpush2.msra.mxu0 0.0
    %3590 = vmatprep.mubr.f32.mxu0 0.0
    %3591 = vmatmul.mubr.f32.gmra.mxu0 %v3524
    %v3592 = vpop.f32.mrf.mxu0
    %v3593 = vadd.f32 %v3522, %v3592
    %v3594 = vpop.f32.mrf.mxu0
    %3595 = vdwg.mxu0
    %v3596 = vmax.f32 %v3593, 0.0
    %v3597 = vlaneseq
    %v3598 = vshrl.u32 %v3597, 7
    %v3599 = vsub.s32 7, %v3598
    %v3600 = vrot.slane %v2386, %v3599
    %v3602 = vsel %vm449, %v3596, 0
    %3604 = vmatprep.subr.mxu0 0.0
    %3605 = vmatpush1.msra.mxu0 0.0
    %3606 = vmatprep.subr.mxu0 0.0
    %3607 = vmatpush1.msra.mxu0 0.0
    %3608 = vmatprep.subr.mxu0 0.0
    %3609 = vmatpush1.msra.mxu0 0.0
    %3610 = vmatprep.subr.mxu0 0.0
    %3611 = vmatpush1.msra.mxu0 0.0
    %3612 = vmatprep.subr.mxu0 0.0
    %3613 = vmatpush1.msra.mxu0 0.0
    %3614 = vmatprep.subr.mxu0 0.0
    %3615 = vmatpush1.msra.mxu0 0.0
    %3616 = vmatprep.subr.mxu0 0.0
    %3617 = vmatpush1.msra.mxu0 0.0
    %3618 = vmatprep.subr.mxu0 0.0
    %3619 = vmatpush1.msra.mxu0 0.0
    %3620 = vmatprep.subr.mxu0 0.0
    %3621 = vmatpush1.msra.mxu0 0.0
    %3622 = vmatprep.subr.mxu0 0.0
    %3623 = vmatpush1.msra.mxu0 0.0
    %3624 = vmatprep.subr.mxu0 0.0
    %3625 = vmatpush1.msra.mxu0 0.0
    %3626 = vmatprep.subr.mxu0 0.0
    %3627 = vmatpush1.msra.mxu0 0.0
    %3628 = vmatprep.subr.mxu0 0.0
    %3629 = vmatpush1.msra.mxu0 0.0
    %3630 = vmatprep.subr.mxu0 0.0
    %3631 = vmatpush1.msra.mxu0 0.0
    %3632 = vmatprep.subr.mxu0 0.0
    %3633 = vmatpush1.msra.mxu0 %v2385
    %3634 = vmatprep.subr.mxu0 0.0
    %3635 = vmatpush1.msra.mxu0 %v2384
    %3636 = vmatprep.subr.mxu0 0.0
    %3637 = vmatpush2.msra.mxu0 0.0
    %3638 = vmatprep.subr.mxu0 0.0
    %3639 = vmatpush2.msra.mxu0 0.0
    %3640 = vmatprep.subr.mxu0 0.0
    %3641 = vmatpush2.msra.mxu0 0.0
    %3642 = vmatprep.subr.mxu0 0.0
    %3643 = vmatpush2.msra.mxu0 0.0
    %3644 = vmatprep.subr.mxu0 0.0
    %3645 = vmatpush2.msra.mxu0 0.0
    %3646 = vmatprep.subr.mxu0 0.0
    %3647 = vmatpush2.msra.mxu0 0.0
    %3648 = vmatprep.subr.mxu0 0.0
    %3649 = vmatpush2.msra.mxu0 0.0
    %3650 = vmatprep.subr.mxu0 0.0
    %3651 = vmatpush2.msra.mxu0 0.0
    %3652 = vmatprep.subr.mxu0 0.0
    %3653 = vmatpush2.msra.mxu0 0.0
    %3654 = vmatprep.subr.mxu0 0.0
    %3655 = vmatpush2.msra.mxu0 0.0
    %3656 = vmatprep.subr.mxu0 0.0
    %3657 = vmatpush2.msra.mxu0 0.0
    %3658 = vmatprep.subr.mxu0 0.0
    %3659 = vmatpush2.msra.mxu0 0.0
    %3660 = vmatprep.subr.mxu0 0.0
    %3661 = vmatpush2.msra.mxu0 0.0
    %3662 = vmatprep.subr.mxu0 0.0
    %3663 = vmatpush2.msra.mxu0 0.0
    %3664 = vmatprep.subr.mxu0 0.0
    %3665 = vmatpush2.msra.mxu0 0.0
    %3666 = vmatprep.subr.mxu0 0.0
    %3667 = vmatpush2.msra.mxu0 0.0
    %3668 = vmatprep.mubr.f32.mxu0 0.0
    %3669 = vmatmul.mubr.f32.gmra.mxu0 %v3602
    %v3670 = vpop.f32.mrf.mxu0
    %v3671 = vadd.f32 %v3600, %v3670
    %v3672 = vpop.f32.mrf.mxu0
    %3673 = vdwg.mxu0
    %vm3674 = vcmask 25600
    %3675 = vst.msk [vmem:[#allocation5] sm:$0x3] %vm3674, %v3671
    // Predicated region
    $region26: #{interactive_attn_forward.1} parent=1 // pred_check
      _
    $region27: #{interactive_attn_forward.1} parent=1 // pred_check_branch
      %3677 = sbr.rel (0) target = $region29
    $region28: #{interactive_attn_forward.1} parent=1 // pred_region
      %s3679 = ssub.s32 32, 32
      %3680 = vsyncadd [#allocation4], %s3679
      %s3682 = sshll.u32 [#allocation5], 4
      %s3683 = int_to_ptr.vmem [resolvable:$true] %s3682
      %3685 = dma.vmem_to_hbm [thread:$0]  %s3683, 32, %s5, [#allocation4]
    $region29: #{interactive_attn_forward.1} parent=1 // pred_fallthru
      _
    // Predicated region
    $region30: #{interactive_attn_forward.1} parent=1 // pred_check
      _
    $region31: #{interactive_attn_forward.1} parent=1 // pred_check_branch
      %3687 = sbr.rel (0) target = $region33
    $region32: #{interactive_attn_forward.1} parent=1 // pred_region
      %3688 = dma.done [#allocation4], 32
    $region33: #{interactive_attn_forward.1} parent=1 // pred_fallthru
      _
    %3689 = vsyncpa [#allocation3], 1
    %3690 = vsyncpa [#allocation4], 1

</llo_original>
